<compile_context>
chip_gen: v5e
topology: v5e:2x2
jax: 0.10.0
libtpu: 0.0.40
codegen_flags: <defaults>
</compile_context>

<pallas_src>
import functools

import jax
import jax.numpy as jnp
from jax.experimental import pallas as pl
from jax.experimental.pallas import tpu as pltpu

HIGHEST = jax.lax.Precision.HIGHEST

# ----------------------------------------------------------------------------
# Synthetic heterograph config
#   ntypes: 'user' (in_dim=-1 -> embedding), 'item' (in_dim=8 -> linear)
#   sorted rel_names: ['bought_by' (item->user), 'buys' (user->item),
#                      'follows' (user->user)]
# ----------------------------------------------------------------------------
REL_NAMES = ("bought_by", "buys", "follows")
REL_SRC_DST = {"bought_by": ("item", "user"),
               "buys": ("user", "item"),
               "follows": ("user", "user")}
N_USER, N_ITEM = 16, 16
IN_DIM_ITEM = 8
H_DIM, OUT_DIM = 32, 16
NUM_BASES = 2          # < len(rel_names) -> weight-basis decomposition
F_PAD = 128            # lane-dense feature width used inside the kernel


# ----------------------------------------------------------------------------
# Fused Pallas kernel
# ----------------------------------------------------------------------------
def _make_fused_rgcn_kernel(layer_cfgs):
    """Build the fused forward kernel.

    layer_cfgs: tuple of (has_weight, relu) per RelGraphConvLayer (static).
    Ref order: a_bought_by, a_follows, a_buys, h_user0, x_item, lin_w, lin_b,
               then per layer ([W_stack], bias), then out_user, out_item.
    All feature dims are pre-padded to F_PAD lanes (zero padding, exact).
    """
    n_layer_refs = sum(2 if hw else 1 for hw, _ in layer_cfgs)

    def kernel(*refs):
        a_bb_ref, a_fo_ref, a_by_ref, hu0_ref, xi_ref, linw_ref, linb_ref = refs[:7]
        layer_refs = refs[7:7 + n_layer_refs]
        ou_ref, oi_ref = refs[7 + n_layer_refs:]

        dot = functools.partial(jnp.dot, preferred_element_type=jnp.float32,
                                precision=HIGHEST)
        a_bb = a_bb_ref[...]        # (n_user, n_item)  bought_by: item -> user
        a_fo = a_fo_ref[...]        # (n_user, n_user)  follows:   user -> user
        a_by = a_by_ref[...]        # (n_item, n_user)  buys:      user -> item

        # HeteroLinearLayer for 'item' folded in; 'user' embedding rows passed in.
        h_item = dot(xi_ref[...], linw_ref[...]) + linb_ref[...]
        h_user = hu0_ref[...]

        idx = 0
        n_layers = len(layer_cfgs)
        for li, (has_weight, relu) in enumerate(layer_cfgs):
            if has_weight:
                w_ref = layer_refs[idx]
                b = layer_refs[idx + 1][...]
                idx += 2
                # Per-relation projections; relation order = sorted REL_NAMES.
                xw_bb = dot(h_item, w_ref[0])   # bought_by: src item
                xw_by = dot(h_user, w_ref[1])   # buys:      src user
                xw_fo = dot(h_user, w_ref[2])   # follows:   src user
            else:
                b = layer_refs[idx][...]
                idx += 1
                # weight=False -> message is the source feature itself (skip X @ I).
                xw_bb, xw_by, xw_fo = h_item, h_user, h_user

            new_user = dot(a_bb, xw_bb) + dot(a_fo, xw_fo) + b
            new_item = dot(a_by, xw_by) + b
            if relu:
                new_user = jnp.maximum(new_user, 0.0)
                new_item = jnp.maximum(new_item, 0.0)

            if li == n_layers - 1:
                ou_ref[...] = new_user.astype(ou_ref.dtype)
                oi_ref[...] = new_item.astype(oi_ref.dtype)
            else:
                h_user, h_item = new_user, new_item

    return kernel


def _pad_last(x, f):
    pad = f - x.shape[-1]
    if pad == 0:
        return x
    return jnp.pad(x, [(0, 0)] * (x.ndim - 1) + [(0, pad)])


def _pad_weight(w, f):
    """Zero-pad the trailing (f_in, f_out) dims of a weight to (f, f)."""
    pads = ([(0, 0)] * (w.ndim - 2)
            + [(0, f - w.shape[-2]), (0, f - w.shape[-1])])
    return jnp.pad(w, pads)


@functools.partial(jax.jit, static_argnums=(0,))
def _rgcn_fused(layer_cfgs, a_bb, a_fo, a_by, embed_user, user_nids, x_item,
                lin_w, lin_b, *layer_arrays):
    # HeteroEmbedLayer: embedding lookup (gather) done as JAX glue.
    h_user0 = jnp.take(embed_user, user_nids, axis=0)

    # Zero-pad all feature dims to a lane-dense 128 (exact; see module docstring).
    args = [a_bb, a_fo, a_by,
            _pad_last(h_user0, F_PAD),
            _pad_last(x_item, F_PAD),
            _pad_weight(lin_w, F_PAD),
            _pad_last(lin_b.reshape(1, -1), F_PAD)]
    i = 0
    for has_w, _ in layer_cfgs:
        if has_w:
            args.append(_pad_weight(layer_arrays[i], F_PAD))
            i += 1
        args.append(_pad_last(layer_arrays[i].reshape(1, -1), F_PAD))
        i += 1
    out_dim = layer_arrays[-1].shape[0]   # last-layer bias size == out_feat

    vmem = pl.BlockSpec(memory_space=pltpu.MemorySpace.VMEM)
    out_user, out_item = pl.pallas_call(
        _make_fused_rgcn_kernel(layer_cfgs),
        out_shape=(jax.ShapeDtypeStruct((a_bb.shape[0], F_PAD), jnp.float32),
                   jax.ShapeDtypeStruct((a_by.shape[0], F_PAD), jnp.float32)),
        in_specs=[vmem] * len(args),
        out_specs=(vmem, vmem),
    )(*args)
    return {"user": out_user[:, :out_dim], "item": out_item[:, :out_dim]}


def rgcn_forward(params, adj_norm, user_nids, x_item):
    layer_cfgs = tuple((l["weight"] is not None, l["relu"])
                       for l in params["layers"])
    layer_arrays = []
    for l in params["layers"]:
        if l["weight"] is not None:
            layer_arrays.append(l["weight"])
        layer_arrays.append(l["bias"])
    return _rgcn_fused(layer_cfgs,
                       adj_norm["bought_by"], adj_norm["follows"], adj_norm["buys"],
                       params["embed_user"], user_nids, x_item,
                       params["lin_w"], params["lin_b"], *layer_arrays)


# ----------------------------------------------------------------------------
# Parameter / graph construction (glue)
# ----------------------------------------------------------------------------
def xavier_uniform(key, shape, gain=1.0):
    fan_in, fan_out = shape[-2], shape[-1]
    a = gain * (6.0 / (fan_in + fan_out)) ** 0.5
    return jax.random.uniform(key, shape, jnp.float32, -a, a)


def make_params(key):
    keys = jax.random.split(key, 12)
    relu_gain = 2.0 ** 0.5
    params = {
        # HeteroEmbedLayer: embedding table for 'user' nodes
        "embed_user": jax.random.normal(keys[0], (N_USER, H_DIM), jnp.float32) * 0.1,
        # HeteroLinearLayer: nn.Linear(IN_DIM_ITEM, H_DIM) for 'item'
        "lin_w": xavier_uniform(keys[1], (IN_DIM_ITEM, H_DIM)),
        "lin_b": jax.random.normal(keys[2], (H_DIM,), jnp.float32) * 0.05,
        "layers": [],
    }
    R = len(REL_NAMES)
    # layer 0: h->h, weight=False, relu
    params["layers"].append({"weight": None,
                             "bias": jnp.zeros((H_DIM,), jnp.float32),
                             "relu": True})
    # layer 1: h->h, weight via basis, relu
    basis1 = xavier_uniform(keys[3], (NUM_BASES, H_DIM, H_DIM), relu_gain)
    comp1 = xavier_uniform(keys[4], (R, NUM_BASES))
    params["layers"].append({"weight": jnp.einsum("rb,bio->rio", comp1, basis1),
                             "bias": jnp.zeros((H_DIM,), jnp.float32),
                             "relu": True})
    # layer 2: h->out, weight via basis, no activation
    basis2 = xavier_uniform(keys[5], (NUM_BASES, H_DIM, OUT_DIM), relu_gain)
    comp2 = xavier_uniform(keys[6], (R, NUM_BASES))
    params["layers"].append({"weight": jnp.einsum("rb,bio->rio", comp2, basis2),
                             "bias": jnp.zeros((OUT_DIM,), jnp.float32),
                             "relu": False})
    return params


def make_graph(key):
    """Dense binary adjacencies, right-normalized (divide by clamp(in_degree, 1))."""
    n_nodes = {"user": N_USER, "item": N_ITEM}
    adj_norm = {}
    keys = jax.random.split(key, len(REL_NAMES))
    for k, rel in zip(keys, REL_NAMES):
        src, dst = REL_SRC_DST[rel]
        a = (jax.random.uniform(k, (n_nodes[dst], n_nodes[src])) < 0.3
             ).astype(jnp.float32)
        deg = jnp.maximum(a.sum(axis=1, keepdims=True), 1.0)  # DGL clamp(min=1)
        adj_norm[rel] = a / deg
    return adj_norm


# ----------------------------------------------------------------------------
# Pure-JAX reference (identical semantics)
# ----------------------------------------------------------------------------
def rgcn_forward_ref(params, adj_norm, user_nids, x_item):
    dot = functools.partial(jnp.dot, precision=HIGHEST)
    h_user = jnp.take(params["embed_user"], user_nids, axis=0)
    h_item = dot(x_item, params["lin_w"]) + params["lin_b"]
    for layer in params["layers"]:
        W = layer["weight"]
        if W is None:
            eye = jnp.eye(h_user.shape[1], dtype=jnp.float32)
            W = jnp.stack([eye, eye, eye])
        msg_user = (dot(adj_norm["bought_by"], dot(h_item, W[0]))
                    + dot(adj_norm["follows"], dot(h_user, W[2])))
        msg_item = dot(adj_norm["buys"], dot(h_user, W[1]))
        h_user = msg_user + layer["bias"]
        h_item = msg_item + layer["bias"]
        if layer["relu"]:
            h_user = jnp.maximum(h_user, 0.0)
            h_item = jnp.maximum(h_item, 0.0)
    return {"user": h_user, "item": h_item}


if __name__ == "__main__":
    key = jax.random.PRNGKey(0)
    k_params, k_graph, k_x = jax.random.split(key, 3)

    params = make_params(k_params)
    adj_norm = make_graph(k_graph)
    user_nids = jnp.arange(N_USER, dtype=jnp.int32)               # g.nodes('user')
    x_item = jax.random.normal(k_x, (N_ITEM, IN_DIM_ITEM), jnp.float32)

    out = rgcn_forward(params, adj_norm, user_nids, x_item)
    out = jax.block_until_ready(out)

    ref = rgcn_forward_ref(params, adj_norm, user_nids, x_item)
    for nt in ("user", "item"):
        assert out[nt].shape == ref[nt].shape, nt
        assert jnp.allclose(out[nt], ref[nt], rtol=1e-4, atol=1e-4), nt

    print("KERNEL_OK")
</pallas_src>

<mosaic_0001>
module attributes {stable_mosaic.version = 11 : i64} {
  func.func @kernel(%arg0: memref<16x16xf32, #tpu.memory_space<vmem>>, %arg1: memref<16x16xf32, #tpu.memory_space<vmem>>, %arg2: memref<16x16xf32, #tpu.memory_space<vmem>>, %arg3: memref<16x128xf32, #tpu.memory_space<vmem>>, %arg4: memref<16x128xf32, #tpu.memory_space<vmem>>, %arg5: memref<128x128xf32, #tpu.memory_space<vmem>>, %arg6: memref<1x128xf32, #tpu.memory_space<vmem>>, %arg7: memref<1x128xf32, #tpu.memory_space<vmem>>, %arg8: memref<3x128x128xf32, #tpu.memory_space<vmem>>, %arg9: memref<1x128xf32, #tpu.memory_space<vmem>>, %arg10: memref<3x128x128xf32, #tpu.memory_space<vmem>>, %arg11: memref<1x128xf32, #tpu.memory_space<vmem>>, %arg12: memref<16x128xf32, #tpu.memory_space<vmem>>, %arg13: memref<16x128xf32, #tpu.memory_space<vmem>>) attributes {dimension_semantics = [], scalar_prefetch = 0 : i64, scratch_operands = 0 : i64, tpu.core_type = #tpu.core_type<tc>} {
    %c0 = arith.constant 0 : index
    %c0_0 = arith.constant 0 : index
    %0 = vector.load %arg0[%c0, %c0_0] : memref<16x16xf32, #tpu.memory_space<vmem>>, vector<16x16xf32>
    %c0_1 = arith.constant 0 : index
    %c0_2 = arith.constant 0 : index
    %1 = vector.load %arg1[%c0_1, %c0_2] : memref<16x16xf32, #tpu.memory_space<vmem>>, vector<16x16xf32>
    %c0_3 = arith.constant 0 : index
    %c0_4 = arith.constant 0 : index
    %2 = vector.load %arg2[%c0_3, %c0_4] : memref<16x16xf32, #tpu.memory_space<vmem>>, vector<16x16xf32>
    %c0_5 = arith.constant 0 : index
    %c0_6 = arith.constant 0 : index
    %3 = vector.load %arg4[%c0_5, %c0_6] : memref<16x128xf32, #tpu.memory_space<vmem>>, vector<16x128xf32>
    %c0_7 = arith.constant 0 : index
    %c0_8 = arith.constant 0 : index
    %4 = vector.load %arg5[%c0_7, %c0_8] : memref<128x128xf32, #tpu.memory_space<vmem>>, vector<128x128xf32>
    %cst = arith.constant dense<0.000000e+00> : vector<16x128xf32>
    %5 = tpu.matmul %3, %4, %cst {dimension_numbers = #tpu.dot_dimension_numbers<[1], [0], [0], [1], [0, 0, 1, 1], [], []>, precision = #tpu.contract_precision<fp32>} : vector<16x128xf32>, vector<128x128xf32>, vector<16x128xf32> -> vector<16x128xf32>
    %c0_9 = arith.constant 0 : index
    %c0_10 = arith.constant 0 : index
    %6 = vector.load %arg6[%c0_9, %c0_10] : memref<1x128xf32, #tpu.memory_space<vmem>>, vector<1x128xf32>
    %7 = vector.broadcast %6 : vector<1x128xf32> to vector<16x128xf32>
    %8 = arith.addf %5, %7 : vector<16x128xf32>
    %c0_11 = arith.constant 0 : index
    %c0_12 = arith.constant 0 : index
    %9 = vector.load %arg3[%c0_11, %c0_12] : memref<16x128xf32, #tpu.memory_space<vmem>>, vector<16x128xf32>
    %c0_13 = arith.constant 0 : index
    %c0_14 = arith.constant 0 : index
    %10 = vector.load %arg7[%c0_13, %c0_14] : memref<1x128xf32, #tpu.memory_space<vmem>>, vector<1x128xf32>
    %cst_15 = arith.constant dense<0.000000e+00> : vector<16x128xf32>
    %11 = tpu.matmul %0, %8, %cst_15 {dimension_numbers = #tpu.dot_dimension_numbers<[1], [0], [0], [1], [0, 0, 1, 1], [], []>, precision = #tpu.contract_precision<fp32>} : vector<16x16xf32>, vector<16x128xf32>, vector<16x128xf32> -> vector<16x128xf32>
    %cst_16 = arith.constant dense<0.000000e+00> : vector<16x128xf32>
    %12 = tpu.matmul %1, %9, %cst_16 {dimension_numbers = #tpu.dot_dimension_numbers<[1], [0], [0], [1], [0, 0, 1, 1], [], []>, precision = #tpu.contract_precision<fp32>} : vector<16x16xf32>, vector<16x128xf32>, vector<16x128xf32> -> vector<16x128xf32>
    %13 = arith.addf %11, %12 : vector<16x128xf32>
    %14 = vector.broadcast %10 : vector<1x128xf32> to vector<16x128xf32>
    %15 = arith.addf %13, %14 : vector<16x128xf32>
    %cst_17 = arith.constant dense<0.000000e+00> : vector<16x128xf32>
    %16 = tpu.matmul %2, %9, %cst_17 {dimension_numbers = #tpu.dot_dimension_numbers<[1], [0], [0], [1], [0, 0, 1, 1], [], []>, precision = #tpu.contract_precision<fp32>} : vector<16x16xf32>, vector<16x128xf32>, vector<16x128xf32> -> vector<16x128xf32>
    %17 = vector.broadcast %10 : vector<1x128xf32> to vector<16x128xf32>
    %18 = arith.addf %16, %17 : vector<16x128xf32>
    %cst_18 = arith.constant 0.000000e+00 : f32
    %19 = vector.broadcast %cst_18 : f32 to vector<16x128xf32>
    %20 = arith.maximumf %15, %19 : vector<16x128xf32>
    %cst_19 = arith.constant 0.000000e+00 : f32
    %21 = vector.broadcast %cst_19 : f32 to vector<16x128xf32>
    %22 = arith.maximumf %18, %21 : vector<16x128xf32>
    %c0_20 = arith.constant 0 : index
    %c0_21 = arith.constant 0 : index
    %23 = vector.load %arg9[%c0_20, %c0_21] : memref<1x128xf32, #tpu.memory_space<vmem>>, vector<1x128xf32>
    %c0_22 = arith.constant 0 : index
    %c0_23 = arith.constant 0 : index
    %c0_24 = arith.constant 0 : index
    %24 = vector.load %arg8[%c0_22, %c0_23, %c0_24] : memref<3x128x128xf32, #tpu.memory_space<vmem>>, vector<1x128x128xf32>
    %25 = vector.shape_cast %24 : vector<1x128x128xf32> to vector<128x128xf32>
    %cst_25 = arith.constant dense<0.000000e+00> : vector<16x128xf32>
    %26 = tpu.matmul %22, %25, %cst_25 {dimension_numbers = #tpu.dot_dimension_numbers<[1], [0], [0], [1], [0, 0, 1, 1], [], []>, precision = #tpu.contract_precision<fp32>} : vector<16x128xf32>, vector<128x128xf32>, vector<16x128xf32> -> vector<16x128xf32>
    %c1 = arith.constant 1 : index
    %c0_26 = arith.constant 0 : index
    %c0_27 = arith.constant 0 : index
    %27 = vector.load %arg8[%c1, %c0_26, %c0_27] : memref<3x128x128xf32, #tpu.memory_space<vmem>>, vector<1x128x128xf32>
    %28 = vector.shape_cast %27 : vector<1x128x128xf32> to vector<128x128xf32>
    %cst_28 = arith.constant dense<0.000000e+00> : vector<16x128xf32>
    %29 = tpu.matmul %20, %28, %cst_28 {dimension_numbers = #tpu.dot_dimension_numbers<[1], [0], [0], [1], [0, 0, 1, 1], [], []>, precision = #tpu.contract_precision<fp32>} : vector<16x128xf32>, vector<128x128xf32>, vector<16x128xf32> -> vector<16x128xf32>
    %c2 = arith.constant 2 : index
    %c0_29 = arith.constant 0 : index
    %c0_30 = arith.constant 0 : index
    %30 = vector.load %arg8[%c2, %c0_29, %c0_30] : memref<3x128x128xf32, #tpu.memory_space<vmem>>, vector<1x128x128xf32>
    %31 = vector.shape_cast %30 : vector<1x128x128xf32> to vector<128x128xf32>
    %cst_31 = arith.constant dense<0.000000e+00> : vector<16x128xf32>
    %32 = tpu.matmul %20, %31, %cst_31 {dimension_numbers = #tpu.dot_dimension_numbers<[1], [0], [0], [1], [0, 0, 1, 1], [], []>, precision = #tpu.contract_precision<fp32>} : vector<16x128xf32>, vector<128x128xf32>, vector<16x128xf32> -> vector<16x128xf32>
    %cst_32 = arith.constant dense<0.000000e+00> : vector<16x128xf32>
    %33 = tpu.matmul %0, %26, %cst_32 {dimension_numbers = #tpu.dot_dimension_numbers<[1], [0], [0], [1], [0, 0, 1, 1], [], []>, precision = #tpu.contract_precision<fp32>} : vector<16x16xf32>, vector<16x128xf32>, vector<16x128xf32> -> vector<16x128xf32>
    %cst_33 = arith.constant dense<0.000000e+00> : vector<16x128xf32>
    %34 = tpu.matmul %1, %32, %cst_33 {dimension_numbers = #tpu.dot_dimension_numbers<[1], [0], [0], [1], [0, 0, 1, 1], [], []>, precision = #tpu.contract_precision<fp32>} : vector<16x16xf32>, vector<16x128xf32>, vector<16x128xf32> -> vector<16x128xf32>
    %35 = arith.addf %33, %34 : vector<16x128xf32>
    %36 = vector.broadcast %23 : vector<1x128xf32> to vector<16x128xf32>
    %37 = arith.addf %35, %36 : vector<16x128xf32>
    %cst_34 = arith.constant dense<0.000000e+00> : vector<16x128xf32>
    %38 = tpu.matmul %2, %29, %cst_34 {dimension_numbers = #tpu.dot_dimension_numbers<[1], [0], [0], [1], [0, 0, 1, 1], [], []>, precision = #tpu.contract_precision<fp32>} : vector<16x16xf32>, vector<16x128xf32>, vector<16x128xf32> -> vector<16x128xf32>
    %39 = vector.broadcast %23 : vector<1x128xf32> to vector<16x128xf32>
    %40 = arith.addf %38, %39 : vector<16x128xf32>
    %cst_35 = arith.constant 0.000000e+00 : f32
    %41 = vector.broadcast %cst_35 : f32 to vector<16x128xf32>
    %42 = arith.maximumf %37, %41 : vector<16x128xf32>
    %cst_36 = arith.constant 0.000000e+00 : f32
    %43 = vector.broadcast %cst_36 : f32 to vector<16x128xf32>
    %44 = arith.maximumf %40, %43 : vector<16x128xf32>
    %c0_37 = arith.constant 0 : index
    %c0_38 = arith.constant 0 : index
    %45 = vector.load %arg11[%c0_37, %c0_38] : memref<1x128xf32, #tpu.memory_space<vmem>>, vector<1x128xf32>
    %c0_39 = arith.constant 0 : index
    %c0_40 = arith.constant 0 : index
    %c0_41 = arith.constant 0 : index
    %46 = vector.load %arg10[%c0_39, %c0_40, %c0_41] : memref<3x128x128xf32, #tpu.memory_space<vmem>>, vector<1x128x128xf32>
    %47 = vector.shape_cast %46 : vector<1x128x128xf32> to vector<128x128xf32>
    %cst_42 = arith.constant dense<0.000000e+00> : vector<16x128xf32>
    %48 = tpu.matmul %44, %47, %cst_42 {dimension_numbers = #tpu.dot_dimension_numbers<[1], [0], [0], [1], [0, 0, 1, 1], [], []>, precision = #tpu.contract_precision<fp32>} : vector<16x128xf32>, vector<128x128xf32>, vector<16x128xf32> -> vector<16x128xf32>
    %c1_43 = arith.constant 1 : index
    %c0_44 = arith.constant 0 : index
    %c0_45 = arith.constant 0 : index
    %49 = vector.load %arg10[%c1_43, %c0_44, %c0_45] : memref<3x128x128xf32, #tpu.memory_space<vmem>>, vector<1x128x128xf32>
    %50 = vector.shape_cast %49 : vector<1x128x128xf32> to vector<128x128xf32>
    %cst_46 = arith.constant dense<0.000000e+00> : vector<16x128xf32>
    %51 = tpu.matmul %42, %50, %cst_46 {dimension_numbers = #tpu.dot_dimension_numbers<[1], [0], [0], [1], [0, 0, 1, 1], [], []>, precision = #tpu.contract_precision<fp32>} : vector<16x128xf32>, vector<128x128xf32>, vector<16x128xf32> -> vector<16x128xf32>
    %c2_47 = arith.constant 2 : index
    %c0_48 = arith.constant 0 : index
    %c0_49 = arith.constant 0 : index
    %52 = vector.load %arg10[%c2_47, %c0_48, %c0_49] : memref<3x128x128xf32, #tpu.memory_space<vmem>>, vector<1x128x128xf32>
    %53 = vector.shape_cast %52 : vector<1x128x128xf32> to vector<128x128xf32>
    %cst_50 = arith.constant dense<0.000000e+00> : vector<16x128xf32>
    %54 = tpu.matmul %42, %53, %cst_50 {dimension_numbers = #tpu.dot_dimension_numbers<[1], [0], [0], [1], [0, 0, 1, 1], [], []>, precision = #tpu.contract_precision<fp32>} : vector<16x128xf32>, vector<128x128xf32>, vector<16x128xf32> -> vector<16x128xf32>
    %cst_51 = arith.constant dense<0.000000e+00> : vector<16x128xf32>
    %55 = tpu.matmul %0, %48, %cst_51 {dimension_numbers = #tpu.dot_dimension_numbers<[1], [0], [0], [1], [0, 0, 1, 1], [], []>, precision = #tpu.contract_precision<fp32>} : vector<16x16xf32>, vector<16x128xf32>, vector<16x128xf32> -> vector<16x128xf32>
    %cst_52 = arith.constant dense<0.000000e+00> : vector<16x128xf32>
    %56 = tpu.matmul %1, %54, %cst_52 {dimension_numbers = #tpu.dot_dimension_numbers<[1], [0], [0], [1], [0, 0, 1, 1], [], []>, precision = #tpu.contract_precision<fp32>} : vector<16x16xf32>, vector<16x128xf32>, vector<16x128xf32> -> vector<16x128xf32>
    %57 = arith.addf %55, %56 : vector<16x128xf32>
    %58 = vector.broadcast %45 : vector<1x128xf32> to vector<16x128xf32>
    %59 = arith.addf %57, %58 : vector<16x128xf32>
    %cst_53 = arith.constant dense<0.000000e+00> : vector<16x128xf32>
    %60 = tpu.matmul %2, %51, %cst_53 {dimension_numbers = #tpu.dot_dimension_numbers<[1], [0], [0], [1], [0, 0, 1, 1], [], []>, precision = #tpu.contract_precision<fp32>} : vector<16x16xf32>, vector<16x128xf32>, vector<16x128xf32> -> vector<16x128xf32>
    %61 = vector.broadcast %45 : vector<1x128xf32> to vector<16x128xf32>
    %62 = arith.addf %60, %61 : vector<16x128xf32>
    %c0_54 = arith.constant 0 : index
    %c0_55 = arith.constant 0 : index
    %63 = vector.load %arg12[%c0_54, %c0_55] : memref<16x128xf32, #tpu.memory_space<vmem>>, vector<16x128xf32>
    tpu.vector_store %arg12[%c0_54, %c0_55], %59 {strides = array<i32>} : memref<16x128xf32, #tpu.memory_space<vmem>>, vector<16x128xf32>,
    %c0_56 = arith.constant 0 : index
    %c0_57 = arith.constant 0 : index
    %64 = vector.load %arg13[%c0_56, %c0_57] : memref<16x128xf32, #tpu.memory_space<vmem>>, vector<16x128xf32>
    tpu.vector_store %arg13[%c0_56, %c0_57], %62 {strides = array<i32>} : memref<16x128xf32, #tpu.memory_space<vmem>>, vector<16x128xf32>,
    return
  }
}

</mosaic_0001>

<llo_original>
// kernel: _rgcn_fused.1
$region0: #{_rgcn_fused.1}
  #allocation0 [shape = 'u32[]', space=smem, size = 0x4, offset = 0x4, fixed_abs, tag = 'smem constant byte address 0x4 - core index']
  #allocation1 [shape = 'u32[72,128]{1,0:T(1,128)}', space=vmem, size = 0x9000, scoped, tag = 'internal scratch']
  %s0 = inlined_call_operand.vmem [shape: f32[16,16], index: 0, kind: input, shape index: {}]
  %s1 = inlined_call_operand.vmem [shape: f32[16,16], index: 1, kind: input, shape index: {}]
  %s2 = inlined_call_operand.vmem [shape: f32[16,16], index: 2, kind: input, shape index: {}]
  %s3 = inlined_call_operand.vmem [shape: f32[16,128], index: 3, kind: input, shape index: {}]
  %s4 = inlined_call_operand.vmem [shape: f32[16,128], index: 4, kind: input, shape index: {}]
  %s5 = inlined_call_operand.vmem [shape: f32[128,128], index: 5, kind: input, shape index: {}]
  %s6 = inlined_call_operand.vmem [shape: f32[1,128], index: 6, kind: input, shape index: {}]
  %s7 = inlined_call_operand.vmem [shape: f32[1,128], index: 7, kind: input, shape index: {}]
  %s8 = inlined_call_operand.vmem [shape: f32[3,128,128], index: 8, kind: input, shape index: {}]
  %s9 = inlined_call_operand.vmem [shape: f32[1,128], index: 9, kind: input, shape index: {}]
  %s10 = inlined_call_operand.vmem [shape: f32[3,128,128], index: 10, kind: input, shape index: {}]
  %s11 = inlined_call_operand.vmem [shape: f32[1,128], index: 11, kind: input, shape index: {}]
  %s12 = inlined_call_operand.hbm [shape: f32[16,128], index: 12, kind: output, shape index: {0}]
  %s13 = inlined_call_operand.hbm [shape: f32[16,128], index: 13, kind: output, shape index: {1}]
  %14 = xla_tuple %s12, %s13
  %s15 = sld [smem:[#allocation0]]
  $region66: #{_rgcn_fused.1} parent=0
    _
  %s17 = ssub.s32 1, %s15
  %s18 = scalar_select 0, %s17, %s15
  $region1: #{_rgcn_fused.1} parent=0
    #allocation2 [shape = 'u8[8192]{0}', space=vmem, size = 0x2000, scoped, tag = 'output window, operand 0, single buffered']
    #allocation3 [shape = 's32[1]{0}', space=sflag, size = 0x4, scoped, tag = 'scoped memory for _rgcn_fused.1']
    #allocation4 [shape = 'u8[8192]{0}', space=vmem, size = 0x2000, scoped, tag = 'output window, operand 1, single buffered']
    #allocation5 [shape = 's32[1]{0}', space=sflag, size = 0x4, scoped, tag = 'scoped memory for _rgcn_fused.1']
    %19 = vsyncpa [#allocation3], 0
    %20 = vsyncpa [#allocation5], 0
    // Predicated region
    $region2: #{_rgcn_fused.1} parent=1 // pred_check
      _
    $region3: #{_rgcn_fused.1} parent=1 // pred_check_branch
      %22 = sbr.rel (0) target = $region5
    $region4: #{_rgcn_fused.1} parent=1 // pred_region
      _
    $region5: #{_rgcn_fused.1} parent=1 // pred_fallthru
      _
    // Predicated region
    $region6: #{_rgcn_fused.1} parent=1 // pred_check
      _
    $region7: #{_rgcn_fused.1} parent=1 // pred_check_branch
      %24 = sbr.rel (0) target = $region9
    $region8: #{_rgcn_fused.1} parent=1 // pred_region
      _
    $region9: #{_rgcn_fused.1} parent=1 // pred_fallthru
      _
    // Predicated region
    $region10: #{_rgcn_fused.1} parent=1 // pred_check
      _
    $region11: #{_rgcn_fused.1} parent=1 // pred_check_branch
      %26 = sbr.rel (0) target = $region13
    $region12: #{_rgcn_fused.1} parent=1 // pred_region
      _
    $region13: #{_rgcn_fused.1} parent=1 // pred_fallthru
      _
    // Predicated region
    $region14: #{_rgcn_fused.1} parent=1 // pred_check
      _
    $region15: #{_rgcn_fused.1} parent=1 // pred_check_branch
      %28 = sbr.rel (0) target = $region17
    $region16: #{_rgcn_fused.1} parent=1 // pred_region
      _
    $region17: #{_rgcn_fused.1} parent=1 // pred_fallthru
      _
    // Predicated region
    $region18: #{_rgcn_fused.1} parent=1 // pred_check
      _
    $region19: #{_rgcn_fused.1} parent=1 // pred_check_branch
      %30 = sbr.rel (0) target = $region21
    $region20: #{_rgcn_fused.1} parent=1 // pred_region
      _
    $region21: #{_rgcn_fused.1} parent=1 // pred_fallthru
      _
    // Predicated region
    $region22: #{_rgcn_fused.1} parent=1 // pred_check
      _
    $region23: #{_rgcn_fused.1} parent=1 // pred_check_branch
      %32 = sbr.rel (0) target = $region25
    $region24: #{_rgcn_fused.1} parent=1 // pred_region
      _
    $region25: #{_rgcn_fused.1} parent=1 // pred_fallthru
      _
    // Predicated region
    $region26: #{_rgcn_fused.1} parent=1 // pred_check
      _
    $region27: #{_rgcn_fused.1} parent=1 // pred_check_branch
      %34 = sbr.rel (0) target = $region29
    $region28: #{_rgcn_fused.1} parent=1 // pred_region
      _
    $region29: #{_rgcn_fused.1} parent=1 // pred_fallthru
      _
    // Predicated region
    $region30: #{_rgcn_fused.1} parent=1 // pred_check
      _
    $region31: #{_rgcn_fused.1} parent=1 // pred_check_branch
      %36 = sbr.rel (0) target = $region33
    $region32: #{_rgcn_fused.1} parent=1 // pred_region
      _
    $region33: #{_rgcn_fused.1} parent=1 // pred_fallthru
      _
    // Predicated region
    $region34: #{_rgcn_fused.1} parent=1 // pred_check
      _
    $region35: #{_rgcn_fused.1} parent=1 // pred_check_branch
      %38 = sbr.rel (0) target = $region37
    $region36: #{_rgcn_fused.1} parent=1 // pred_region
      _
    $region37: #{_rgcn_fused.1} parent=1 // pred_fallthru
      _
    // Predicated region
    $region38: #{_rgcn_fused.1} parent=1 // pred_check
      _
    $region39: #{_rgcn_fused.1} parent=1 // pred_check_branch
      %40 = sbr.rel (0) target = $region41
    $region40: #{_rgcn_fused.1} parent=1 // pred_region
      _
    $region41: #{_rgcn_fused.1} parent=1 // pred_fallthru
      _
    // Predicated region
    $region42: #{_rgcn_fused.1} parent=1 // pred_check
      _
    $region43: #{_rgcn_fused.1} parent=1 // pred_check_branch
      %42 = sbr.rel (0) target = $region45
    $region44: #{_rgcn_fused.1} parent=1 // pred_region
      _
    $region45: #{_rgcn_fused.1} parent=1 // pred_fallthru
      _
    // Predicated region
    $region46: #{_rgcn_fused.1} parent=1 // pred_check
      _
    $region47: #{_rgcn_fused.1} parent=1 // pred_check_branch
      %44 = sbr.rel (0) target = $region49
    $region48: #{_rgcn_fused.1} parent=1 // pred_region
      _
    $region49: #{_rgcn_fused.1} parent=1 // pred_fallthru
      _
    %v45 = vld [vmem:[%s0] sm:$0xff]
    %v46 = vld [vmem:[%s0 + $0x8] sm:$0xff]
    %v47 = vld [vmem:[%s1] sm:$0xff]
    %v48 = vld [vmem:[%s1 + $0x8] sm:$0xff]
    %v49 = vld [vmem:[%s2] sm:$0xff]
    %v50 = vld [vmem:[%s2 + $0x8] sm:$0xff]
    %v51 = vld [vmem:[%s4] sm:$0xff]
    %v52 = vld [vmem:[%s4 + $0x8] sm:$0xff]
    %v53 = vld [vmem:[%s5] sm:$0xff]
    %v54 = vld [vmem:[%s5 + $0x8] sm:$0xff]
    %v55 = vld [vmem:[%s5 + $0x10] sm:$0xff]
    %v56 = vld [vmem:[%s5 + $0x18] sm:$0xff]
    %v57 = vld [vmem:[%s5 + $0x20] sm:$0xff]
    %v58 = vld [vmem:[%s5 + $0x28] sm:$0xff]
    %v59 = vld [vmem:[%s5 + $0x30] sm:$0xff]
    %v60 = vld [vmem:[%s5 + $0x38] sm:$0xff]
    %v61 = vld [vmem:[%s5 + $0x40] sm:$0xff]
    %v62 = vld [vmem:[%s5 + $0x48] sm:$0xff]
    %v63 = vld [vmem:[%s5 + $0x50] sm:$0xff]
    %v64 = vld [vmem:[%s5 + $0x58] sm:$0xff]
    %v65 = vld [vmem:[%s5 + $0x60] sm:$0xff]
    %v66 = vld [vmem:[%s5 + $0x68] sm:$0xff]
    %v67 = vld [vmem:[%s5 + $0x70] sm:$0xff]
    %v68 = vld [vmem:[%s5 + $0x78] sm:$0xff]
    %v69 = vld [vmem:[%s6] sm:$0x1]
    %v71 = vperm.slane %v69, 0
    %v73 = vand.u32 %v68, 4294901760
    %74 = vmatpush.msra.mxu0 %v73
    %v75 = vand.u32 %v67, 4294901760
    %76 = vmatpush.msra.mxu0 %v75
    %v77 = vand.u32 %v66, 4294901760
    %78 = vmatpush.msra.mxu0 %v77
    %v79 = vand.u32 %v65, 4294901760
    %80 = vmatpush.msra.mxu0 %v79
    %v81 = vand.u32 %v64, 4294901760
    %82 = vmatpush.msra.mxu0 %v81
    %v83 = vand.u32 %v63, 4294901760
    %84 = vmatpush.msra.mxu0 %v83
    %v85 = vand.u32 %v62, 4294901760
    %86 = vmatpush.msra.mxu0 %v85
    %v87 = vand.u32 %v61, 4294901760
    %88 = vmatpush.msra.mxu0 %v87
    %v89 = vand.u32 %v60, 4294901760
    %90 = vmatpush.msra.mxu0 %v89
    %v91 = vand.u32 %v59, 4294901760
    %92 = vmatpush.msra.mxu0 %v91
    %v93 = vand.u32 %v58, 4294901760
    %94 = vmatpush.msra.mxu0 %v93
    %v95 = vand.u32 %v57, 4294901760
    %96 = vmatpush.msra.mxu0 %v95
    %v97 = vand.u32 %v56, 4294901760
    %98 = vmatpush.msra.mxu0 %v97
    %v99 = vand.u32 %v55, 4294901760
    %100 = vmatpush.msra.mxu0 %v99
    %v101 = vand.u32 %v54, 4294901760
    %102 = vmatpush.msra.mxu0 %v101
    %v103 = vand.u32 %v53, 4294901760
    %104 = vmatpush.msra.mxu0 %v103
    %v105 = vand.u32 %v51, 4294901760
    %v106 = vsub.f32 %v51, %v105
    %v107 = vand.u32 %v106, 4294901760
    %v108 = vsub.f32 %v106, %v107
    %v109 = vand.u32 %v108, 4294901760
    %110 = vmatmul.f32.gmra.mxu0 %v109
    %v111 = vpop.f32.mrf.mxu0
    %v112 = vadd.f32 %v71, %v111
    %v113 = vand.u32 %v52, 4294901760
    %v114 = vsub.f32 %v52, %v113
    %v115 = vand.u32 %v114, 4294901760
    %v116 = vsub.f32 %v114, %v115
    %v117 = vand.u32 %v116, 4294901760
    %118 = vmatmul.f32.gmra.mxu0 %v117
    %v119 = vpop.f32.mrf.mxu0
    %v120 = vadd.f32 %v71, %v119
    %121 = vdwg.mxu0
    %v122 = vand.u32 %v68, 4294901760
    %v123 = vsub.f32 %v68, %v122
    %v124 = vand.u32 %v123, 4294901760
    %v125 = vsub.f32 %v123, %v124
    %v126 = vand.u32 %v125, 4294901760
    %127 = vmatpush.msra.mxu0 %v126
    %v128 = vand.u32 %v67, 4294901760
    %v129 = vsub.f32 %v67, %v128
    %v130 = vand.u32 %v129, 4294901760
    %v131 = vsub.f32 %v129, %v130
    %v132 = vand.u32 %v131, 4294901760
    %133 = vmatpush.msra.mxu0 %v132
    %v134 = vand.u32 %v66, 4294901760
    %v135 = vsub.f32 %v66, %v134
    %v136 = vand.u32 %v135, 4294901760
    %v137 = vsub.f32 %v135, %v136
    %v138 = vand.u32 %v137, 4294901760
    %139 = vmatpush.msra.mxu0 %v138
    %v140 = vand.u32 %v65, 4294901760
    %v141 = vsub.f32 %v65, %v140
    %v142 = vand.u32 %v141, 4294901760
    %v143 = vsub.f32 %v141, %v142
    %v144 = vand.u32 %v143, 4294901760
    %145 = vmatpush.msra.mxu0 %v144
    %v146 = vand.u32 %v64, 4294901760
    %v147 = vsub.f32 %v64, %v146
    %v148 = vand.u32 %v147, 4294901760
    %v149 = vsub.f32 %v147, %v148
    %v150 = vand.u32 %v149, 4294901760
    %151 = vmatpush.msra.mxu0 %v150
    %v152 = vand.u32 %v63, 4294901760
    %v153 = vsub.f32 %v63, %v152
    %v154 = vand.u32 %v153, 4294901760
    %v155 = vsub.f32 %v153, %v154
    %v156 = vand.u32 %v155, 4294901760
    %157 = vmatpush.msra.mxu0 %v156
    %v158 = vand.u32 %v62, 4294901760
    %v159 = vsub.f32 %v62, %v158
    %v160 = vand.u32 %v159, 4294901760
    %v161 = vsub.f32 %v159, %v160
    %v162 = vand.u32 %v161, 4294901760
    %163 = vmatpush.msra.mxu0 %v162
    %v164 = vand.u32 %v61, 4294901760
    %v165 = vsub.f32 %v61, %v164
    %v166 = vand.u32 %v165, 4294901760
    %v167 = vsub.f32 %v165, %v166
    %v168 = vand.u32 %v167, 4294901760
    %169 = vmatpush.msra.mxu0 %v168
    %v170 = vand.u32 %v60, 4294901760
    %v171 = vsub.f32 %v60, %v170
    %v172 = vand.u32 %v171, 4294901760
    %v173 = vsub.f32 %v171, %v172
    %v174 = vand.u32 %v173, 4294901760
    %175 = vmatpush.msra.mxu0 %v174
    %v176 = vand.u32 %v59, 4294901760
    %v177 = vsub.f32 %v59, %v176
    %v178 = vand.u32 %v177, 4294901760
    %v179 = vsub.f32 %v177, %v178
    %v180 = vand.u32 %v179, 4294901760
    %181 = vmatpush.msra.mxu0 %v180
    %v182 = vand.u32 %v58, 4294901760
    %v183 = vsub.f32 %v58, %v182
    %v184 = vand.u32 %v183, 4294901760
    %v185 = vsub.f32 %v183, %v184
    %v186 = vand.u32 %v185, 4294901760
    %187 = vmatpush.msra.mxu0 %v186
    %v188 = vand.u32 %v57, 4294901760
    %v189 = vsub.f32 %v57, %v188
    %v190 = vand.u32 %v189, 4294901760
    %v191 = vsub.f32 %v189, %v190
    %v192 = vand.u32 %v191, 4294901760
    %193 = vmatpush.msra.mxu0 %v192
    %v194 = vand.u32 %v56, 4294901760
    %v195 = vsub.f32 %v56, %v194
    %v196 = vand.u32 %v195, 4294901760
    %v197 = vsub.f32 %v195, %v196
    %v198 = vand.u32 %v197, 4294901760
    %199 = vmatpush.msra.mxu0 %v198
    %v200 = vand.u32 %v55, 4294901760
    %v201 = vsub.f32 %v55, %v200
    %v202 = vand.u32 %v201, 4294901760
    %v203 = vsub.f32 %v201, %v202
    %v204 = vand.u32 %v203, 4294901760
    %205 = vmatpush.msra.mxu0 %v204
    %v206 = vand.u32 %v54, 4294901760
    %v207 = vsub.f32 %v54, %v206
    %v208 = vand.u32 %v207, 4294901760
    %v209 = vsub.f32 %v207, %v208
    %v210 = vand.u32 %v209, 4294901760
    %211 = vmatpush.msra.mxu0 %v210
    %v212 = vand.u32 %v53, 4294901760
    %v213 = vsub.f32 %v53, %v212
    %v214 = vand.u32 %v213, 4294901760
    %v215 = vsub.f32 %v213, %v214
    %v216 = vand.u32 %v215, 4294901760
    %217 = vmatpush.msra.mxu0 %v216
    %v218 = vand.u32 %v51, 4294901760
    %219 = vmatmul.f32.gmra.mxu0 %v218
    %v220 = vpop.f32.mrf.mxu0
    %v221 = vadd.f32 %v112, %v220
    %v222 = vand.u32 %v52, 4294901760
    %223 = vmatmul.f32.gmra.mxu0 %v222
    %v224 = vpop.f32.mrf.mxu0
    %v225 = vadd.f32 %v120, %v224
    %226 = vdwg.mxu0
    %v227 = vand.u32 %v68, 4294901760
    %v228 = vsub.f32 %v68, %v227
    %229 = vmatpush.msra.mxu0 %v228
    %v230 = vand.u32 %v67, 4294901760
    %v231 = vsub.f32 %v67, %v230
    %232 = vmatpush.msra.mxu0 %v231
    %v233 = vand.u32 %v66, 4294901760
    %v234 = vsub.f32 %v66, %v233
    %235 = vmatpush.msra.mxu0 %v234
    %v236 = vand.u32 %v65, 4294901760
    %v237 = vsub.f32 %v65, %v236
    %238 = vmatpush.msra.mxu0 %v237
    %v239 = vand.u32 %v64, 4294901760
    %v240 = vsub.f32 %v64, %v239
    %241 = vmatpush.msra.mxu0 %v240
    %v242 = vand.u32 %v63, 4294901760
    %v243 = vsub.f32 %v63, %v242
    %244 = vmatpush.msra.mxu0 %v243
    %v245 = vand.u32 %v62, 4294901760
    %v246 = vsub.f32 %v62, %v245
    %247 = vmatpush.msra.mxu0 %v246
    %v248 = vand.u32 %v61, 4294901760
    %v249 = vsub.f32 %v61, %v248
    %250 = vmatpush.msra.mxu0 %v249
    %v251 = vand.u32 %v60, 4294901760
    %v252 = vsub.f32 %v60, %v251
    %253 = vmatpush.msra.mxu0 %v252
    %v254 = vand.u32 %v59, 4294901760
    %v255 = vsub.f32 %v59, %v254
    %256 = vmatpush.msra.mxu0 %v255
    %v257 = vand.u32 %v58, 4294901760
    %v258 = vsub.f32 %v58, %v257
    %259 = vmatpush.msra.mxu0 %v258
    %v260 = vand.u32 %v57, 4294901760
    %v261 = vsub.f32 %v57, %v260
    %262 = vmatpush.msra.mxu0 %v261
    %v263 = vand.u32 %v56, 4294901760
    %v264 = vsub.f32 %v56, %v263
    %265 = vmatpush.msra.mxu0 %v264
    %v266 = vand.u32 %v55, 4294901760
    %v267 = vsub.f32 %v55, %v266
    %268 = vmatpush.msra.mxu0 %v267
    %v269 = vand.u32 %v54, 4294901760
    %v270 = vsub.f32 %v54, %v269
    %271 = vmatpush.msra.mxu0 %v270
    %v272 = vand.u32 %v53, 4294901760
    %v273 = vsub.f32 %v53, %v272
    %274 = vmatpush.msra.mxu0 %v273
    %v275 = vand.u32 %v51, 4294901760
    %v276 = vsub.f32 %v51, %v275
    %277 = vmatmul.f32.gmra.mxu0 %v276
    %v278 = vpop.f32.mrf.mxu0
    %v279 = vadd.f32 %v221, %v278
    %v280 = vand.u32 %v52, 4294901760
    %v281 = vsub.f32 %v52, %v280
    %282 = vmatmul.f32.gmra.mxu0 %v281
    %v283 = vpop.f32.mrf.mxu0
    %v284 = vadd.f32 %v225, %v283
    %285 = vdwg.mxu0
    %v286 = vand.u32 %v68, 4294901760
    %287 = vmatpush.msra.mxu0 %v286
    %v288 = vand.u32 %v67, 4294901760
    %289 = vmatpush.msra.mxu0 %v288
    %v290 = vand.u32 %v66, 4294901760
    %291 = vmatpush.msra.mxu0 %v290
    %v292 = vand.u32 %v65, 4294901760
    %293 = vmatpush.msra.mxu0 %v292
    %v294 = vand.u32 %v64, 4294901760
    %295 = vmatpush.msra.mxu0 %v294
    %v296 = vand.u32 %v63, 4294901760
    %297 = vmatpush.msra.mxu0 %v296
    %v298 = vand.u32 %v62, 4294901760
    %299 = vmatpush.msra.mxu0 %v298
    %v300 = vand.u32 %v61, 4294901760
    %301 = vmatpush.msra.mxu0 %v300
    %v302 = vand.u32 %v60, 4294901760
    %303 = vmatpush.msra.mxu0 %v302
    %v304 = vand.u32 %v59, 4294901760
    %305 = vmatpush.msra.mxu0 %v304
    %v306 = vand.u32 %v58, 4294901760
    %307 = vmatpush.msra.mxu0 %v306
    %v308 = vand.u32 %v57, 4294901760
    %309 = vmatpush.msra.mxu0 %v308
    %v310 = vand.u32 %v56, 4294901760
    %311 = vmatpush.msra.mxu0 %v310
    %v312 = vand.u32 %v55, 4294901760
    %313 = vmatpush.msra.mxu0 %v312
    %v314 = vand.u32 %v54, 4294901760
    %315 = vmatpush.msra.mxu0 %v314
    %v316 = vand.u32 %v53, 4294901760
    %317 = vmatpush.msra.mxu0 %v316
    %v318 = vand.u32 %v51, 4294901760
    %v319 = vsub.f32 %v51, %v318
    %v320 = vand.u32 %v319, 4294901760
    %321 = vmatmul.f32.gmra.mxu0 %v320
    %v322 = vpop.f32.mrf.mxu0
    %v323 = vadd.f32 %v279, %v322
    %v324 = vand.u32 %v52, 4294901760
    %v325 = vsub.f32 %v52, %v324
    %v326 = vand.u32 %v325, 4294901760
    %327 = vmatmul.f32.gmra.mxu0 %v326
    %v328 = vpop.f32.mrf.mxu0
    %v329 = vadd.f32 %v284, %v328
    %330 = vdwg.mxu0
    %v331 = vand.u32 %v68, 4294901760
    %v332 = vsub.f32 %v68, %v331
    %v333 = vand.u32 %v332, 4294901760
    %334 = vmatpush.msra.mxu0 %v333
    %v335 = vand.u32 %v67, 4294901760
    %v336 = vsub.f32 %v67, %v335
    %v337 = vand.u32 %v336, 4294901760
    %338 = vmatpush.msra.mxu0 %v337
    %v339 = vand.u32 %v66, 4294901760
    %v340 = vsub.f32 %v66, %v339
    %v341 = vand.u32 %v340, 4294901760
    %342 = vmatpush.msra.mxu0 %v341
    %v343 = vand.u32 %v65, 4294901760
    %v344 = vsub.f32 %v65, %v343
    %v345 = vand.u32 %v344, 4294901760
    %346 = vmatpush.msra.mxu0 %v345
    %v347 = vand.u32 %v64, 4294901760
    %v348 = vsub.f32 %v64, %v347
    %v349 = vand.u32 %v348, 4294901760
    %350 = vmatpush.msra.mxu0 %v349
    %v351 = vand.u32 %v63, 4294901760
    %v352 = vsub.f32 %v63, %v351
    %v353 = vand.u32 %v352, 4294901760
    %354 = vmatpush.msra.mxu0 %v353
    %v355 = vand.u32 %v62, 4294901760
    %v356 = vsub.f32 %v62, %v355
    %v357 = vand.u32 %v356, 4294901760
    %358 = vmatpush.msra.mxu0 %v357
    %v359 = vand.u32 %v61, 4294901760
    %v360 = vsub.f32 %v61, %v359
    %v361 = vand.u32 %v360, 4294901760
    %362 = vmatpush.msra.mxu0 %v361
    %v363 = vand.u32 %v60, 4294901760
    %v364 = vsub.f32 %v60, %v363
    %v365 = vand.u32 %v364, 4294901760
    %366 = vmatpush.msra.mxu0 %v365
    %v367 = vand.u32 %v59, 4294901760
    %v368 = vsub.f32 %v59, %v367
    %v369 = vand.u32 %v368, 4294901760
    %370 = vmatpush.msra.mxu0 %v369
    %v371 = vand.u32 %v58, 4294901760
    %v372 = vsub.f32 %v58, %v371
    %v373 = vand.u32 %v372, 4294901760
    %374 = vmatpush.msra.mxu0 %v373
    %v375 = vand.u32 %v57, 4294901760
    %v376 = vsub.f32 %v57, %v375
    %v377 = vand.u32 %v376, 4294901760
    %378 = vmatpush.msra.mxu0 %v377
    %v379 = vand.u32 %v56, 4294901760
    %v380 = vsub.f32 %v56, %v379
    %v381 = vand.u32 %v380, 4294901760
    %382 = vmatpush.msra.mxu0 %v381
    %v383 = vand.u32 %v55, 4294901760
    %v384 = vsub.f32 %v55, %v383
    %v385 = vand.u32 %v384, 4294901760
    %386 = vmatpush.msra.mxu0 %v385
    %v387 = vand.u32 %v54, 4294901760
    %v388 = vsub.f32 %v54, %v387
    %v389 = vand.u32 %v388, 4294901760
    %390 = vmatpush.msra.mxu0 %v389
    %v391 = vand.u32 %v53, 4294901760
    %v392 = vsub.f32 %v53, %v391
    %v393 = vand.u32 %v392, 4294901760
    %394 = vmatpush.msra.mxu0 %v393
    %v395 = vand.u32 %v51, 4294901760
    %396 = vmatmul.f32.gmra.mxu0 %v395
    %v397 = vpop.f32.mrf.mxu0
    %v398 = vadd.f32 %v323, %v397
    %v399 = vand.u32 %v52, 4294901760
    %400 = vmatmul.f32.gmra.mxu0 %v399
    %v401 = vpop.f32.mrf.mxu0
    %v402 = vadd.f32 %v329, %v401
    %403 = vdwg.mxu0
    %v404 = vand.u32 %v68, 4294901760
    %405 = vmatpush.msra.mxu0 %v404
    %v406 = vand.u32 %v67, 4294901760
    %407 = vmatpush.msra.mxu0 %v406
    %v408 = vand.u32 %v66, 4294901760
    %409 = vmatpush.msra.mxu0 %v408
    %v410 = vand.u32 %v65, 4294901760
    %411 = vmatpush.msra.mxu0 %v410
    %v412 = vand.u32 %v64, 4294901760
    %413 = vmatpush.msra.mxu0 %v412
    %v414 = vand.u32 %v63, 4294901760
    %415 = vmatpush.msra.mxu0 %v414
    %v416 = vand.u32 %v62, 4294901760
    %417 = vmatpush.msra.mxu0 %v416
    %v418 = vand.u32 %v61, 4294901760
    %419 = vmatpush.msra.mxu0 %v418
    %v420 = vand.u32 %v60, 4294901760
    %421 = vmatpush.msra.mxu0 %v420
    %v422 = vand.u32 %v59, 4294901760
    %423 = vmatpush.msra.mxu0 %v422
    %v424 = vand.u32 %v58, 4294901760
    %425 = vmatpush.msra.mxu0 %v424
    %v426 = vand.u32 %v57, 4294901760
    %427 = vmatpush.msra.mxu0 %v426
    %v428 = vand.u32 %v56, 4294901760
    %429 = vmatpush.msra.mxu0 %v428
    %v430 = vand.u32 %v55, 4294901760
    %431 = vmatpush.msra.mxu0 %v430
    %v432 = vand.u32 %v54, 4294901760
    %433 = vmatpush.msra.mxu0 %v432
    %v434 = vand.u32 %v53, 4294901760
    %435 = vmatpush.msra.mxu0 %v434
    %v436 = vand.u32 %v51, 4294901760
    %437 = vmatmul.f32.gmra.mxu0 %v436
    %v438 = vpop.f32.mrf.mxu0
    %v439 = vadd.f32 %v398, %v438
    %v440 = vand.u32 %v52, 4294901760
    %441 = vmatmul.f32.gmra.mxu0 %v440
    %v442 = vpop.f32.mrf.mxu0
    %v443 = vadd.f32 %v402, %v442
    %444 = vdwg.mxu0
    %v445 = vld [vmem:[%s3] sm:$0xff]
    %v446 = vld [vmem:[%s3 + $0x8] sm:$0xff]
    %v447 = vld [vmem:[%s7] sm:$0x1]
    %vm448 = vcmask 130048
    %v450 = vsel %vm448, %v47, 0
    %v453 = vsel %vm448, %v48, 0
    %455 = vmatpush.msra.mxu0 0.0
    %456 = vmatpush.msra.mxu0 0.0
    %457 = vmatpush.msra.mxu0 0.0
    %458 = vmatpush.msra.mxu0 0.0
    %459 = vmatpush.msra.mxu0 0.0
    %460 = vmatpush.msra.mxu0 0.0
    %461 = vmatpush.msra.mxu0 0.0
    %462 = vmatpush.msra.mxu0 0.0
    %463 = vmatpush.msra.mxu0 0.0
    %464 = vmatpush.msra.mxu0 0.0
    %465 = vmatpush.msra.mxu0 0.0
    %466 = vmatpush.msra.mxu0 0.0
    %467 = vmatpush.msra.mxu0 0.0
    %468 = vmatpush.msra.mxu0 0.0
    %v469 = vand.u32 %v446, 4294901760
    %470 = vmatpush.msra.mxu0 %v469
    %v471 = vand.u32 %v445, 4294901760
    %472 = vmatpush.msra.mxu0 %v471
    %v473 = vand.u32 %v450, 4294901760
    %v474 = vsub.f32 %v450, %v473
    %v475 = vand.u32 %v474, 4294901760
    %v476 = vsub.f32 %v474, %v475
    %v477 = vand.u32 %v476, 4294901760
    %478 = vmatmul.f32.gmra.mxu0 %v477
    %v479 = vpop.f32.mrf.mxu0
    %v480 = vadd.f32 0.0, %v479
    %v481 = vand.u32 %v453, 4294901760
    %v482 = vsub.f32 %v453, %v481
    %v483 = vand.u32 %v482, 4294901760
    %v484 = vsub.f32 %v482, %v483
    %v485 = vand.u32 %v484, 4294901760
    %486 = vmatmul.f32.gmra.mxu0 %v485
    %v487 = vpop.f32.mrf.mxu0
    %v488 = vadd.f32 0.0, %v487
    %489 = vdwg.mxu0
    %490 = vmatpush.msra.mxu0 0.0
    %491 = vmatpush.msra.mxu0 0.0
    %492 = vmatpush.msra.mxu0 0.0
    %493 = vmatpush.msra.mxu0 0.0
    %494 = vmatpush.msra.mxu0 0.0
    %495 = vmatpush.msra.mxu0 0.0
    %496 = vmatpush.msra.mxu0 0.0
    %497 = vmatpush.msra.mxu0 0.0
    %498 = vmatpush.msra.mxu0 0.0
    %499 = vmatpush.msra.mxu0 0.0
    %500 = vmatpush.msra.mxu0 0.0
    %501 = vmatpush.msra.mxu0 0.0
    %502 = vmatpush.msra.mxu0 0.0
    %503 = vmatpush.msra.mxu0 0.0
    %v504 = vand.u32 %v446, 4294901760
    %v505 = vsub.f32 %v446, %v504
    %v506 = vand.u32 %v505, 4294901760
    %v507 = vsub.f32 %v505, %v506
    %v508 = vand.u32 %v507, 4294901760
    %509 = vmatpush.msra.mxu0 %v508
    %v510 = vand.u32 %v445, 4294901760
    %v511 = vsub.f32 %v445, %v510
    %v512 = vand.u32 %v511, 4294901760
    %v513 = vsub.f32 %v511, %v512
    %v514 = vand.u32 %v513, 4294901760
    %515 = vmatpush.msra.mxu0 %v514
    %v516 = vand.u32 %v450, 4294901760
    %517 = vmatmul.f32.gmra.mxu0 %v516
    %v518 = vpop.f32.mrf.mxu0
    %v519 = vadd.f32 %v480, %v518
    %v520 = vand.u32 %v453, 4294901760
    %521 = vmatmul.f32.gmra.mxu0 %v520
    %v522 = vpop.f32.mrf.mxu0
    %v523 = vadd.f32 %v488, %v522
    %524 = vdwg.mxu0
    %525 = vmatpush.msra.mxu0 0.0
    %526 = vmatpush.msra.mxu0 0.0
    %527 = vmatpush.msra.mxu0 0.0
    %528 = vmatpush.msra.mxu0 0.0
    %529 = vmatpush.msra.mxu0 0.0
    %530 = vmatpush.msra.mxu0 0.0
    %531 = vmatpush.msra.mxu0 0.0
    %532 = vmatpush.msra.mxu0 0.0
    %533 = vmatpush.msra.mxu0 0.0
    %534 = vmatpush.msra.mxu0 0.0
    %535 = vmatpush.msra.mxu0 0.0
    %536 = vmatpush.msra.mxu0 0.0
    %537 = vmatpush.msra.mxu0 0.0
    %538 = vmatpush.msra.mxu0 0.0
    %v539 = vand.u32 %v446, 4294901760
    %v540 = vsub.f32 %v446, %v539
    %541 = vmatpush.msra.mxu0 %v540
    %v542 = vand.u32 %v445, 4294901760
    %v543 = vsub.f32 %v445, %v542
    %544 = vmatpush.msra.mxu0 %v543
    %v545 = vand.u32 %v450, 4294901760
    %v546 = vsub.f32 %v450, %v545
    %547 = vmatmul.f32.gmra.mxu0 %v546
    %v548 = vpop.f32.mrf.mxu0
    %v549 = vadd.f32 %v519, %v548
    %v550 = vand.u32 %v453, 4294901760
    %v551 = vsub.f32 %v453, %v550
    %552 = vmatmul.f32.gmra.mxu0 %v551
    %v553 = vpop.f32.mrf.mxu0
    %v554 = vadd.f32 %v523, %v553
    %555 = vdwg.mxu0
    %556 = vmatpush.msra.mxu0 0.0
    %557 = vmatpush.msra.mxu0 0.0
    %558 = vmatpush.msra.mxu0 0.0
    %559 = vmatpush.msra.mxu0 0.0
    %560 = vmatpush.msra.mxu0 0.0
    %561 = vmatpush.msra.mxu0 0.0
    %562 = vmatpush.msra.mxu0 0.0
    %563 = vmatpush.msra.mxu0 0.0
    %564 = vmatpush.msra.mxu0 0.0
    %565 = vmatpush.msra.mxu0 0.0
    %566 = vmatpush.msra.mxu0 0.0
    %567 = vmatpush.msra.mxu0 0.0
    %568 = vmatpush.msra.mxu0 0.0
    %569 = vmatpush.msra.mxu0 0.0
    %v570 = vand.u32 %v446, 4294901760
    %571 = vmatpush.msra.mxu0 %v570
    %v572 = vand.u32 %v445, 4294901760
    %573 = vmatpush.msra.mxu0 %v572
    %v574 = vand.u32 %v450, 4294901760
    %v575 = vsub.f32 %v450, %v574
    %v576 = vand.u32 %v575, 4294901760
    %577 = vmatmul.f32.gmra.mxu0 %v576
    %v578 = vpop.f32.mrf.mxu0
    %v579 = vadd.f32 %v549, %v578
    %v580 = vand.u32 %v453, 4294901760
    %v581 = vsub.f32 %v453, %v580
    %v582 = vand.u32 %v581, 4294901760
    %583 = vmatmul.f32.gmra.mxu0 %v582
    %v584 = vpop.f32.mrf.mxu0
    %v585 = vadd.f32 %v554, %v584
    %586 = vdwg.mxu0
    %587 = vmatpush.msra.mxu0 0.0
    %588 = vmatpush.msra.mxu0 0.0
    %589 = vmatpush.msra.mxu0 0.0
    %590 = vmatpush.msra.mxu0 0.0
    %591 = vmatpush.msra.mxu0 0.0
    %592 = vmatpush.msra.mxu0 0.0
    %593 = vmatpush.msra.mxu0 0.0
    %594 = vmatpush.msra.mxu0 0.0
    %595 = vmatpush.msra.mxu0 0.0
    %596 = vmatpush.msra.mxu0 0.0
    %597 = vmatpush.msra.mxu0 0.0
    %598 = vmatpush.msra.mxu0 0.0
    %599 = vmatpush.msra.mxu0 0.0
    %600 = vmatpush.msra.mxu0 0.0
    %v601 = vand.u32 %v446, 4294901760
    %v602 = vsub.f32 %v446, %v601
    %v603 = vand.u32 %v602, 4294901760
    %604 = vmatpush.msra.mxu0 %v603
    %v605 = vand.u32 %v445, 4294901760
    %v606 = vsub.f32 %v445, %v605
    %v607 = vand.u32 %v606, 4294901760
    %608 = vmatpush.msra.mxu0 %v607
    %v609 = vand.u32 %v450, 4294901760
    %610 = vmatmul.f32.gmra.mxu0 %v609
    %v611 = vpop.f32.mrf.mxu0
    %v612 = vadd.f32 %v579, %v611
    %v613 = vand.u32 %v453, 4294901760
    %614 = vmatmul.f32.gmra.mxu0 %v613
    %v615 = vpop.f32.mrf.mxu0
    %v616 = vadd.f32 %v585, %v615
    %617 = vdwg.mxu0
    %618 = vmatpush.msra.mxu0 0.0
    %619 = vmatpush.msra.mxu0 0.0
    %620 = vmatpush.msra.mxu0 0.0
    %621 = vmatpush.msra.mxu0 0.0
    %622 = vmatpush.msra.mxu0 0.0
    %623 = vmatpush.msra.mxu0 0.0
    %624 = vmatpush.msra.mxu0 0.0
    %625 = vmatpush.msra.mxu0 0.0
    %626 = vmatpush.msra.mxu0 0.0
    %627 = vmatpush.msra.mxu0 0.0
    %628 = vmatpush.msra.mxu0 0.0
    %629 = vmatpush.msra.mxu0 0.0
    %630 = vmatpush.msra.mxu0 0.0
    %631 = vmatpush.msra.mxu0 0.0
    %v632 = vand.u32 %v446, 4294901760
    %633 = vmatpush.msra.mxu0 %v632
    %v634 = vand.u32 %v445, 4294901760
    %635 = vmatpush.msra.mxu0 %v634
    %v636 = vand.u32 %v450, 4294901760
    %637 = vmatmul.f32.gmra.mxu0 %v636
    %v638 = vpop.f32.mrf.mxu0
    %v639 = vadd.f32 %v612, %v638
    %v640 = vand.u32 %v453, 4294901760
    %641 = vmatmul.f32.gmra.mxu0 %v640
    %v642 = vpop.f32.mrf.mxu0
    %v643 = vadd.f32 %v616, %v642
    %644 = vdwg.mxu0
    %v646 = vsel %vm448, %v45, 0
    %v649 = vsel %vm448, %v46, 0
    %651 = vmatpush.msra.mxu0 0.0
    %652 = vmatpush.msra.mxu0 0.0
    %653 = vmatpush.msra.mxu0 0.0
    %654 = vmatpush.msra.mxu0 0.0
    %655 = vmatpush.msra.mxu0 0.0
    %656 = vmatpush.msra.mxu0 0.0
    %657 = vmatpush.msra.mxu0 0.0
    %658 = vmatpush.msra.mxu0 0.0
    %659 = vmatpush.msra.mxu0 0.0
    %660 = vmatpush.msra.mxu0 0.0
    %661 = vmatpush.msra.mxu0 0.0
    %662 = vmatpush.msra.mxu0 0.0
    %663 = vmatpush.msra.mxu0 0.0
    %664 = vmatpush.msra.mxu0 0.0
    %v665 = vand.u32 %v443, 4294901760
    %666 = vmatpush.msra.mxu0 %v665
    %v667 = vand.u32 %v439, 4294901760
    %668 = vmatpush.msra.mxu0 %v667
    %v669 = vand.u32 %v646, 4294901760
    %v670 = vsub.f32 %v646, %v669
    %v671 = vand.u32 %v670, 4294901760
    %v672 = vsub.f32 %v670, %v671
    %v673 = vand.u32 %v672, 4294901760
    %674 = vmatmul.f32.gmra.mxu0 %v673
    %v675 = vpop.f32.mrf.mxu0
    %v676 = vadd.f32 %v639, %v675
    %v677 = vand.u32 %v649, 4294901760
    %v678 = vsub.f32 %v649, %v677
    %v679 = vand.u32 %v678, 4294901760
    %v680 = vsub.f32 %v678, %v679
    %v681 = vand.u32 %v680, 4294901760
    %682 = vmatmul.f32.gmra.mxu0 %v681
    %v683 = vpop.f32.mrf.mxu0
    %v684 = vadd.f32 %v643, %v683
    %685 = vdwg.mxu0
    %686 = vmatpush.msra.mxu0 0.0
    %687 = vmatpush.msra.mxu0 0.0
    %688 = vmatpush.msra.mxu0 0.0
    %689 = vmatpush.msra.mxu0 0.0
    %690 = vmatpush.msra.mxu0 0.0
    %691 = vmatpush.msra.mxu0 0.0
    %692 = vmatpush.msra.mxu0 0.0
    %693 = vmatpush.msra.mxu0 0.0
    %694 = vmatpush.msra.mxu0 0.0
    %695 = vmatpush.msra.mxu0 0.0
    %696 = vmatpush.msra.mxu0 0.0
    %697 = vmatpush.msra.mxu0 0.0
    %698 = vmatpush.msra.mxu0 0.0
    %699 = vmatpush.msra.mxu0 0.0
    %v700 = vand.u32 %v443, 4294901760
    %v701 = vsub.f32 %v443, %v700
    %v702 = vand.u32 %v701, 4294901760
    %v703 = vsub.f32 %v701, %v702
    %v704 = vand.u32 %v703, 4294901760
    %705 = vmatpush.msra.mxu0 %v704
    %v706 = vand.u32 %v439, 4294901760
    %v707 = vsub.f32 %v439, %v706
    %v708 = vand.u32 %v707, 4294901760
    %v709 = vsub.f32 %v707, %v708
    %v710 = vand.u32 %v709, 4294901760
    %711 = vmatpush.msra.mxu0 %v710
    %v712 = vand.u32 %v646, 4294901760
    %713 = vmatmul.f32.gmra.mxu0 %v712
    %v714 = vpop.f32.mrf.mxu0
    %v715 = vadd.f32 %v676, %v714
    %v716 = vand.u32 %v649, 4294901760
    %717 = vmatmul.f32.gmra.mxu0 %v716
    %v718 = vpop.f32.mrf.mxu0
    %v719 = vadd.f32 %v684, %v718
    %720 = vdwg.mxu0
    %721 = vmatpush.msra.mxu0 0.0
    %722 = vmatpush.msra.mxu0 0.0
    %723 = vmatpush.msra.mxu0 0.0
    %724 = vmatpush.msra.mxu0 0.0
    %725 = vmatpush.msra.mxu0 0.0
    %726 = vmatpush.msra.mxu0 0.0
    %727 = vmatpush.msra.mxu0 0.0
    %728 = vmatpush.msra.mxu0 0.0
    %729 = vmatpush.msra.mxu0 0.0
    %730 = vmatpush.msra.mxu0 0.0
    %731 = vmatpush.msra.mxu0 0.0
    %732 = vmatpush.msra.mxu0 0.0
    %733 = vmatpush.msra.mxu0 0.0
    %734 = vmatpush.msra.mxu0 0.0
    %v735 = vand.u32 %v443, 4294901760
    %v736 = vsub.f32 %v443, %v735
    %737 = vmatpush.msra.mxu0 %v736
    %v738 = vand.u32 %v439, 4294901760
    %v739 = vsub.f32 %v439, %v738
    %740 = vmatpush.msra.mxu0 %v739
    %v741 = vand.u32 %v646, 4294901760
    %v742 = vsub.f32 %v646, %v741
    %743 = vmatmul.f32.gmra.mxu0 %v742
    %v744 = vpop.f32.mrf.mxu0
    %v745 = vadd.f32 %v715, %v744
    %v746 = vand.u32 %v649, 4294901760
    %v747 = vsub.f32 %v649, %v746
    %748 = vmatmul.f32.gmra.mxu0 %v747
    %v749 = vpop.f32.mrf.mxu0
    %v750 = vadd.f32 %v719, %v749
    %751 = vdwg.mxu0
    %752 = vmatpush.msra.mxu0 0.0
    %753 = vmatpush.msra.mxu0 0.0
    %754 = vmatpush.msra.mxu0 0.0
    %755 = vmatpush.msra.mxu0 0.0
    %756 = vmatpush.msra.mxu0 0.0
    %757 = vmatpush.msra.mxu0 0.0
    %758 = vmatpush.msra.mxu0 0.0
    %759 = vmatpush.msra.mxu0 0.0
    %760 = vmatpush.msra.mxu0 0.0
    %761 = vmatpush.msra.mxu0 0.0
    %762 = vmatpush.msra.mxu0 0.0
    %763 = vmatpush.msra.mxu0 0.0
    %764 = vmatpush.msra.mxu0 0.0
    %765 = vmatpush.msra.mxu0 0.0
    %v766 = vand.u32 %v443, 4294901760
    %767 = vmatpush.msra.mxu0 %v766
    %v768 = vand.u32 %v439, 4294901760
    %769 = vmatpush.msra.mxu0 %v768
    %v770 = vand.u32 %v646, 4294901760
    %v771 = vsub.f32 %v646, %v770
    %v772 = vand.u32 %v771, 4294901760
    %773 = vmatmul.f32.gmra.mxu0 %v772
    %v774 = vpop.f32.mrf.mxu0
    %v775 = vadd.f32 %v745, %v774
    %v776 = vand.u32 %v649, 4294901760
    %v777 = vsub.f32 %v649, %v776
    %v778 = vand.u32 %v777, 4294901760
    %779 = vmatmul.f32.gmra.mxu0 %v778
    %v780 = vpop.f32.mrf.mxu0
    %v781 = vadd.f32 %v750, %v780
    %782 = vdwg.mxu0
    %783 = vmatpush.msra.mxu0 0.0
    %784 = vmatpush.msra.mxu0 0.0
    %785 = vmatpush.msra.mxu0 0.0
    %786 = vmatpush.msra.mxu0 0.0
    %787 = vmatpush.msra.mxu0 0.0
    %788 = vmatpush.msra.mxu0 0.0
    %789 = vmatpush.msra.mxu0 0.0
    %790 = vmatpush.msra.mxu0 0.0
    %791 = vmatpush.msra.mxu0 0.0
    %792 = vmatpush.msra.mxu0 0.0
    %793 = vmatpush.msra.mxu0 0.0
    %794 = vmatpush.msra.mxu0 0.0
    %795 = vmatpush.msra.mxu0 0.0
    %796 = vmatpush.msra.mxu0 0.0
    %v797 = vand.u32 %v443, 4294901760
    %v798 = vsub.f32 %v443, %v797
    %v799 = vand.u32 %v798, 4294901760
    %800 = vmatpush.msra.mxu0 %v799
    %v801 = vand.u32 %v439, 4294901760
    %v802 = vsub.f32 %v439, %v801
    %v803 = vand.u32 %v802, 4294901760
    %804 = vmatpush.msra.mxu0 %v803
    %v805 = vand.u32 %v646, 4294901760
    %806 = vmatmul.f32.gmra.mxu0 %v805
    %v807 = vpop.f32.mrf.mxu0
    %v808 = vadd.f32 %v775, %v807
    %v809 = vand.u32 %v649, 4294901760
    %810 = vmatmul.f32.gmra.mxu0 %v809
    %v811 = vpop.f32.mrf.mxu0
    %v812 = vadd.f32 %v781, %v811
    %813 = vdwg.mxu0
    %814 = vmatpush.msra.mxu0 0.0
    %815 = vmatpush.msra.mxu0 0.0
    %816 = vmatpush.msra.mxu0 0.0
    %817 = vmatpush.msra.mxu0 0.0
    %818 = vmatpush.msra.mxu0 0.0
    %819 = vmatpush.msra.mxu0 0.0
    %820 = vmatpush.msra.mxu0 0.0
    %821 = vmatpush.msra.mxu0 0.0
    %822 = vmatpush.msra.mxu0 0.0
    %823 = vmatpush.msra.mxu0 0.0
    %824 = vmatpush.msra.mxu0 0.0
    %825 = vmatpush.msra.mxu0 0.0
    %826 = vmatpush.msra.mxu0 0.0
    %827 = vmatpush.msra.mxu0 0.0
    %v828 = vand.u32 %v443, 4294901760
    %829 = vmatpush.msra.mxu0 %v828
    %v830 = vand.u32 %v439, 4294901760
    %831 = vmatpush.msra.mxu0 %v830
    %v832 = vand.u32 %v646, 4294901760
    %833 = vmatmul.f32.gmra.mxu0 %v832
    %v834 = vpop.f32.mrf.mxu0
    %v835 = vadd.f32 %v808, %v834
    %v836 = vand.u32 %v649, 4294901760
    %837 = vmatmul.f32.gmra.mxu0 %v836
    %v838 = vpop.f32.mrf.mxu0
    %v839 = vadd.f32 %v812, %v838
    %840 = vdwg.mxu0
    %v842 = vperm.slane %v447, 0
    %v844 = vadd.f32 %v835, %v842
    %v845 = vadd.f32 %v839, %v842
    %v847 = vsel %vm448, %v49, 0
    %v850 = vsel %vm448, %v50, 0
    %852 = vmatpush.msra.mxu0 0.0
    %853 = vmatpush.msra.mxu0 0.0
    %854 = vmatpush.msra.mxu0 0.0
    %855 = vmatpush.msra.mxu0 0.0
    %856 = vmatpush.msra.mxu0 0.0
    %857 = vmatpush.msra.mxu0 0.0
    %858 = vmatpush.msra.mxu0 0.0
    %859 = vmatpush.msra.mxu0 0.0
    %860 = vmatpush.msra.mxu0 0.0
    %861 = vmatpush.msra.mxu0 0.0
    %862 = vmatpush.msra.mxu0 0.0
    %863 = vmatpush.msra.mxu0 0.0
    %864 = vmatpush.msra.mxu0 0.0
    %865 = vmatpush.msra.mxu0 0.0
    %v866 = vand.u32 %v446, 4294901760
    %867 = vmatpush.msra.mxu0 %v866
    %v868 = vand.u32 %v445, 4294901760
    %869 = vmatpush.msra.mxu0 %v868
    %v870 = vand.u32 %v847, 4294901760
    %v871 = vsub.f32 %v847, %v870
    %v872 = vand.u32 %v871, 4294901760
    %v873 = vsub.f32 %v871, %v872
    %v874 = vand.u32 %v873, 4294901760
    %875 = vmatmul.f32.gmra.mxu0 %v874
    %v876 = vpop.f32.mrf.mxu0
    %v877 = vadd.f32 %v842, %v876
    %v878 = vand.u32 %v850, 4294901760
    %v879 = vsub.f32 %v850, %v878
    %v880 = vand.u32 %v879, 4294901760
    %v881 = vsub.f32 %v879, %v880
    %v882 = vand.u32 %v881, 4294901760
    %883 = vmatmul.f32.gmra.mxu0 %v882
    %v884 = vpop.f32.mrf.mxu0
    %v885 = vadd.f32 %v842, %v884
    %886 = vdwg.mxu0
    %887 = vmatpush.msra.mxu0 0.0
    %888 = vmatpush.msra.mxu0 0.0
    %889 = vmatpush.msra.mxu0 0.0
    %890 = vmatpush.msra.mxu0 0.0
    %891 = vmatpush.msra.mxu0 0.0
    %892 = vmatpush.msra.mxu0 0.0
    %893 = vmatpush.msra.mxu0 0.0
    %894 = vmatpush.msra.mxu0 0.0
    %895 = vmatpush.msra.mxu0 0.0
    %896 = vmatpush.msra.mxu0 0.0
    %897 = vmatpush.msra.mxu0 0.0
    %898 = vmatpush.msra.mxu0 0.0
    %899 = vmatpush.msra.mxu0 0.0
    %900 = vmatpush.msra.mxu0 0.0
    %v901 = vand.u32 %v446, 4294901760
    %v902 = vsub.f32 %v446, %v901
    %v903 = vand.u32 %v902, 4294901760
    %v904 = vsub.f32 %v902, %v903
    %v905 = vand.u32 %v904, 4294901760
    %906 = vmatpush.msra.mxu0 %v905
    %v907 = vand.u32 %v445, 4294901760
    %v908 = vsub.f32 %v445, %v907
    %v909 = vand.u32 %v908, 4294901760
    %v910 = vsub.f32 %v908, %v909
    %v911 = vand.u32 %v910, 4294901760
    %912 = vmatpush.msra.mxu0 %v911
    %v913 = vand.u32 %v847, 4294901760
    %914 = vmatmul.f32.gmra.mxu0 %v913
    %v915 = vpop.f32.mrf.mxu0
    %v916 = vadd.f32 %v877, %v915
    %v917 = vand.u32 %v850, 4294901760
    %918 = vmatmul.f32.gmra.mxu0 %v917
    %v919 = vpop.f32.mrf.mxu0
    %v920 = vadd.f32 %v885, %v919
    %921 = vdwg.mxu0
    %922 = vmatpush.msra.mxu0 0.0
    %923 = vmatpush.msra.mxu0 0.0
    %924 = vmatpush.msra.mxu0 0.0
    %925 = vmatpush.msra.mxu0 0.0
    %926 = vmatpush.msra.mxu0 0.0
    %927 = vmatpush.msra.mxu0 0.0
    %928 = vmatpush.msra.mxu0 0.0
    %929 = vmatpush.msra.mxu0 0.0
    %930 = vmatpush.msra.mxu0 0.0
    %931 = vmatpush.msra.mxu0 0.0
    %932 = vmatpush.msra.mxu0 0.0
    %933 = vmatpush.msra.mxu0 0.0
    %934 = vmatpush.msra.mxu0 0.0
    %935 = vmatpush.msra.mxu0 0.0
    %v936 = vand.u32 %v446, 4294901760
    %v937 = vsub.f32 %v446, %v936
    %938 = vmatpush.msra.mxu0 %v937
    %v939 = vand.u32 %v445, 4294901760
    %v940 = vsub.f32 %v445, %v939
    %941 = vmatpush.msra.mxu0 %v940
    %v942 = vand.u32 %v847, 4294901760
    %v943 = vsub.f32 %v847, %v942
    %944 = vmatmul.f32.gmra.mxu0 %v943
    %v945 = vpop.f32.mrf.mxu0
    %v946 = vadd.f32 %v916, %v945
    %v947 = vand.u32 %v850, 4294901760
    %v948 = vsub.f32 %v850, %v947
    %949 = vmatmul.f32.gmra.mxu0 %v948
    %v950 = vpop.f32.mrf.mxu0
    %v951 = vadd.f32 %v920, %v950
    %952 = vdwg.mxu0
    %953 = vmatpush.msra.mxu0 0.0
    %954 = vmatpush.msra.mxu0 0.0
    %955 = vmatpush.msra.mxu0 0.0
    %956 = vmatpush.msra.mxu0 0.0
    %957 = vmatpush.msra.mxu0 0.0
    %958 = vmatpush.msra.mxu0 0.0
    %959 = vmatpush.msra.mxu0 0.0
    %960 = vmatpush.msra.mxu0 0.0
    %961 = vmatpush.msra.mxu0 0.0
    %962 = vmatpush.msra.mxu0 0.0
    %963 = vmatpush.msra.mxu0 0.0
    %964 = vmatpush.msra.mxu0 0.0
    %965 = vmatpush.msra.mxu0 0.0
    %966 = vmatpush.msra.mxu0 0.0
    %v967 = vand.u32 %v446, 4294901760
    %968 = vmatpush.msra.mxu0 %v967
    %v969 = vand.u32 %v445, 4294901760
    %970 = vmatpush.msra.mxu0 %v969
    %v971 = vand.u32 %v847, 4294901760
    %v972 = vsub.f32 %v847, %v971
    %v973 = vand.u32 %v972, 4294901760
    %974 = vmatmul.f32.gmra.mxu0 %v973
    %v975 = vpop.f32.mrf.mxu0
    %v976 = vadd.f32 %v946, %v975
    %v977 = vand.u32 %v850, 4294901760
    %v978 = vsub.f32 %v850, %v977
    %v979 = vand.u32 %v978, 4294901760
    %980 = vmatmul.f32.gmra.mxu0 %v979
    %v981 = vpop.f32.mrf.mxu0
    %v982 = vadd.f32 %v951, %v981
    %983 = vdwg.mxu0
    %984 = vmatpush.msra.mxu0 0.0
    %985 = vmatpush.msra.mxu0 0.0
    %986 = vmatpush.msra.mxu0 0.0
    %987 = vmatpush.msra.mxu0 0.0
    %988 = vmatpush.msra.mxu0 0.0
    %989 = vmatpush.msra.mxu0 0.0
    %990 = vmatpush.msra.mxu0 0.0
    %991 = vmatpush.msra.mxu0 0.0
    %992 = vmatpush.msra.mxu0 0.0
    %993 = vmatpush.msra.mxu0 0.0
    %994 = vmatpush.msra.mxu0 0.0
    %995 = vmatpush.msra.mxu0 0.0
    %996 = vmatpush.msra.mxu0 0.0
    %997 = vmatpush.msra.mxu0 0.0
    %v998 = vand.u32 %v446, 4294901760
    %v999 = vsub.f32 %v446, %v998
    %v1000 = vand.u32 %v999, 4294901760
    %1001 = vmatpush.msra.mxu0 %v1000
    %v1002 = vand.u32 %v445, 4294901760
    %v1003 = vsub.f32 %v445, %v1002
    %v1004 = vand.u32 %v1003, 4294901760
    %1005 = vmatpush.msra.mxu0 %v1004
    %v1006 = vand.u32 %v847, 4294901760
    %1007 = vmatmul.f32.gmra.mxu0 %v1006
    %v1008 = vpop.f32.mrf.mxu0
    %v1009 = vadd.f32 %v976, %v1008
    %v1010 = vand.u32 %v850, 4294901760
    %1011 = vmatmul.f32.gmra.mxu0 %v1010
    %v1012 = vpop.f32.mrf.mxu0
    %v1013 = vadd.f32 %v982, %v1012
    %1014 = vdwg.mxu0
    %1015 = vmatpush.msra.mxu0 0.0
    %1016 = vmatpush.msra.mxu0 0.0
    %1017 = vmatpush.msra.mxu0 0.0
    %1018 = vmatpush.msra.mxu0 0.0
    %1019 = vmatpush.msra.mxu0 0.0
    %1020 = vmatpush.msra.mxu0 0.0
    %1021 = vmatpush.msra.mxu0 0.0
    %1022 = vmatpush.msra.mxu0 0.0
    %1023 = vmatpush.msra.mxu0 0.0
    %1024 = vmatpush.msra.mxu0 0.0
    %1025 = vmatpush.msra.mxu0 0.0
    %1026 = vmatpush.msra.mxu0 0.0
    %1027 = vmatpush.msra.mxu0 0.0
    %1028 = vmatpush.msra.mxu0 0.0
    %v1029 = vand.u32 %v446, 4294901760
    %1030 = vmatpush.msra.mxu0 %v1029
    %v1031 = vand.u32 %v445, 4294901760
    %1032 = vmatpush.msra.mxu0 %v1031
    %v1033 = vand.u32 %v847, 4294901760
    %1034 = vmatmul.f32.gmra.mxu0 %v1033
    %v1035 = vpop.f32.mrf.mxu0
    %v1036 = vadd.f32 %v1009, %v1035
    %v1037 = vand.u32 %v850, 4294901760
    %1038 = vmatmul.f32.gmra.mxu0 %v1037
    %v1039 = vpop.f32.mrf.mxu0
    %v1040 = vadd.f32 %v1013, %v1039
    %1041 = vdwg.mxu0
    %v1042 = vmax.f32 %v844, 0.0
    %v1043 = vmax.f32 %v845, 0.0
    %v1044 = vmax.f32 %v1036, 0.0
    %v1045 = vmax.f32 %v1040, 0.0
    %v1046 = vld [vmem:[%s9] sm:$0x1]
    %v1047 = vld [vmem:[%s8] sm:$0xff]
    %v1048 = vld [vmem:[%s8 + $0x8] sm:$0xff]
    %v1049 = vld [vmem:[%s8 + $0x10] sm:$0xff]
    %v1050 = vld [vmem:[%s8 + $0x18] sm:$0xff]
    %v1051 = vld [vmem:[%s8 + $0x20] sm:$0xff]
    %v1052 = vld [vmem:[%s8 + $0x28] sm:$0xff]
    %v1053 = vld [vmem:[%s8 + $0x30] sm:$0xff]
    %v1054 = vld [vmem:[%s8 + $0x38] sm:$0xff]
    %v1055 = vld [vmem:[%s8 + $0x40] sm:$0xff]
    %v1056 = vld [vmem:[%s8 + $0x48] sm:$0xff]
    %v1057 = vld [vmem:[%s8 + $0x50] sm:$0xff]
    %v1058 = vld [vmem:[%s8 + $0x58] sm:$0xff]
    %v1059 = vld [vmem:[%s8 + $0x60] sm:$0xff]
    %v1060 = vld [vmem:[%s8 + $0x68] sm:$0xff]
    %v1061 = vld [vmem:[%s8 + $0x70] sm:$0xff]
    %v1062 = vld [vmem:[%s8 + $0x78] sm:$0xff]
    %v1063 = vand.u32 %v1062, 4294901760
    %1064 = vmatpush.msra.mxu0 %v1063
    %v1065 = vand.u32 %v1061, 4294901760
    %1066 = vmatpush.msra.mxu0 %v1065
    %v1067 = vand.u32 %v1060, 4294901760
    %1068 = vmatpush.msra.mxu0 %v1067
    %v1069 = vand.u32 %v1059, 4294901760
    %1070 = vmatpush.msra.mxu0 %v1069
    %v1071 = vand.u32 %v1058, 4294901760
    %1072 = vmatpush.msra.mxu0 %v1071
    %v1073 = vand.u32 %v1057, 4294901760
    %1074 = vmatpush.msra.mxu0 %v1073
    %v1075 = vand.u32 %v1056, 4294901760
    %1076 = vmatpush.msra.mxu0 %v1075
    %v1077 = vand.u32 %v1055, 4294901760
    %1078 = vmatpush.msra.mxu0 %v1077
    %v1079 = vand.u32 %v1054, 4294901760
    %1080 = vmatpush.msra.mxu0 %v1079
    %v1081 = vand.u32 %v1053, 4294901760
    %1082 = vmatpush.msra.mxu0 %v1081
    %v1083 = vand.u32 %v1052, 4294901760
    %1084 = vmatpush.msra.mxu0 %v1083
    %v1085 = vand.u32 %v1051, 4294901760
    %1086 = vmatpush.msra.mxu0 %v1085
    %v1087 = vand.u32 %v1050, 4294901760
    %1088 = vmatpush.msra.mxu0 %v1087
    %v1089 = vand.u32 %v1049, 4294901760
    %1090 = vmatpush.msra.mxu0 %v1089
    %v1091 = vand.u32 %v1048, 4294901760
    %1092 = vmatpush.msra.mxu0 %v1091
    %v1093 = vand.u32 %v1047, 4294901760
    %1094 = vmatpush.msra.mxu0 %v1093
    %v1095 = vand.u32 %v1044, 4294901760
    %v1096 = vsub.f32 %v1044, %v1095
    %v1097 = vand.u32 %v1096, 4294901760
    %v1098 = vsub.f32 %v1096, %v1097
    %v1099 = vand.u32 %v1098, 4294901760
    %1100 = vmatmul.f32.gmra.mxu0 %v1099
    %v1101 = vpop.f32.mrf.mxu0
    %v1102 = vadd.f32 0.0, %v1101
    %v1103 = vand.u32 %v1045, 4294901760
    %v1104 = vsub.f32 %v1045, %v1103
    %v1105 = vand.u32 %v1104, 4294901760
    %v1106 = vsub.f32 %v1104, %v1105
    %v1107 = vand.u32 %v1106, 4294901760
    %1108 = vmatmul.f32.gmra.mxu0 %v1107
    %v1109 = vpop.f32.mrf.mxu0
    %v1110 = vadd.f32 0.0, %v1109
    %1111 = vdwg.mxu0
    %v1112 = vand.u32 %v1062, 4294901760
    %v1113 = vsub.f32 %v1062, %v1112
    %v1114 = vand.u32 %v1113, 4294901760
    %v1115 = vsub.f32 %v1113, %v1114
    %v1116 = vand.u32 %v1115, 4294901760
    %1117 = vmatpush.msra.mxu0 %v1116
    %v1118 = vand.u32 %v1061, 4294901760
    %v1119 = vsub.f32 %v1061, %v1118
    %v1120 = vand.u32 %v1119, 4294901760
    %v1121 = vsub.f32 %v1119, %v1120
    %v1122 = vand.u32 %v1121, 4294901760
    %1123 = vmatpush.msra.mxu0 %v1122
    %v1124 = vand.u32 %v1060, 4294901760
    %v1125 = vsub.f32 %v1060, %v1124
    %v1126 = vand.u32 %v1125, 4294901760
    %v1127 = vsub.f32 %v1125, %v1126
    %v1128 = vand.u32 %v1127, 4294901760
    %1129 = vmatpush.msra.mxu0 %v1128
    %v1130 = vand.u32 %v1059, 4294901760
    %v1131 = vsub.f32 %v1059, %v1130
    %v1132 = vand.u32 %v1131, 4294901760
    %v1133 = vsub.f32 %v1131, %v1132
    %v1134 = vand.u32 %v1133, 4294901760
    %1135 = vmatpush.msra.mxu0 %v1134
    %v1136 = vand.u32 %v1058, 4294901760
    %v1137 = vsub.f32 %v1058, %v1136
    %v1138 = vand.u32 %v1137, 4294901760
    %v1139 = vsub.f32 %v1137, %v1138
    %v1140 = vand.u32 %v1139, 4294901760
    %1141 = vmatpush.msra.mxu0 %v1140
    %v1142 = vand.u32 %v1057, 4294901760
    %v1143 = vsub.f32 %v1057, %v1142
    %v1144 = vand.u32 %v1143, 4294901760
    %v1145 = vsub.f32 %v1143, %v1144
    %v1146 = vand.u32 %v1145, 4294901760
    %1147 = vmatpush.msra.mxu0 %v1146
    %v1148 = vand.u32 %v1056, 4294901760
    %v1149 = vsub.f32 %v1056, %v1148
    %v1150 = vand.u32 %v1149, 4294901760
    %v1151 = vsub.f32 %v1149, %v1150
    %v1152 = vand.u32 %v1151, 4294901760
    %1153 = vmatpush.msra.mxu0 %v1152
    %v1154 = vand.u32 %v1055, 4294901760
    %v1155 = vsub.f32 %v1055, %v1154
    %v1156 = vand.u32 %v1155, 4294901760
    %v1157 = vsub.f32 %v1155, %v1156
    %v1158 = vand.u32 %v1157, 4294901760
    %1159 = vmatpush.msra.mxu0 %v1158
    %v1160 = vand.u32 %v1054, 4294901760
    %v1161 = vsub.f32 %v1054, %v1160
    %v1162 = vand.u32 %v1161, 4294901760
    %v1163 = vsub.f32 %v1161, %v1162
    %v1164 = vand.u32 %v1163, 4294901760
    %1165 = vmatpush.msra.mxu0 %v1164
    %v1166 = vand.u32 %v1053, 4294901760
    %v1167 = vsub.f32 %v1053, %v1166
    %v1168 = vand.u32 %v1167, 4294901760
    %v1169 = vsub.f32 %v1167, %v1168
    %v1170 = vand.u32 %v1169, 4294901760
    %1171 = vmatpush.msra.mxu0 %v1170
    %v1172 = vand.u32 %v1052, 4294901760
    %v1173 = vsub.f32 %v1052, %v1172
    %v1174 = vand.u32 %v1173, 4294901760
    %v1175 = vsub.f32 %v1173, %v1174
    %v1176 = vand.u32 %v1175, 4294901760
    %1177 = vmatpush.msra.mxu0 %v1176
    %v1178 = vand.u32 %v1051, 4294901760
    %v1179 = vsub.f32 %v1051, %v1178
    %v1180 = vand.u32 %v1179, 4294901760
    %v1181 = vsub.f32 %v1179, %v1180
    %v1182 = vand.u32 %v1181, 4294901760
    %1183 = vmatpush.msra.mxu0 %v1182
    %v1184 = vand.u32 %v1050, 4294901760
    %v1185 = vsub.f32 %v1050, %v1184
    %v1186 = vand.u32 %v1185, 4294901760
    %v1187 = vsub.f32 %v1185, %v1186
    %v1188 = vand.u32 %v1187, 4294901760
    %1189 = vmatpush.msra.mxu0 %v1188
    %v1190 = vand.u32 %v1049, 4294901760
    %v1191 = vsub.f32 %v1049, %v1190
    %v1192 = vand.u32 %v1191, 4294901760
    %v1193 = vsub.f32 %v1191, %v1192
    %v1194 = vand.u32 %v1193, 4294901760
    %1195 = vmatpush.msra.mxu0 %v1194
    %v1196 = vand.u32 %v1048, 4294901760
    %v1197 = vsub.f32 %v1048, %v1196
    %v1198 = vand.u32 %v1197, 4294901760
    %v1199 = vsub.f32 %v1197, %v1198
    %v1200 = vand.u32 %v1199, 4294901760
    %1201 = vmatpush.msra.mxu0 %v1200
    %v1202 = vand.u32 %v1047, 4294901760
    %v1203 = vsub.f32 %v1047, %v1202
    %v1204 = vand.u32 %v1203, 4294901760
    %v1205 = vsub.f32 %v1203, %v1204
    %v1206 = vand.u32 %v1205, 4294901760
    %1207 = vmatpush.msra.mxu0 %v1206
    %v1208 = vand.u32 %v1044, 4294901760
    %1209 = vmatmul.f32.gmra.mxu0 %v1208
    %v1210 = vpop.f32.mrf.mxu0
    %v1211 = vadd.f32 %v1102, %v1210
    %v1212 = vand.u32 %v1045, 4294901760
    %1213 = vmatmul.f32.gmra.mxu0 %v1212
    %v1214 = vpop.f32.mrf.mxu0
    %v1215 = vadd.f32 %v1110, %v1214
    %1216 = vdwg.mxu0
    %v1217 = vand.u32 %v1062, 4294901760
    %v1218 = vsub.f32 %v1062, %v1217
    %1219 = vmatpush.msra.mxu0 %v1218
    %v1220 = vand.u32 %v1061, 4294901760
    %v1221 = vsub.f32 %v1061, %v1220
    %1222 = vmatpush.msra.mxu0 %v1221
    %v1223 = vand.u32 %v1060, 4294901760
    %v1224 = vsub.f32 %v1060, %v1223
    %1225 = vmatpush.msra.mxu0 %v1224
    %v1226 = vand.u32 %v1059, 4294901760
    %v1227 = vsub.f32 %v1059, %v1226
    %1228 = vmatpush.msra.mxu0 %v1227
    %v1229 = vand.u32 %v1058, 4294901760
    %v1230 = vsub.f32 %v1058, %v1229
    %1231 = vmatpush.msra.mxu0 %v1230
    %v1232 = vand.u32 %v1057, 4294901760
    %v1233 = vsub.f32 %v1057, %v1232
    %1234 = vmatpush.msra.mxu0 %v1233
    %v1235 = vand.u32 %v1056, 4294901760
    %v1236 = vsub.f32 %v1056, %v1235
    %1237 = vmatpush.msra.mxu0 %v1236
    %v1238 = vand.u32 %v1055, 4294901760
    %v1239 = vsub.f32 %v1055, %v1238
    %1240 = vmatpush.msra.mxu0 %v1239
    %v1241 = vand.u32 %v1054, 4294901760
    %v1242 = vsub.f32 %v1054, %v1241
    %1243 = vmatpush.msra.mxu0 %v1242
    %v1244 = vand.u32 %v1053, 4294901760
    %v1245 = vsub.f32 %v1053, %v1244
    %1246 = vmatpush.msra.mxu0 %v1245
    %v1247 = vand.u32 %v1052, 4294901760
    %v1248 = vsub.f32 %v1052, %v1247
    %1249 = vmatpush.msra.mxu0 %v1248
    %v1250 = vand.u32 %v1051, 4294901760
    %v1251 = vsub.f32 %v1051, %v1250
    %1252 = vmatpush.msra.mxu0 %v1251
    %v1253 = vand.u32 %v1050, 4294901760
    %v1254 = vsub.f32 %v1050, %v1253
    %1255 = vmatpush.msra.mxu0 %v1254
    %v1256 = vand.u32 %v1049, 4294901760
    %v1257 = vsub.f32 %v1049, %v1256
    %1258 = vmatpush.msra.mxu0 %v1257
    %v1259 = vand.u32 %v1048, 4294901760
    %v1260 = vsub.f32 %v1048, %v1259
    %1261 = vmatpush.msra.mxu0 %v1260
    %v1262 = vand.u32 %v1047, 4294901760
    %v1263 = vsub.f32 %v1047, %v1262
    %1264 = vmatpush.msra.mxu0 %v1263
    %v1265 = vand.u32 %v1044, 4294901760
    %v1266 = vsub.f32 %v1044, %v1265
    %1267 = vmatmul.f32.gmra.mxu0 %v1266
    %v1268 = vpop.f32.mrf.mxu0
    %v1269 = vadd.f32 %v1211, %v1268
    %v1270 = vand.u32 %v1045, 4294901760
    %v1271 = vsub.f32 %v1045, %v1270
    %1272 = vmatmul.f32.gmra.mxu0 %v1271
    %v1273 = vpop.f32.mrf.mxu0
    %v1274 = vadd.f32 %v1215, %v1273
    %1275 = vdwg.mxu0
    %v1276 = vand.u32 %v1062, 4294901760
    %1277 = vmatpush.msra.mxu0 %v1276
    %v1278 = vand.u32 %v1061, 4294901760
    %1279 = vmatpush.msra.mxu0 %v1278
    %v1280 = vand.u32 %v1060, 4294901760
    %1281 = vmatpush.msra.mxu0 %v1280
    %v1282 = vand.u32 %v1059, 4294901760
    %1283 = vmatpush.msra.mxu0 %v1282
    %v1284 = vand.u32 %v1058, 4294901760
    %1285 = vmatpush.msra.mxu0 %v1284
    %v1286 = vand.u32 %v1057, 4294901760
    %1287 = vmatpush.msra.mxu0 %v1286
    %v1288 = vand.u32 %v1056, 4294901760
    %1289 = vmatpush.msra.mxu0 %v1288
    %v1290 = vand.u32 %v1055, 4294901760
    %1291 = vmatpush.msra.mxu0 %v1290
    %v1292 = vand.u32 %v1054, 4294901760
    %1293 = vmatpush.msra.mxu0 %v1292
    %v1294 = vand.u32 %v1053, 4294901760
    %1295 = vmatpush.msra.mxu0 %v1294
    %v1296 = vand.u32 %v1052, 4294901760
    %1297 = vmatpush.msra.mxu0 %v1296
    %v1298 = vand.u32 %v1051, 4294901760
    %1299 = vmatpush.msra.mxu0 %v1298
    %v1300 = vand.u32 %v1050, 4294901760
    %1301 = vmatpush.msra.mxu0 %v1300
    %v1302 = vand.u32 %v1049, 4294901760
    %1303 = vmatpush.msra.mxu0 %v1302
    %v1304 = vand.u32 %v1048, 4294901760
    %1305 = vmatpush.msra.mxu0 %v1304
    %v1306 = vand.u32 %v1047, 4294901760
    %1307 = vmatpush.msra.mxu0 %v1306
    %v1308 = vand.u32 %v1044, 4294901760
    %v1309 = vsub.f32 %v1044, %v1308
    %v1310 = vand.u32 %v1309, 4294901760
    %1311 = vmatmul.f32.gmra.mxu0 %v1310
    %v1312 = vpop.f32.mrf.mxu0
    %v1313 = vadd.f32 %v1269, %v1312
    %v1314 = vand.u32 %v1045, 4294901760
    %v1315 = vsub.f32 %v1045, %v1314
    %v1316 = vand.u32 %v1315, 4294901760
    %1317 = vmatmul.f32.gmra.mxu0 %v1316
    %v1318 = vpop.f32.mrf.mxu0
    %v1319 = vadd.f32 %v1274, %v1318
    %1320 = vdwg.mxu0
    %v1321 = vand.u32 %v1062, 4294901760
    %v1322 = vsub.f32 %v1062, %v1321
    %v1323 = vand.u32 %v1322, 4294901760
    %1324 = vmatpush.msra.mxu0 %v1323
    %v1325 = vand.u32 %v1061, 4294901760
    %v1326 = vsub.f32 %v1061, %v1325
    %v1327 = vand.u32 %v1326, 4294901760
    %1328 = vmatpush.msra.mxu0 %v1327
    %v1329 = vand.u32 %v1060, 4294901760
    %v1330 = vsub.f32 %v1060, %v1329
    %v1331 = vand.u32 %v1330, 4294901760
    %1332 = vmatpush.msra.mxu0 %v1331
    %v1333 = vand.u32 %v1059, 4294901760
    %v1334 = vsub.f32 %v1059, %v1333
    %v1335 = vand.u32 %v1334, 4294901760
    %1336 = vmatpush.msra.mxu0 %v1335
    %v1337 = vand.u32 %v1058, 4294901760
    %v1338 = vsub.f32 %v1058, %v1337
    %v1339 = vand.u32 %v1338, 4294901760
    %1340 = vmatpush.msra.mxu0 %v1339
    %v1341 = vand.u32 %v1057, 4294901760
    %v1342 = vsub.f32 %v1057, %v1341
    %v1343 = vand.u32 %v1342, 4294901760
    %1344 = vmatpush.msra.mxu0 %v1343
    %v1345 = vand.u32 %v1056, 4294901760
    %v1346 = vsub.f32 %v1056, %v1345
    %v1347 = vand.u32 %v1346, 4294901760
    %1348 = vmatpush.msra.mxu0 %v1347
    %v1349 = vand.u32 %v1055, 4294901760
    %v1350 = vsub.f32 %v1055, %v1349
    %v1351 = vand.u32 %v1350, 4294901760
    %1352 = vmatpush.msra.mxu0 %v1351
    %v1353 = vand.u32 %v1054, 4294901760
    %v1354 = vsub.f32 %v1054, %v1353
    %v1355 = vand.u32 %v1354, 4294901760
    %1356 = vmatpush.msra.mxu0 %v1355
    %v1357 = vand.u32 %v1053, 4294901760
    %v1358 = vsub.f32 %v1053, %v1357
    %v1359 = vand.u32 %v1358, 4294901760
    %1360 = vmatpush.msra.mxu0 %v1359
    %v1361 = vand.u32 %v1052, 4294901760
    %v1362 = vsub.f32 %v1052, %v1361
    %v1363 = vand.u32 %v1362, 4294901760
    %1364 = vmatpush.msra.mxu0 %v1363
    %v1365 = vand.u32 %v1051, 4294901760
    %v1366 = vsub.f32 %v1051, %v1365
    %v1367 = vand.u32 %v1366, 4294901760
    %1368 = vmatpush.msra.mxu0 %v1367
    %v1369 = vand.u32 %v1050, 4294901760
    %v1370 = vsub.f32 %v1050, %v1369
    %v1371 = vand.u32 %v1370, 4294901760
    %1372 = vmatpush.msra.mxu0 %v1371
    %v1373 = vand.u32 %v1049, 4294901760
    %v1374 = vsub.f32 %v1049, %v1373
    %v1375 = vand.u32 %v1374, 4294901760
    %1376 = vmatpush.msra.mxu0 %v1375
    %v1377 = vand.u32 %v1048, 4294901760
    %v1378 = vsub.f32 %v1048, %v1377
    %v1379 = vand.u32 %v1378, 4294901760
    %1380 = vmatpush.msra.mxu0 %v1379
    %v1381 = vand.u32 %v1047, 4294901760
    %v1382 = vsub.f32 %v1047, %v1381
    %v1383 = vand.u32 %v1382, 4294901760
    %1384 = vmatpush.msra.mxu0 %v1383
    %v1385 = vand.u32 %v1044, 4294901760
    %1386 = vmatmul.f32.gmra.mxu0 %v1385
    %v1387 = vpop.f32.mrf.mxu0
    %v1388 = vadd.f32 %v1313, %v1387
    %v1389 = vand.u32 %v1045, 4294901760
    %1390 = vmatmul.f32.gmra.mxu0 %v1389
    %v1391 = vpop.f32.mrf.mxu0
    %v1392 = vadd.f32 %v1319, %v1391
    %1393 = vdwg.mxu0
    %v1394 = vand.u32 %v1062, 4294901760
    %1395 = vmatpush.msra.mxu0 %v1394
    %v1396 = vand.u32 %v1061, 4294901760
    %1397 = vmatpush.msra.mxu0 %v1396
    %v1398 = vand.u32 %v1060, 4294901760
    %1399 = vmatpush.msra.mxu0 %v1398
    %v1400 = vand.u32 %v1059, 4294901760
    %1401 = vmatpush.msra.mxu0 %v1400
    %v1402 = vand.u32 %v1058, 4294901760
    %1403 = vmatpush.msra.mxu0 %v1402
    %v1404 = vand.u32 %v1057, 4294901760
    %1405 = vmatpush.msra.mxu0 %v1404
    %v1406 = vand.u32 %v1056, 4294901760
    %1407 = vmatpush.msra.mxu0 %v1406
    %v1408 = vand.u32 %v1055, 4294901760
    %1409 = vmatpush.msra.mxu0 %v1408
    %v1410 = vand.u32 %v1054, 4294901760
    %1411 = vmatpush.msra.mxu0 %v1410
    %v1412 = vand.u32 %v1053, 4294901760
    %1413 = vmatpush.msra.mxu0 %v1412
    %v1414 = vand.u32 %v1052, 4294901760
    %1415 = vmatpush.msra.mxu0 %v1414
    %v1416 = vand.u32 %v1051, 4294901760
    %1417 = vmatpush.msra.mxu0 %v1416
    %v1418 = vand.u32 %v1050, 4294901760
    %1419 = vmatpush.msra.mxu0 %v1418
    %v1420 = vand.u32 %v1049, 4294901760
    %1421 = vmatpush.msra.mxu0 %v1420
    %v1422 = vand.u32 %v1048, 4294901760
    %1423 = vmatpush.msra.mxu0 %v1422
    %v1424 = vand.u32 %v1047, 4294901760
    %1425 = vmatpush.msra.mxu0 %v1424
    %v1426 = vand.u32 %v1044, 4294901760
    %1427 = vmatmul.f32.gmra.mxu0 %v1426
    %v1428 = vpop.f32.mrf.mxu0
    %v1429 = vadd.f32 %v1388, %v1428
    %v1430 = vand.u32 %v1045, 4294901760
    %1431 = vmatmul.f32.gmra.mxu0 %v1430
    %v1432 = vpop.f32.mrf.mxu0
    %v1433 = vadd.f32 %v1392, %v1432
    %1434 = vdwg.mxu0
    %s1435 = scalar_lea.vmem %s8, 128
    %v1436 = vld [vmem:[%s1435] sm:$0xff]
    %v1437 = vld [vmem:[%s1435 + $0x8] sm:$0xff]
    %v1438 = vld [vmem:[%s1435 + $0x10] sm:$0xff]
    %v1439 = vld [vmem:[%s1435 + $0x18] sm:$0xff]
    %v1440 = vld [vmem:[%s1435 + $0x20] sm:$0xff]
    %v1441 = vld [vmem:[%s1435 + $0x28] sm:$0xff]
    %v1442 = vld [vmem:[%s1435 + $0x30] sm:$0xff]
    %v1443 = vld [vmem:[%s1435 + $0x38] sm:$0xff]
    %v1444 = vld [vmem:[%s1435 + $0x40] sm:$0xff]
    %v1445 = vld [vmem:[%s1435 + $0x48] sm:$0xff]
    %v1446 = vld [vmem:[%s1435 + $0x50] sm:$0xff]
    %v1447 = vld [vmem:[%s1435 + $0x58] sm:$0xff]
    %v1448 = vld [vmem:[%s1435 + $0x60] sm:$0xff]
    %v1449 = vld [vmem:[%s1435 + $0x68] sm:$0xff]
    %v1450 = vld [vmem:[%s1435 + $0x70] sm:$0xff]
    %v1451 = vld [vmem:[%s1435 + $0x78] sm:$0xff]
    %v1452 = vand.u32 %v1451, 4294901760
    %1453 = vmatpush.msra.mxu0 %v1452
    %v1454 = vand.u32 %v1450, 4294901760
    %1455 = vmatpush.msra.mxu0 %v1454
    %v1456 = vand.u32 %v1449, 4294901760
    %1457 = vmatpush.msra.mxu0 %v1456
    %v1458 = vand.u32 %v1448, 4294901760
    %1459 = vmatpush.msra.mxu0 %v1458
    %v1460 = vand.u32 %v1447, 4294901760
    %1461 = vmatpush.msra.mxu0 %v1460
    %v1462 = vand.u32 %v1446, 4294901760
    %1463 = vmatpush.msra.mxu0 %v1462
    %v1464 = vand.u32 %v1445, 4294901760
    %1465 = vmatpush.msra.mxu0 %v1464
    %v1466 = vand.u32 %v1444, 4294901760
    %1467 = vmatpush.msra.mxu0 %v1466
    %v1468 = vand.u32 %v1443, 4294901760
    %1469 = vmatpush.msra.mxu0 %v1468
    %v1470 = vand.u32 %v1442, 4294901760
    %1471 = vmatpush.msra.mxu0 %v1470
    %v1472 = vand.u32 %v1441, 4294901760
    %1473 = vmatpush.msra.mxu0 %v1472
    %v1474 = vand.u32 %v1440, 4294901760
    %1475 = vmatpush.msra.mxu0 %v1474
    %v1476 = vand.u32 %v1439, 4294901760
    %1477 = vmatpush.msra.mxu0 %v1476
    %v1478 = vand.u32 %v1438, 4294901760
    %1479 = vmatpush.msra.mxu0 %v1478
    %v1480 = vand.u32 %v1437, 4294901760
    %1481 = vmatpush.msra.mxu0 %v1480
    %v1482 = vand.u32 %v1436, 4294901760
    %1483 = vmatpush.msra.mxu0 %v1482
    %v1484 = vand.u32 %v1042, 4294901760
    %v1485 = vsub.f32 %v1042, %v1484
    %v1486 = vand.u32 %v1485, 4294901760
    %v1487 = vsub.f32 %v1485, %v1486
    %v1488 = vand.u32 %v1487, 4294901760
    %1489 = vmatmul.f32.gmra.mxu0 %v1488
    %v1490 = vpop.f32.mrf.mxu0
    %v1491 = vadd.f32 0.0, %v1490
    %v1492 = vand.u32 %v1043, 4294901760
    %v1493 = vsub.f32 %v1043, %v1492
    %v1494 = vand.u32 %v1493, 4294901760
    %v1495 = vsub.f32 %v1493, %v1494
    %v1496 = vand.u32 %v1495, 4294901760
    %1497 = vmatmul.f32.gmra.mxu0 %v1496
    %v1498 = vpop.f32.mrf.mxu0
    %v1499 = vadd.f32 0.0, %v1498
    %1500 = vdwg.mxu0
    %v1501 = vand.u32 %v1451, 4294901760
    %v1502 = vsub.f32 %v1451, %v1501
    %v1503 = vand.u32 %v1502, 4294901760
    %v1504 = vsub.f32 %v1502, %v1503
    %v1505 = vand.u32 %v1504, 4294901760
    %1506 = vmatpush.msra.mxu0 %v1505
    %v1507 = vand.u32 %v1450, 4294901760
    %v1508 = vsub.f32 %v1450, %v1507
    %v1509 = vand.u32 %v1508, 4294901760
    %v1510 = vsub.f32 %v1508, %v1509
    %v1511 = vand.u32 %v1510, 4294901760
    %1512 = vmatpush.msra.mxu0 %v1511
    %v1513 = vand.u32 %v1449, 4294901760
    %v1514 = vsub.f32 %v1449, %v1513
    %v1515 = vand.u32 %v1514, 4294901760
    %v1516 = vsub.f32 %v1514, %v1515
    %v1517 = vand.u32 %v1516, 4294901760
    %1518 = vmatpush.msra.mxu0 %v1517
    %v1519 = vand.u32 %v1448, 4294901760
    %v1520 = vsub.f32 %v1448, %v1519
    %v1521 = vand.u32 %v1520, 4294901760
    %v1522 = vsub.f32 %v1520, %v1521
    %v1523 = vand.u32 %v1522, 4294901760
    %1524 = vmatpush.msra.mxu0 %v1523
    %v1525 = vand.u32 %v1447, 4294901760
    %v1526 = vsub.f32 %v1447, %v1525
    %v1527 = vand.u32 %v1526, 4294901760
    %v1528 = vsub.f32 %v1526, %v1527
    %v1529 = vand.u32 %v1528, 4294901760
    %1530 = vmatpush.msra.mxu0 %v1529
    %v1531 = vand.u32 %v1446, 4294901760
    %v1532 = vsub.f32 %v1446, %v1531
    %v1533 = vand.u32 %v1532, 4294901760
    %v1534 = vsub.f32 %v1532, %v1533
    %v1535 = vand.u32 %v1534, 4294901760
    %1536 = vmatpush.msra.mxu0 %v1535
    %v1537 = vand.u32 %v1445, 4294901760
    %v1538 = vsub.f32 %v1445, %v1537
    %v1539 = vand.u32 %v1538, 4294901760
    %v1540 = vsub.f32 %v1538, %v1539
    %v1541 = vand.u32 %v1540, 4294901760
    %1542 = vmatpush.msra.mxu0 %v1541
    %v1543 = vand.u32 %v1444, 4294901760
    %v1544 = vsub.f32 %v1444, %v1543
    %v1545 = vand.u32 %v1544, 4294901760
    %v1546 = vsub.f32 %v1544, %v1545
    %v1547 = vand.u32 %v1546, 4294901760
    %1548 = vmatpush.msra.mxu0 %v1547
    %v1549 = vand.u32 %v1443, 4294901760
    %v1550 = vsub.f32 %v1443, %v1549
    %v1551 = vand.u32 %v1550, 4294901760
    %v1552 = vsub.f32 %v1550, %v1551
    %v1553 = vand.u32 %v1552, 4294901760
    %1554 = vmatpush.msra.mxu0 %v1553
    %v1555 = vand.u32 %v1442, 4294901760
    %v1556 = vsub.f32 %v1442, %v1555
    %v1557 = vand.u32 %v1556, 4294901760
    %v1558 = vsub.f32 %v1556, %v1557
    %v1559 = vand.u32 %v1558, 4294901760
    %1560 = vmatpush.msra.mxu0 %v1559
    %v1561 = vand.u32 %v1441, 4294901760
    %v1562 = vsub.f32 %v1441, %v1561
    %v1563 = vand.u32 %v1562, 4294901760
    %v1564 = vsub.f32 %v1562, %v1563
    %v1565 = vand.u32 %v1564, 4294901760
    %1566 = vmatpush.msra.mxu0 %v1565
    %v1567 = vand.u32 %v1440, 4294901760
    %v1568 = vsub.f32 %v1440, %v1567
    %v1569 = vand.u32 %v1568, 4294901760
    %v1570 = vsub.f32 %v1568, %v1569
    %v1571 = vand.u32 %v1570, 4294901760
    %1572 = vmatpush.msra.mxu0 %v1571
    %v1573 = vand.u32 %v1439, 4294901760
    %v1574 = vsub.f32 %v1439, %v1573
    %v1575 = vand.u32 %v1574, 4294901760
    %v1576 = vsub.f32 %v1574, %v1575
    %v1577 = vand.u32 %v1576, 4294901760
    %1578 = vmatpush.msra.mxu0 %v1577
    %v1579 = vand.u32 %v1438, 4294901760
    %v1580 = vsub.f32 %v1438, %v1579
    %v1581 = vand.u32 %v1580, 4294901760
    %v1582 = vsub.f32 %v1580, %v1581
    %v1583 = vand.u32 %v1582, 4294901760
    %1584 = vmatpush.msra.mxu0 %v1583
    %v1585 = vand.u32 %v1437, 4294901760
    %v1586 = vsub.f32 %v1437, %v1585
    %v1587 = vand.u32 %v1586, 4294901760
    %v1588 = vsub.f32 %v1586, %v1587
    %v1589 = vand.u32 %v1588, 4294901760
    %1590 = vmatpush.msra.mxu0 %v1589
    %v1591 = vand.u32 %v1436, 4294901760
    %v1592 = vsub.f32 %v1436, %v1591
    %v1593 = vand.u32 %v1592, 4294901760
    %v1594 = vsub.f32 %v1592, %v1593
    %v1595 = vand.u32 %v1594, 4294901760
    %1596 = vmatpush.msra.mxu0 %v1595
    %v1597 = vand.u32 %v1042, 4294901760
    %1598 = vmatmul.f32.gmra.mxu0 %v1597
    %v1599 = vpop.f32.mrf.mxu0
    %v1600 = vadd.f32 %v1491, %v1599
    %v1601 = vand.u32 %v1043, 4294901760
    %1602 = vmatmul.f32.gmra.mxu0 %v1601
    %v1603 = vpop.f32.mrf.mxu0
    %v1604 = vadd.f32 %v1499, %v1603
    %1605 = vdwg.mxu0
    %v1606 = vand.u32 %v1451, 4294901760
    %v1607 = vsub.f32 %v1451, %v1606
    %1608 = vmatpush.msra.mxu0 %v1607
    %v1609 = vand.u32 %v1450, 4294901760
    %v1610 = vsub.f32 %v1450, %v1609
    %1611 = vmatpush.msra.mxu0 %v1610
    %v1612 = vand.u32 %v1449, 4294901760
    %v1613 = vsub.f32 %v1449, %v1612
    %1614 = vmatpush.msra.mxu0 %v1613
    %v1615 = vand.u32 %v1448, 4294901760
    %v1616 = vsub.f32 %v1448, %v1615
    %1617 = vmatpush.msra.mxu0 %v1616
    %v1618 = vand.u32 %v1447, 4294901760
    %v1619 = vsub.f32 %v1447, %v1618
    %1620 = vmatpush.msra.mxu0 %v1619
    %v1621 = vand.u32 %v1446, 4294901760
    %v1622 = vsub.f32 %v1446, %v1621
    %1623 = vmatpush.msra.mxu0 %v1622
    %v1624 = vand.u32 %v1445, 4294901760
    %v1625 = vsub.f32 %v1445, %v1624
    %1626 = vmatpush.msra.mxu0 %v1625
    %v1627 = vand.u32 %v1444, 4294901760
    %v1628 = vsub.f32 %v1444, %v1627
    %1629 = vmatpush.msra.mxu0 %v1628
    %v1630 = vand.u32 %v1443, 4294901760
    %v1631 = vsub.f32 %v1443, %v1630
    %1632 = vmatpush.msra.mxu0 %v1631
    %v1633 = vand.u32 %v1442, 4294901760
    %v1634 = vsub.f32 %v1442, %v1633
    %1635 = vmatpush.msra.mxu0 %v1634
    %v1636 = vand.u32 %v1441, 4294901760
    %v1637 = vsub.f32 %v1441, %v1636
    %1638 = vmatpush.msra.mxu0 %v1637
    %v1639 = vand.u32 %v1440, 4294901760
    %v1640 = vsub.f32 %v1440, %v1639
    %1641 = vmatpush.msra.mxu0 %v1640
    %v1642 = vand.u32 %v1439, 4294901760
    %v1643 = vsub.f32 %v1439, %v1642
    %1644 = vmatpush.msra.mxu0 %v1643
    %v1645 = vand.u32 %v1438, 4294901760
    %v1646 = vsub.f32 %v1438, %v1645
    %1647 = vmatpush.msra.mxu0 %v1646
    %v1648 = vand.u32 %v1437, 4294901760
    %v1649 = vsub.f32 %v1437, %v1648
    %1650 = vmatpush.msra.mxu0 %v1649
    %v1651 = vand.u32 %v1436, 4294901760
    %v1652 = vsub.f32 %v1436, %v1651
    %1653 = vmatpush.msra.mxu0 %v1652
    %v1654 = vand.u32 %v1042, 4294901760
    %v1655 = vsub.f32 %v1042, %v1654
    %1656 = vmatmul.f32.gmra.mxu0 %v1655
    %v1657 = vpop.f32.mrf.mxu0
    %v1658 = vadd.f32 %v1600, %v1657
    %v1659 = vand.u32 %v1043, 4294901760
    %v1660 = vsub.f32 %v1043, %v1659
    %1661 = vmatmul.f32.gmra.mxu0 %v1660
    %v1662 = vpop.f32.mrf.mxu0
    %v1663 = vadd.f32 %v1604, %v1662
    %1664 = vdwg.mxu0
    %v1665 = vand.u32 %v1451, 4294901760
    %1666 = vmatpush.msra.mxu0 %v1665
    %v1667 = vand.u32 %v1450, 4294901760
    %1668 = vmatpush.msra.mxu0 %v1667
    %v1669 = vand.u32 %v1449, 4294901760
    %1670 = vmatpush.msra.mxu0 %v1669
    %v1671 = vand.u32 %v1448, 4294901760
    %1672 = vmatpush.msra.mxu0 %v1671
    %v1673 = vand.u32 %v1447, 4294901760
    %1674 = vmatpush.msra.mxu0 %v1673
    %v1675 = vand.u32 %v1446, 4294901760
    %1676 = vmatpush.msra.mxu0 %v1675
    %v1677 = vand.u32 %v1445, 4294901760
    %1678 = vmatpush.msra.mxu0 %v1677
    %v1679 = vand.u32 %v1444, 4294901760
    %1680 = vmatpush.msra.mxu0 %v1679
    %v1681 = vand.u32 %v1443, 4294901760
    %1682 = vmatpush.msra.mxu0 %v1681
    %v1683 = vand.u32 %v1442, 4294901760
    %1684 = vmatpush.msra.mxu0 %v1683
    %v1685 = vand.u32 %v1441, 4294901760
    %1686 = vmatpush.msra.mxu0 %v1685
    %v1687 = vand.u32 %v1440, 4294901760
    %1688 = vmatpush.msra.mxu0 %v1687
    %v1689 = vand.u32 %v1439, 4294901760
    %1690 = vmatpush.msra.mxu0 %v1689
    %v1691 = vand.u32 %v1438, 4294901760
    %1692 = vmatpush.msra.mxu0 %v1691
    %v1693 = vand.u32 %v1437, 4294901760
    %1694 = vmatpush.msra.mxu0 %v1693
    %v1695 = vand.u32 %v1436, 4294901760
    %1696 = vmatpush.msra.mxu0 %v1695
    %v1697 = vand.u32 %v1042, 4294901760
    %v1698 = vsub.f32 %v1042, %v1697
    %v1699 = vand.u32 %v1698, 4294901760
    %1700 = vmatmul.f32.gmra.mxu0 %v1699
    %v1701 = vpop.f32.mrf.mxu0
    %v1702 = vadd.f32 %v1658, %v1701
    %v1703 = vand.u32 %v1043, 4294901760
    %v1704 = vsub.f32 %v1043, %v1703
    %v1705 = vand.u32 %v1704, 4294901760
    %1706 = vmatmul.f32.gmra.mxu0 %v1705
    %v1707 = vpop.f32.mrf.mxu0
    %v1708 = vadd.f32 %v1663, %v1707
    %1709 = vdwg.mxu0
    %v1710 = vand.u32 %v1451, 4294901760
    %v1711 = vsub.f32 %v1451, %v1710
    %v1712 = vand.u32 %v1711, 4294901760
    %1713 = vmatpush.msra.mxu0 %v1712
    %v1714 = vand.u32 %v1450, 4294901760
    %v1715 = vsub.f32 %v1450, %v1714
    %v1716 = vand.u32 %v1715, 4294901760
    %1717 = vmatpush.msra.mxu0 %v1716
    %v1718 = vand.u32 %v1449, 4294901760
    %v1719 = vsub.f32 %v1449, %v1718
    %v1720 = vand.u32 %v1719, 4294901760
    %1721 = vmatpush.msra.mxu0 %v1720
    %v1722 = vand.u32 %v1448, 4294901760
    %v1723 = vsub.f32 %v1448, %v1722
    %v1724 = vand.u32 %v1723, 4294901760
    %1725 = vmatpush.msra.mxu0 %v1724
    %v1726 = vand.u32 %v1447, 4294901760
    %v1727 = vsub.f32 %v1447, %v1726
    %v1728 = vand.u32 %v1727, 4294901760
    %1729 = vmatpush.msra.mxu0 %v1728
    %v1730 = vand.u32 %v1446, 4294901760
    %v1731 = vsub.f32 %v1446, %v1730
    %v1732 = vand.u32 %v1731, 4294901760
    %1733 = vmatpush.msra.mxu0 %v1732
    %v1734 = vand.u32 %v1445, 4294901760
    %v1735 = vsub.f32 %v1445, %v1734
    %v1736 = vand.u32 %v1735, 4294901760
    %1737 = vmatpush.msra.mxu0 %v1736
    %v1738 = vand.u32 %v1444, 4294901760
    %v1739 = vsub.f32 %v1444, %v1738
    %v1740 = vand.u32 %v1739, 4294901760
    %1741 = vmatpush.msra.mxu0 %v1740
    %v1742 = vand.u32 %v1443, 4294901760
    %v1743 = vsub.f32 %v1443, %v1742
    %v1744 = vand.u32 %v1743, 4294901760
    %1745 = vmatpush.msra.mxu0 %v1744
    %v1746 = vand.u32 %v1442, 4294901760
    %v1747 = vsub.f32 %v1442, %v1746
    %v1748 = vand.u32 %v1747, 4294901760
    %1749 = vmatpush.msra.mxu0 %v1748
    %v1750 = vand.u32 %v1441, 4294901760
    %v1751 = vsub.f32 %v1441, %v1750
    %v1752 = vand.u32 %v1751, 4294901760
    %1753 = vmatpush.msra.mxu0 %v1752
    %v1754 = vand.u32 %v1440, 4294901760
    %v1755 = vsub.f32 %v1440, %v1754
    %v1756 = vand.u32 %v1755, 4294901760
    %1757 = vmatpush.msra.mxu0 %v1756
    %v1758 = vand.u32 %v1439, 4294901760
    %v1759 = vsub.f32 %v1439, %v1758
    %v1760 = vand.u32 %v1759, 4294901760
    %1761 = vmatpush.msra.mxu0 %v1760
    %v1762 = vand.u32 %v1438, 4294901760
    %v1763 = vsub.f32 %v1438, %v1762
    %v1764 = vand.u32 %v1763, 4294901760
    %1765 = vmatpush.msra.mxu0 %v1764
    %v1766 = vand.u32 %v1437, 4294901760
    %v1767 = vsub.f32 %v1437, %v1766
    %v1768 = vand.u32 %v1767, 4294901760
    %1769 = vmatpush.msra.mxu0 %v1768
    %v1770 = vand.u32 %v1436, 4294901760
    %v1771 = vsub.f32 %v1436, %v1770
    %v1772 = vand.u32 %v1771, 4294901760
    %1773 = vmatpush.msra.mxu0 %v1772
    %v1774 = vand.u32 %v1042, 4294901760
    %1775 = vmatmul.f32.gmra.mxu0 %v1774
    %v1776 = vpop.f32.mrf.mxu0
    %v1777 = vadd.f32 %v1702, %v1776
    %v1778 = vand.u32 %v1043, 4294901760
    %1779 = vmatmul.f32.gmra.mxu0 %v1778
    %v1780 = vpop.f32.mrf.mxu0
    %v1781 = vadd.f32 %v1708, %v1780
    %1782 = vdwg.mxu0
    %v1783 = vand.u32 %v1451, 4294901760
    %1784 = vmatpush.msra.mxu0 %v1783
    %v1785 = vand.u32 %v1450, 4294901760
    %1786 = vmatpush.msra.mxu0 %v1785
    %v1787 = vand.u32 %v1449, 4294901760
    %1788 = vmatpush.msra.mxu0 %v1787
    %v1789 = vand.u32 %v1448, 4294901760
    %1790 = vmatpush.msra.mxu0 %v1789
    %v1791 = vand.u32 %v1447, 4294901760
    %1792 = vmatpush.msra.mxu0 %v1791
    %v1793 = vand.u32 %v1446, 4294901760
    %1794 = vmatpush.msra.mxu0 %v1793
    %v1795 = vand.u32 %v1445, 4294901760
    %1796 = vmatpush.msra.mxu0 %v1795
    %v1797 = vand.u32 %v1444, 4294901760
    %1798 = vmatpush.msra.mxu0 %v1797
    %v1799 = vand.u32 %v1443, 4294901760
    %1800 = vmatpush.msra.mxu0 %v1799
    %v1801 = vand.u32 %v1442, 4294901760
    %1802 = vmatpush.msra.mxu0 %v1801
    %v1803 = vand.u32 %v1441, 4294901760
    %1804 = vmatpush.msra.mxu0 %v1803
    %v1805 = vand.u32 %v1440, 4294901760
    %1806 = vmatpush.msra.mxu0 %v1805
    %v1807 = vand.u32 %v1439, 4294901760
    %1808 = vmatpush.msra.mxu0 %v1807
    %v1809 = vand.u32 %v1438, 4294901760
    %1810 = vmatpush.msra.mxu0 %v1809
    %v1811 = vand.u32 %v1437, 4294901760
    %1812 = vmatpush.msra.mxu0 %v1811
    %v1813 = vand.u32 %v1436, 4294901760
    %1814 = vmatpush.msra.mxu0 %v1813
    %v1815 = vand.u32 %v1042, 4294901760
    %1816 = vmatmul.f32.gmra.mxu0 %v1815
    %v1817 = vpop.f32.mrf.mxu0
    %v1818 = vadd.f32 %v1777, %v1817
    %v1819 = vand.u32 %v1043, 4294901760
    %1820 = vmatmul.f32.gmra.mxu0 %v1819
    %v1821 = vpop.f32.mrf.mxu0
    %v1822 = vadd.f32 %v1781, %v1821
    %1823 = vdwg.mxu0
    %s1824 = scalar_lea.vmem %s8, 256
    %v1825 = vld [vmem:[%s1824] sm:$0xff]
    %v1826 = vld [vmem:[%s1824 + $0x8] sm:$0xff]
    %v1827 = vld [vmem:[%s1824 + $0x10] sm:$0xff]
    %v1828 = vld [vmem:[%s1824 + $0x18] sm:$0xff]
    %v1829 = vld [vmem:[%s1824 + $0x20] sm:$0xff]
    %v1830 = vld [vmem:[%s1824 + $0x28] sm:$0xff]
    %v1831 = vld [vmem:[%s1824 + $0x30] sm:$0xff]
    %v1832 = vld [vmem:[%s1824 + $0x38] sm:$0xff]
    %v1833 = vld [vmem:[%s1824 + $0x40] sm:$0xff]
    %v1834 = vld [vmem:[%s1824 + $0x48] sm:$0xff]
    %v1835 = vld [vmem:[%s1824 + $0x50] sm:$0xff]
    %v1836 = vld [vmem:[%s1824 + $0x58] sm:$0xff]
    %v1837 = vld [vmem:[%s1824 + $0x60] sm:$0xff]
    %v1838 = vld [vmem:[%s1824 + $0x68] sm:$0xff]
    %v1839 = vld [vmem:[%s1824 + $0x70] sm:$0xff]
    %v1840 = vld [vmem:[%s1824 + $0x78] sm:$0xff]
    %v1841 = vand.u32 %v1840, 4294901760
    %1842 = vmatpush.msra.mxu0 %v1841
    %v1843 = vand.u32 %v1839, 4294901760
    %1844 = vmatpush.msra.mxu0 %v1843
    %v1845 = vand.u32 %v1838, 4294901760
    %1846 = vmatpush.msra.mxu0 %v1845
    %v1847 = vand.u32 %v1837, 4294901760
    %1848 = vmatpush.msra.mxu0 %v1847
    %v1849 = vand.u32 %v1836, 4294901760
    %1850 = vmatpush.msra.mxu0 %v1849
    %v1851 = vand.u32 %v1835, 4294901760
    %1852 = vmatpush.msra.mxu0 %v1851
    %v1853 = vand.u32 %v1834, 4294901760
    %1854 = vmatpush.msra.mxu0 %v1853
    %v1855 = vand.u32 %v1833, 4294901760
    %1856 = vmatpush.msra.mxu0 %v1855
    %v1857 = vand.u32 %v1832, 4294901760
    %1858 = vmatpush.msra.mxu0 %v1857
    %v1859 = vand.u32 %v1831, 4294901760
    %1860 = vmatpush.msra.mxu0 %v1859
    %v1861 = vand.u32 %v1830, 4294901760
    %1862 = vmatpush.msra.mxu0 %v1861
    %v1863 = vand.u32 %v1829, 4294901760
    %1864 = vmatpush.msra.mxu0 %v1863
    %v1865 = vand.u32 %v1828, 4294901760
    %1866 = vmatpush.msra.mxu0 %v1865
    %v1867 = vand.u32 %v1827, 4294901760
    %1868 = vmatpush.msra.mxu0 %v1867
    %v1869 = vand.u32 %v1826, 4294901760
    %1870 = vmatpush.msra.mxu0 %v1869
    %v1871 = vand.u32 %v1825, 4294901760
    %1872 = vmatpush.msra.mxu0 %v1871
    %v1873 = vand.u32 %v1042, 4294901760
    %v1874 = vsub.f32 %v1042, %v1873
    %v1875 = vand.u32 %v1874, 4294901760
    %v1876 = vsub.f32 %v1874, %v1875
    %v1877 = vand.u32 %v1876, 4294901760
    %1878 = vmatmul.f32.gmra.mxu0 %v1877
    %v1879 = vpop.f32.mrf.mxu0
    %v1880 = vadd.f32 0.0, %v1879
    %v1881 = vand.u32 %v1043, 4294901760
    %v1882 = vsub.f32 %v1043, %v1881
    %v1883 = vand.u32 %v1882, 4294901760
    %v1884 = vsub.f32 %v1882, %v1883
    %v1885 = vand.u32 %v1884, 4294901760
    %1886 = vmatmul.f32.gmra.mxu0 %v1885
    %v1887 = vpop.f32.mrf.mxu0
    %v1888 = vadd.f32 0.0, %v1887
    %1889 = vdwg.mxu0
    %v1890 = vand.u32 %v1840, 4294901760
    %v1891 = vsub.f32 %v1840, %v1890
    %v1892 = vand.u32 %v1891, 4294901760
    %v1893 = vsub.f32 %v1891, %v1892
    %v1894 = vand.u32 %v1893, 4294901760
    %1895 = vmatpush.msra.mxu0 %v1894
    %v1896 = vand.u32 %v1839, 4294901760
    %v1897 = vsub.f32 %v1839, %v1896
    %v1898 = vand.u32 %v1897, 4294901760
    %v1899 = vsub.f32 %v1897, %v1898
    %v1900 = vand.u32 %v1899, 4294901760
    %1901 = vmatpush.msra.mxu0 %v1900
    %v1902 = vand.u32 %v1838, 4294901760
    %v1903 = vsub.f32 %v1838, %v1902
    %v1904 = vand.u32 %v1903, 4294901760
    %v1905 = vsub.f32 %v1903, %v1904
    %v1906 = vand.u32 %v1905, 4294901760
    %1907 = vmatpush.msra.mxu0 %v1906
    %v1908 = vand.u32 %v1837, 4294901760
    %v1909 = vsub.f32 %v1837, %v1908
    %v1910 = vand.u32 %v1909, 4294901760
    %v1911 = vsub.f32 %v1909, %v1910
    %v1912 = vand.u32 %v1911, 4294901760
    %1913 = vmatpush.msra.mxu0 %v1912
    %v1914 = vand.u32 %v1836, 4294901760
    %v1915 = vsub.f32 %v1836, %v1914
    %v1916 = vand.u32 %v1915, 4294901760
    %v1917 = vsub.f32 %v1915, %v1916
    %v1918 = vand.u32 %v1917, 4294901760
    %1919 = vmatpush.msra.mxu0 %v1918
    %v1920 = vand.u32 %v1835, 4294901760
    %v1921 = vsub.f32 %v1835, %v1920
    %v1922 = vand.u32 %v1921, 4294901760
    %v1923 = vsub.f32 %v1921, %v1922
    %v1924 = vand.u32 %v1923, 4294901760
    %1925 = vmatpush.msra.mxu0 %v1924
    %v1926 = vand.u32 %v1834, 4294901760
    %v1927 = vsub.f32 %v1834, %v1926
    %v1928 = vand.u32 %v1927, 4294901760
    %v1929 = vsub.f32 %v1927, %v1928
    %v1930 = vand.u32 %v1929, 4294901760
    %1931 = vmatpush.msra.mxu0 %v1930
    %v1932 = vand.u32 %v1833, 4294901760
    %v1933 = vsub.f32 %v1833, %v1932
    %v1934 = vand.u32 %v1933, 4294901760
    %v1935 = vsub.f32 %v1933, %v1934
    %v1936 = vand.u32 %v1935, 4294901760
    %1937 = vmatpush.msra.mxu0 %v1936
    %v1938 = vand.u32 %v1832, 4294901760
    %v1939 = vsub.f32 %v1832, %v1938
    %v1940 = vand.u32 %v1939, 4294901760
    %v1941 = vsub.f32 %v1939, %v1940
    %v1942 = vand.u32 %v1941, 4294901760
    %1943 = vmatpush.msra.mxu0 %v1942
    %v1944 = vand.u32 %v1831, 4294901760
    %v1945 = vsub.f32 %v1831, %v1944
    %v1946 = vand.u32 %v1945, 4294901760
    %v1947 = vsub.f32 %v1945, %v1946
    %v1948 = vand.u32 %v1947, 4294901760
    %1949 = vmatpush.msra.mxu0 %v1948
    %v1950 = vand.u32 %v1830, 4294901760
    %v1951 = vsub.f32 %v1830, %v1950
    %v1952 = vand.u32 %v1951, 4294901760
    %v1953 = vsub.f32 %v1951, %v1952
    %v1954 = vand.u32 %v1953, 4294901760
    %1955 = vmatpush.msra.mxu0 %v1954
    %v1956 = vand.u32 %v1829, 4294901760
    %v1957 = vsub.f32 %v1829, %v1956
    %v1958 = vand.u32 %v1957, 4294901760
    %v1959 = vsub.f32 %v1957, %v1958
    %v1960 = vand.u32 %v1959, 4294901760
    %1961 = vmatpush.msra.mxu0 %v1960
    %v1962 = vand.u32 %v1828, 4294901760
    %v1963 = vsub.f32 %v1828, %v1962
    %v1964 = vand.u32 %v1963, 4294901760
    %v1965 = vsub.f32 %v1963, %v1964
    %v1966 = vand.u32 %v1965, 4294901760
    %1967 = vmatpush.msra.mxu0 %v1966
    %v1968 = vand.u32 %v1827, 4294901760
    %v1969 = vsub.f32 %v1827, %v1968
    %v1970 = vand.u32 %v1969, 4294901760
    %v1971 = vsub.f32 %v1969, %v1970
    %v1972 = vand.u32 %v1971, 4294901760
    %1973 = vmatpush.msra.mxu0 %v1972
    %v1974 = vand.u32 %v1826, 4294901760
    %v1975 = vsub.f32 %v1826, %v1974
    %v1976 = vand.u32 %v1975, 4294901760
    %v1977 = vsub.f32 %v1975, %v1976
    %v1978 = vand.u32 %v1977, 4294901760
    %1979 = vmatpush.msra.mxu0 %v1978
    %v1980 = vand.u32 %v1825, 4294901760
    %v1981 = vsub.f32 %v1825, %v1980
    %v1982 = vand.u32 %v1981, 4294901760
    %v1983 = vsub.f32 %v1981, %v1982
    %v1984 = vand.u32 %v1983, 4294901760
    %1985 = vmatpush.msra.mxu0 %v1984
    %v1986 = vand.u32 %v1042, 4294901760
    %1987 = vmatmul.f32.gmra.mxu0 %v1986
    %v1988 = vpop.f32.mrf.mxu0
    %v1989 = vadd.f32 %v1880, %v1988
    %v1990 = vand.u32 %v1043, 4294901760
    %1991 = vmatmul.f32.gmra.mxu0 %v1990
    %v1992 = vpop.f32.mrf.mxu0
    %v1993 = vadd.f32 %v1888, %v1992
    %1994 = vdwg.mxu0
    %v1995 = vand.u32 %v1840, 4294901760
    %v1996 = vsub.f32 %v1840, %v1995
    %1997 = vmatpush.msra.mxu0 %v1996
    %v1998 = vand.u32 %v1839, 4294901760
    %v1999 = vsub.f32 %v1839, %v1998
    %2000 = vmatpush.msra.mxu0 %v1999
    %v2001 = vand.u32 %v1838, 4294901760
    %v2002 = vsub.f32 %v1838, %v2001
    %2003 = vmatpush.msra.mxu0 %v2002
    %v2004 = vand.u32 %v1837, 4294901760
    %v2005 = vsub.f32 %v1837, %v2004
    %2006 = vmatpush.msra.mxu0 %v2005
    %v2007 = vand.u32 %v1836, 4294901760
    %v2008 = vsub.f32 %v1836, %v2007
    %2009 = vmatpush.msra.mxu0 %v2008
    %v2010 = vand.u32 %v1835, 4294901760
    %v2011 = vsub.f32 %v1835, %v2010
    %2012 = vmatpush.msra.mxu0 %v2011
    %v2013 = vand.u32 %v1834, 4294901760
    %v2014 = vsub.f32 %v1834, %v2013
    %2015 = vmatpush.msra.mxu0 %v2014
    %v2016 = vand.u32 %v1833, 4294901760
    %v2017 = vsub.f32 %v1833, %v2016
    %2018 = vmatpush.msra.mxu0 %v2017
    %v2019 = vand.u32 %v1832, 4294901760
    %v2020 = vsub.f32 %v1832, %v2019
    %2021 = vmatpush.msra.mxu0 %v2020
    %v2022 = vand.u32 %v1831, 4294901760
    %v2023 = vsub.f32 %v1831, %v2022
    %2024 = vmatpush.msra.mxu0 %v2023
    %v2025 = vand.u32 %v1830, 4294901760
    %v2026 = vsub.f32 %v1830, %v2025
    %2027 = vmatpush.msra.mxu0 %v2026
    %v2028 = vand.u32 %v1829, 4294901760
    %v2029 = vsub.f32 %v1829, %v2028
    %2030 = vmatpush.msra.mxu0 %v2029
    %v2031 = vand.u32 %v1828, 4294901760
    %v2032 = vsub.f32 %v1828, %v2031
    %2033 = vmatpush.msra.mxu0 %v2032
    %v2034 = vand.u32 %v1827, 4294901760
    %v2035 = vsub.f32 %v1827, %v2034
    %2036 = vmatpush.msra.mxu0 %v2035
    %v2037 = vand.u32 %v1826, 4294901760
    %v2038 = vsub.f32 %v1826, %v2037
    %2039 = vmatpush.msra.mxu0 %v2038
    %v2040 = vand.u32 %v1825, 4294901760
    %v2041 = vsub.f32 %v1825, %v2040
    %2042 = vmatpush.msra.mxu0 %v2041
    %v2043 = vand.u32 %v1042, 4294901760
    %v2044 = vsub.f32 %v1042, %v2043
    %2045 = vmatmul.f32.gmra.mxu0 %v2044
    %v2046 = vpop.f32.mrf.mxu0
    %v2047 = vadd.f32 %v1989, %v2046
    %v2048 = vand.u32 %v1043, 4294901760
    %v2049 = vsub.f32 %v1043, %v2048
    %2050 = vmatmul.f32.gmra.mxu0 %v2049
    %v2051 = vpop.f32.mrf.mxu0
    %v2052 = vadd.f32 %v1993, %v2051
    %2053 = vdwg.mxu0
    %v2054 = vand.u32 %v1840, 4294901760
    %2055 = vmatpush.msra.mxu0 %v2054
    %v2056 = vand.u32 %v1839, 4294901760
    %2057 = vmatpush.msra.mxu0 %v2056
    %v2058 = vand.u32 %v1838, 4294901760
    %2059 = vmatpush.msra.mxu0 %v2058
    %v2060 = vand.u32 %v1837, 4294901760
    %2061 = vmatpush.msra.mxu0 %v2060
    %v2062 = vand.u32 %v1836, 4294901760
    %2063 = vmatpush.msra.mxu0 %v2062
    %v2064 = vand.u32 %v1835, 4294901760
    %2065 = vmatpush.msra.mxu0 %v2064
    %v2066 = vand.u32 %v1834, 4294901760
    %2067 = vmatpush.msra.mxu0 %v2066
    %v2068 = vand.u32 %v1833, 4294901760
    %2069 = vmatpush.msra.mxu0 %v2068
    %v2070 = vand.u32 %v1832, 4294901760
    %2071 = vmatpush.msra.mxu0 %v2070
    %v2072 = vand.u32 %v1831, 4294901760
    %2073 = vmatpush.msra.mxu0 %v2072
    %v2074 = vand.u32 %v1830, 4294901760
    %2075 = vmatpush.msra.mxu0 %v2074
    %v2076 = vand.u32 %v1829, 4294901760
    %2077 = vmatpush.msra.mxu0 %v2076
    %v2078 = vand.u32 %v1828, 4294901760
    %2079 = vmatpush.msra.mxu0 %v2078
    %v2080 = vand.u32 %v1827, 4294901760
    %2081 = vmatpush.msra.mxu0 %v2080
    %v2082 = vand.u32 %v1826, 4294901760
    %2083 = vmatpush.msra.mxu0 %v2082
    %v2084 = vand.u32 %v1825, 4294901760
    %2085 = vmatpush.msra.mxu0 %v2084
    %v2086 = vand.u32 %v1042, 4294901760
    %v2087 = vsub.f32 %v1042, %v2086
    %v2088 = vand.u32 %v2087, 4294901760
    %2089 = vmatmul.f32.gmra.mxu0 %v2088
    %v2090 = vpop.f32.mrf.mxu0
    %v2091 = vadd.f32 %v2047, %v2090
    %v2092 = vand.u32 %v1043, 4294901760
    %v2093 = vsub.f32 %v1043, %v2092
    %v2094 = vand.u32 %v2093, 4294901760
    %2095 = vmatmul.f32.gmra.mxu0 %v2094
    %v2096 = vpop.f32.mrf.mxu0
    %v2097 = vadd.f32 %v2052, %v2096
    %2098 = vdwg.mxu0
    %v2099 = vand.u32 %v1840, 4294901760
    %v2100 = vsub.f32 %v1840, %v2099
    %v2101 = vand.u32 %v2100, 4294901760
    %2102 = vmatpush.msra.mxu0 %v2101
    %v2103 = vand.u32 %v1839, 4294901760
    %v2104 = vsub.f32 %v1839, %v2103
    %v2105 = vand.u32 %v2104, 4294901760
    %2106 = vmatpush.msra.mxu0 %v2105
    %v2107 = vand.u32 %v1838, 4294901760
    %v2108 = vsub.f32 %v1838, %v2107
    %v2109 = vand.u32 %v2108, 4294901760
    %2110 = vmatpush.msra.mxu0 %v2109
    %v2111 = vand.u32 %v1837, 4294901760
    %v2112 = vsub.f32 %v1837, %v2111
    %v2113 = vand.u32 %v2112, 4294901760
    %2114 = vmatpush.msra.mxu0 %v2113
    %v2115 = vand.u32 %v1836, 4294901760
    %v2116 = vsub.f32 %v1836, %v2115
    %v2117 = vand.u32 %v2116, 4294901760
    %2118 = vmatpush.msra.mxu0 %v2117
    %v2119 = vand.u32 %v1835, 4294901760
    %v2120 = vsub.f32 %v1835, %v2119
    %v2121 = vand.u32 %v2120, 4294901760
    %2122 = vmatpush.msra.mxu0 %v2121
    %v2123 = vand.u32 %v1834, 4294901760
    %v2124 = vsub.f32 %v1834, %v2123
    %v2125 = vand.u32 %v2124, 4294901760
    %2126 = vmatpush.msra.mxu0 %v2125
    %v2127 = vand.u32 %v1833, 4294901760
    %v2128 = vsub.f32 %v1833, %v2127
    %v2129 = vand.u32 %v2128, 4294901760
    %2130 = vmatpush.msra.mxu0 %v2129
    %v2131 = vand.u32 %v1832, 4294901760
    %v2132 = vsub.f32 %v1832, %v2131
    %v2133 = vand.u32 %v2132, 4294901760
    %2134 = vmatpush.msra.mxu0 %v2133
    %v2135 = vand.u32 %v1831, 4294901760
    %v2136 = vsub.f32 %v1831, %v2135
    %v2137 = vand.u32 %v2136, 4294901760
    %2138 = vmatpush.msra.mxu0 %v2137
    %v2139 = vand.u32 %v1830, 4294901760
    %v2140 = vsub.f32 %v1830, %v2139
    %v2141 = vand.u32 %v2140, 4294901760
    %2142 = vmatpush.msra.mxu0 %v2141
    %v2143 = vand.u32 %v1829, 4294901760
    %v2144 = vsub.f32 %v1829, %v2143
    %v2145 = vand.u32 %v2144, 4294901760
    %2146 = vmatpush.msra.mxu0 %v2145
    %v2147 = vand.u32 %v1828, 4294901760
    %v2148 = vsub.f32 %v1828, %v2147
    %v2149 = vand.u32 %v2148, 4294901760
    %2150 = vmatpush.msra.mxu0 %v2149
    %v2151 = vand.u32 %v1827, 4294901760
    %v2152 = vsub.f32 %v1827, %v2151
    %v2153 = vand.u32 %v2152, 4294901760
    %2154 = vmatpush.msra.mxu0 %v2153
    %v2155 = vand.u32 %v1826, 4294901760
    %v2156 = vsub.f32 %v1826, %v2155
    %v2157 = vand.u32 %v2156, 4294901760
    %2158 = vmatpush.msra.mxu0 %v2157
    %v2159 = vand.u32 %v1825, 4294901760
    %v2160 = vsub.f32 %v1825, %v2159
    %v2161 = vand.u32 %v2160, 4294901760
    %2162 = vmatpush.msra.mxu0 %v2161
    %v2163 = vand.u32 %v1042, 4294901760
    %2164 = vmatmul.f32.gmra.mxu0 %v2163
    %v2165 = vpop.f32.mrf.mxu0
    %v2166 = vadd.f32 %v2091, %v2165
    %v2167 = vand.u32 %v1043, 4294901760
    %2168 = vmatmul.f32.gmra.mxu0 %v2167
    %v2169 = vpop.f32.mrf.mxu0
    %v2170 = vadd.f32 %v2097, %v2169
    %2171 = vdwg.mxu0
    %v2172 = vand.u32 %v1840, 4294901760
    %2173 = vmatpush.msra.mxu0 %v2172
    %v2174 = vand.u32 %v1839, 4294901760
    %2175 = vmatpush.msra.mxu0 %v2174
    %v2176 = vand.u32 %v1838, 4294901760
    %2177 = vmatpush.msra.mxu0 %v2176
    %v2178 = vand.u32 %v1837, 4294901760
    %2179 = vmatpush.msra.mxu0 %v2178
    %v2180 = vand.u32 %v1836, 4294901760
    %2181 = vmatpush.msra.mxu0 %v2180
    %v2182 = vand.u32 %v1835, 4294901760
    %2183 = vmatpush.msra.mxu0 %v2182
    %v2184 = vand.u32 %v1834, 4294901760
    %2185 = vmatpush.msra.mxu0 %v2184
    %v2186 = vand.u32 %v1833, 4294901760
    %2187 = vmatpush.msra.mxu0 %v2186
    %v2188 = vand.u32 %v1832, 4294901760
    %2189 = vmatpush.msra.mxu0 %v2188
    %v2190 = vand.u32 %v1831, 4294901760
    %2191 = vmatpush.msra.mxu0 %v2190
    %v2192 = vand.u32 %v1830, 4294901760
    %2193 = vmatpush.msra.mxu0 %v2192
    %v2194 = vand.u32 %v1829, 4294901760
    %2195 = vmatpush.msra.mxu0 %v2194
    %v2196 = vand.u32 %v1828, 4294901760
    %2197 = vmatpush.msra.mxu0 %v2196
    %v2198 = vand.u32 %v1827, 4294901760
    %2199 = vmatpush.msra.mxu0 %v2198
    %v2200 = vand.u32 %v1826, 4294901760
    %2201 = vmatpush.msra.mxu0 %v2200
    %v2202 = vand.u32 %v1825, 4294901760
    %2203 = vmatpush.msra.mxu0 %v2202
    %v2204 = vand.u32 %v1042, 4294901760
    %2205 = vmatmul.f32.gmra.mxu0 %v2204
    %v2206 = vpop.f32.mrf.mxu0
    %v2207 = vadd.f32 %v2166, %v2206
    %v2208 = vand.u32 %v1043, 4294901760
    %2209 = vmatmul.f32.gmra.mxu0 %v2208
    %v2210 = vpop.f32.mrf.mxu0
    %v2211 = vadd.f32 %v2170, %v2210
    %2212 = vdwg.mxu0
    %2213 = vmatpush.msra.mxu0 0.0
    %2214 = vmatpush.msra.mxu0 0.0
    %2215 = vmatpush.msra.mxu0 0.0
    %2216 = vmatpush.msra.mxu0 0.0
    %2217 = vmatpush.msra.mxu0 0.0
    %2218 = vmatpush.msra.mxu0 0.0
    %2219 = vmatpush.msra.mxu0 0.0
    %2220 = vmatpush.msra.mxu0 0.0
    %2221 = vmatpush.msra.mxu0 0.0
    %2222 = vmatpush.msra.mxu0 0.0
    %2223 = vmatpush.msra.mxu0 0.0
    %2224 = vmatpush.msra.mxu0 0.0
    %2225 = vmatpush.msra.mxu0 0.0
    %2226 = vmatpush.msra.mxu0 0.0
    %v2227 = vand.u32 %v2211, 4294901760
    %2228 = vmatpush.msra.mxu0 %v2227
    %v2229 = vand.u32 %v2207, 4294901760
    %2230 = vmatpush.msra.mxu0 %v2229
    %v2231 = vand.u32 %v450, 4294901760
    %v2232 = vsub.f32 %v450, %v2231
    %v2233 = vand.u32 %v2232, 4294901760
    %v2234 = vsub.f32 %v2232, %v2233
    %v2235 = vand.u32 %v2234, 4294901760
    %2236 = vmatmul.f32.gmra.mxu0 %v2235
    %v2237 = vpop.f32.mrf.mxu0
    %v2238 = vadd.f32 0.0, %v2237
    %v2239 = vand.u32 %v453, 4294901760
    %v2240 = vsub.f32 %v453, %v2239
    %v2241 = vand.u32 %v2240, 4294901760
    %v2242 = vsub.f32 %v2240, %v2241
    %v2243 = vand.u32 %v2242, 4294901760
    %2244 = vmatmul.f32.gmra.mxu0 %v2243
    %v2245 = vpop.f32.mrf.mxu0
    %v2246 = vadd.f32 0.0, %v2245
    %2247 = vdwg.mxu0
    %2248 = vmatpush.msra.mxu0 0.0
    %2249 = vmatpush.msra.mxu0 0.0
    %2250 = vmatpush.msra.mxu0 0.0
    %2251 = vmatpush.msra.mxu0 0.0
    %2252 = vmatpush.msra.mxu0 0.0
    %2253 = vmatpush.msra.mxu0 0.0
    %2254 = vmatpush.msra.mxu0 0.0
    %2255 = vmatpush.msra.mxu0 0.0
    %2256 = vmatpush.msra.mxu0 0.0
    %2257 = vmatpush.msra.mxu0 0.0
    %2258 = vmatpush.msra.mxu0 0.0
    %2259 = vmatpush.msra.mxu0 0.0
    %2260 = vmatpush.msra.mxu0 0.0
    %2261 = vmatpush.msra.mxu0 0.0
    %v2262 = vand.u32 %v2211, 4294901760
    %v2263 = vsub.f32 %v2211, %v2262
    %v2264 = vand.u32 %v2263, 4294901760
    %v2265 = vsub.f32 %v2263, %v2264
    %v2266 = vand.u32 %v2265, 4294901760
    %2267 = vmatpush.msra.mxu0 %v2266
    %v2268 = vand.u32 %v2207, 4294901760
    %v2269 = vsub.f32 %v2207, %v2268
    %v2270 = vand.u32 %v2269, 4294901760
    %v2271 = vsub.f32 %v2269, %v2270
    %v2272 = vand.u32 %v2271, 4294901760
    %2273 = vmatpush.msra.mxu0 %v2272
    %v2274 = vand.u32 %v450, 4294901760
    %2275 = vmatmul.f32.gmra.mxu0 %v2274
    %v2276 = vpop.f32.mrf.mxu0
    %v2277 = vadd.f32 %v2238, %v2276
    %v2278 = vand.u32 %v453, 4294901760
    %2279 = vmatmul.f32.gmra.mxu0 %v2278
    %v2280 = vpop.f32.mrf.mxu0
    %v2281 = vadd.f32 %v2246, %v2280
    %2282 = vdwg.mxu0
    %2283 = vmatpush.msra.mxu0 0.0
    %2284 = vmatpush.msra.mxu0 0.0
    %2285 = vmatpush.msra.mxu0 0.0
    %2286 = vmatpush.msra.mxu0 0.0
    %2287 = vmatpush.msra.mxu0 0.0
    %2288 = vmatpush.msra.mxu0 0.0
    %2289 = vmatpush.msra.mxu0 0.0
    %2290 = vmatpush.msra.mxu0 0.0
    %2291 = vmatpush.msra.mxu0 0.0
    %2292 = vmatpush.msra.mxu0 0.0
    %2293 = vmatpush.msra.mxu0 0.0
    %2294 = vmatpush.msra.mxu0 0.0
    %2295 = vmatpush.msra.mxu0 0.0
    %2296 = vmatpush.msra.mxu0 0.0
    %v2297 = vand.u32 %v2211, 4294901760
    %v2298 = vsub.f32 %v2211, %v2297
    %2299 = vmatpush.msra.mxu0 %v2298
    %v2300 = vand.u32 %v2207, 4294901760
    %v2301 = vsub.f32 %v2207, %v2300
    %2302 = vmatpush.msra.mxu0 %v2301
    %v2303 = vand.u32 %v450, 4294901760
    %v2304 = vsub.f32 %v450, %v2303
    %2305 = vmatmul.f32.gmra.mxu0 %v2304
    %v2306 = vpop.f32.mrf.mxu0
    %v2307 = vadd.f32 %v2277, %v2306
    %v2308 = vand.u32 %v453, 4294901760
    %v2309 = vsub.f32 %v453, %v2308
    %2310 = vmatmul.f32.gmra.mxu0 %v2309
    %v2311 = vpop.f32.mrf.mxu0
    %v2312 = vadd.f32 %v2281, %v2311
    %2313 = vdwg.mxu0
    %2314 = vmatpush.msra.mxu0 0.0
    %2315 = vmatpush.msra.mxu0 0.0
    %2316 = vmatpush.msra.mxu0 0.0
    %2317 = vmatpush.msra.mxu0 0.0
    %2318 = vmatpush.msra.mxu0 0.0
    %2319 = vmatpush.msra.mxu0 0.0
    %2320 = vmatpush.msra.mxu0 0.0
    %2321 = vmatpush.msra.mxu0 0.0
    %2322 = vmatpush.msra.mxu0 0.0
    %2323 = vmatpush.msra.mxu0 0.0
    %2324 = vmatpush.msra.mxu0 0.0
    %2325 = vmatpush.msra.mxu0 0.0
    %2326 = vmatpush.msra.mxu0 0.0
    %2327 = vmatpush.msra.mxu0 0.0
    %v2328 = vand.u32 %v2211, 4294901760
    %2329 = vmatpush.msra.mxu0 %v2328
    %v2330 = vand.u32 %v2207, 4294901760
    %2331 = vmatpush.msra.mxu0 %v2330
    %v2332 = vand.u32 %v450, 4294901760
    %v2333 = vsub.f32 %v450, %v2332
    %v2334 = vand.u32 %v2333, 4294901760
    %2335 = vmatmul.f32.gmra.mxu0 %v2334
    %v2336 = vpop.f32.mrf.mxu0
    %v2337 = vadd.f32 %v2307, %v2336
    %v2338 = vand.u32 %v453, 4294901760
    %v2339 = vsub.f32 %v453, %v2338
    %v2340 = vand.u32 %v2339, 4294901760
    %2341 = vmatmul.f32.gmra.mxu0 %v2340
    %v2342 = vpop.f32.mrf.mxu0
    %v2343 = vadd.f32 %v2312, %v2342
    %2344 = vdwg.mxu0
    %2345 = vmatpush.msra.mxu0 0.0
    %2346 = vmatpush.msra.mxu0 0.0
    %2347 = vmatpush.msra.mxu0 0.0
    %2348 = vmatpush.msra.mxu0 0.0
    %2349 = vmatpush.msra.mxu0 0.0
    %2350 = vmatpush.msra.mxu0 0.0
    %2351 = vmatpush.msra.mxu0 0.0
    %2352 = vmatpush.msra.mxu0 0.0
    %2353 = vmatpush.msra.mxu0 0.0
    %2354 = vmatpush.msra.mxu0 0.0
    %2355 = vmatpush.msra.mxu0 0.0
    %2356 = vmatpush.msra.mxu0 0.0
    %2357 = vmatpush.msra.mxu0 0.0
    %2358 = vmatpush.msra.mxu0 0.0
    %v2359 = vand.u32 %v2211, 4294901760
    %v2360 = vsub.f32 %v2211, %v2359
    %v2361 = vand.u32 %v2360, 4294901760
    %2362 = vmatpush.msra.mxu0 %v2361
    %v2363 = vand.u32 %v2207, 4294901760
    %v2364 = vsub.f32 %v2207, %v2363
    %v2365 = vand.u32 %v2364, 4294901760
    %2366 = vmatpush.msra.mxu0 %v2365
    %v2367 = vand.u32 %v450, 4294901760
    %2368 = vmatmul.f32.gmra.mxu0 %v2367
    %v2369 = vpop.f32.mrf.mxu0
    %v2370 = vadd.f32 %v2337, %v2369
    %v2371 = vand.u32 %v453, 4294901760
    %2372 = vmatmul.f32.gmra.mxu0 %v2371
    %v2373 = vpop.f32.mrf.mxu0
    %v2374 = vadd.f32 %v2343, %v2373
    %2375 = vdwg.mxu0
    %2376 = vmatpush.msra.mxu0 0.0
    %2377 = vmatpush.msra.mxu0 0.0
    %2378 = vmatpush.msra.mxu0 0.0
    %2379 = vmatpush.msra.mxu0 0.0
    %2380 = vmatpush.msra.mxu0 0.0
    %2381 = vmatpush.msra.mxu0 0.0
    %2382 = vmatpush.msra.mxu0 0.0
    %2383 = vmatpush.msra.mxu0 0.0
    %2384 = vmatpush.msra.mxu0 0.0
    %2385 = vmatpush.msra.mxu0 0.0
    %2386 = vmatpush.msra.mxu0 0.0
    %2387 = vmatpush.msra.mxu0 0.0
    %2388 = vmatpush.msra.mxu0 0.0
    %2389 = vmatpush.msra.mxu0 0.0
    %v2390 = vand.u32 %v2211, 4294901760
    %2391 = vmatpush.msra.mxu0 %v2390
    %v2392 = vand.u32 %v2207, 4294901760
    %2393 = vmatpush.msra.mxu0 %v2392
    %v2394 = vand.u32 %v450, 4294901760
    %2395 = vmatmul.f32.gmra.mxu0 %v2394
    %v2396 = vpop.f32.mrf.mxu0
    %v2397 = vadd.f32 %v2370, %v2396
    %v2398 = vand.u32 %v453, 4294901760
    %2399 = vmatmul.f32.gmra.mxu0 %v2398
    %v2400 = vpop.f32.mrf.mxu0
    %v2401 = vadd.f32 %v2374, %v2400
    %2402 = vdwg.mxu0
    %2403 = vmatpush.msra.mxu0 0.0
    %2404 = vmatpush.msra.mxu0 0.0
    %2405 = vmatpush.msra.mxu0 0.0
    %2406 = vmatpush.msra.mxu0 0.0
    %2407 = vmatpush.msra.mxu0 0.0
    %2408 = vmatpush.msra.mxu0 0.0
    %2409 = vmatpush.msra.mxu0 0.0
    %2410 = vmatpush.msra.mxu0 0.0
    %2411 = vmatpush.msra.mxu0 0.0
    %2412 = vmatpush.msra.mxu0 0.0
    %2413 = vmatpush.msra.mxu0 0.0
    %2414 = vmatpush.msra.mxu0 0.0
    %2415 = vmatpush.msra.mxu0 0.0
    %2416 = vmatpush.msra.mxu0 0.0
    %v2417 = vand.u32 %v1433, 4294901760
    %2418 = vmatpush.msra.mxu0 %v2417
    %v2419 = vand.u32 %v1429, 4294901760
    %2420 = vmatpush.msra.mxu0 %v2419
    %v2421 = vand.u32 %v646, 4294901760
    %v2422 = vsub.f32 %v646, %v2421
    %v2423 = vand.u32 %v2422, 4294901760
    %v2424 = vsub.f32 %v2422, %v2423
    %v2425 = vand.u32 %v2424, 4294901760
    %2426 = vmatmul.f32.gmra.mxu0 %v2425
    %v2427 = vpop.f32.mrf.mxu0
    %v2428 = vadd.f32 %v2397, %v2427
    %v2429 = vand.u32 %v649, 4294901760
    %v2430 = vsub.f32 %v649, %v2429
    %v2431 = vand.u32 %v2430, 4294901760
    %v2432 = vsub.f32 %v2430, %v2431
    %v2433 = vand.u32 %v2432, 4294901760
    %2434 = vmatmul.f32.gmra.mxu0 %v2433
    %v2435 = vpop.f32.mrf.mxu0
    %v2436 = vadd.f32 %v2401, %v2435
    %2437 = vdwg.mxu0
    %2438 = vmatpush.msra.mxu0 0.0
    %2439 = vmatpush.msra.mxu0 0.0
    %2440 = vmatpush.msra.mxu0 0.0
    %2441 = vmatpush.msra.mxu0 0.0
    %2442 = vmatpush.msra.mxu0 0.0
    %2443 = vmatpush.msra.mxu0 0.0
    %2444 = vmatpush.msra.mxu0 0.0
    %2445 = vmatpush.msra.mxu0 0.0
    %2446 = vmatpush.msra.mxu0 0.0
    %2447 = vmatpush.msra.mxu0 0.0
    %2448 = vmatpush.msra.mxu0 0.0
    %2449 = vmatpush.msra.mxu0 0.0
    %2450 = vmatpush.msra.mxu0 0.0
    %2451 = vmatpush.msra.mxu0 0.0
    %v2452 = vand.u32 %v1433, 4294901760
    %v2453 = vsub.f32 %v1433, %v2452
    %v2454 = vand.u32 %v2453, 4294901760
    %v2455 = vsub.f32 %v2453, %v2454
    %v2456 = vand.u32 %v2455, 4294901760
    %2457 = vmatpush.msra.mxu0 %v2456
    %v2458 = vand.u32 %v1429, 4294901760
    %v2459 = vsub.f32 %v1429, %v2458
    %v2460 = vand.u32 %v2459, 4294901760
    %v2461 = vsub.f32 %v2459, %v2460
    %v2462 = vand.u32 %v2461, 4294901760
    %2463 = vmatpush.msra.mxu0 %v2462
    %v2464 = vand.u32 %v646, 4294901760
    %2465 = vmatmul.f32.gmra.mxu0 %v2464
    %v2466 = vpop.f32.mrf.mxu0
    %v2467 = vadd.f32 %v2428, %v2466
    %v2468 = vand.u32 %v649, 4294901760
    %2469 = vmatmul.f32.gmra.mxu0 %v2468
    %v2470 = vpop.f32.mrf.mxu0
    %v2471 = vadd.f32 %v2436, %v2470
    %2472 = vdwg.mxu0
    %2473 = vmatpush.msra.mxu0 0.0
    %2474 = vmatpush.msra.mxu0 0.0
    %2475 = vmatpush.msra.mxu0 0.0
    %2476 = vmatpush.msra.mxu0 0.0
    %2477 = vmatpush.msra.mxu0 0.0
    %2478 = vmatpush.msra.mxu0 0.0
    %2479 = vmatpush.msra.mxu0 0.0
    %2480 = vmatpush.msra.mxu0 0.0
    %2481 = vmatpush.msra.mxu0 0.0
    %2482 = vmatpush.msra.mxu0 0.0
    %2483 = vmatpush.msra.mxu0 0.0
    %2484 = vmatpush.msra.mxu0 0.0
    %2485 = vmatpush.msra.mxu0 0.0
    %2486 = vmatpush.msra.mxu0 0.0
    %v2487 = vand.u32 %v1433, 4294901760
    %v2488 = vsub.f32 %v1433, %v2487
    %2489 = vmatpush.msra.mxu0 %v2488
    %v2490 = vand.u32 %v1429, 4294901760
    %v2491 = vsub.f32 %v1429, %v2490
    %2492 = vmatpush.msra.mxu0 %v2491
    %v2493 = vand.u32 %v646, 4294901760
    %v2494 = vsub.f32 %v646, %v2493
    %2495 = vmatmul.f32.gmra.mxu0 %v2494
    %v2496 = vpop.f32.mrf.mxu0
    %v2497 = vadd.f32 %v2467, %v2496
    %v2498 = vand.u32 %v649, 4294901760
    %v2499 = vsub.f32 %v649, %v2498
    %2500 = vmatmul.f32.gmra.mxu0 %v2499
    %v2501 = vpop.f32.mrf.mxu0
    %v2502 = vadd.f32 %v2471, %v2501
    %2503 = vdwg.mxu0
    %2504 = vmatpush.msra.mxu0 0.0
    %2505 = vmatpush.msra.mxu0 0.0
    %2506 = vmatpush.msra.mxu0 0.0
    %2507 = vmatpush.msra.mxu0 0.0
    %2508 = vmatpush.msra.mxu0 0.0
    %2509 = vmatpush.msra.mxu0 0.0
    %2510 = vmatpush.msra.mxu0 0.0
    %2511 = vmatpush.msra.mxu0 0.0
    %2512 = vmatpush.msra.mxu0 0.0
    %2513 = vmatpush.msra.mxu0 0.0
    %2514 = vmatpush.msra.mxu0 0.0
    %2515 = vmatpush.msra.mxu0 0.0
    %2516 = vmatpush.msra.mxu0 0.0
    %2517 = vmatpush.msra.mxu0 0.0
    %v2518 = vand.u32 %v1433, 4294901760
    %2519 = vmatpush.msra.mxu0 %v2518
    %v2520 = vand.u32 %v1429, 4294901760
    %2521 = vmatpush.msra.mxu0 %v2520
    %v2522 = vand.u32 %v646, 4294901760
    %v2523 = vsub.f32 %v646, %v2522
    %v2524 = vand.u32 %v2523, 4294901760
    %2525 = vmatmul.f32.gmra.mxu0 %v2524
    %v2526 = vpop.f32.mrf.mxu0
    %v2527 = vadd.f32 %v2497, %v2526
    %v2528 = vand.u32 %v649, 4294901760
    %v2529 = vsub.f32 %v649, %v2528
    %v2530 = vand.u32 %v2529, 4294901760
    %2531 = vmatmul.f32.gmra.mxu0 %v2530
    %v2532 = vpop.f32.mrf.mxu0
    %v2533 = vadd.f32 %v2502, %v2532
    %2534 = vdwg.mxu0
    %2535 = vmatpush.msra.mxu0 0.0
    %2536 = vmatpush.msra.mxu0 0.0
    %2537 = vmatpush.msra.mxu0 0.0
    %2538 = vmatpush.msra.mxu0 0.0
    %2539 = vmatpush.msra.mxu0 0.0
    %2540 = vmatpush.msra.mxu0 0.0
    %2541 = vmatpush.msra.mxu0 0.0
    %2542 = vmatpush.msra.mxu0 0.0
    %2543 = vmatpush.msra.mxu0 0.0
    %2544 = vmatpush.msra.mxu0 0.0
    %2545 = vmatpush.msra.mxu0 0.0
    %2546 = vmatpush.msra.mxu0 0.0
    %2547 = vmatpush.msra.mxu0 0.0
    %2548 = vmatpush.msra.mxu0 0.0
    %v2549 = vand.u32 %v1433, 4294901760
    %v2550 = vsub.f32 %v1433, %v2549
    %v2551 = vand.u32 %v2550, 4294901760
    %2552 = vmatpush.msra.mxu0 %v2551
    %v2553 = vand.u32 %v1429, 4294901760
    %v2554 = vsub.f32 %v1429, %v2553
    %v2555 = vand.u32 %v2554, 4294901760
    %2556 = vmatpush.msra.mxu0 %v2555
    %v2557 = vand.u32 %v646, 4294901760
    %2558 = vmatmul.f32.gmra.mxu0 %v2557
    %v2559 = vpop.f32.mrf.mxu0
    %v2560 = vadd.f32 %v2527, %v2559
    %v2561 = vand.u32 %v649, 4294901760
    %2562 = vmatmul.f32.gmra.mxu0 %v2561
    %v2563 = vpop.f32.mrf.mxu0
    %v2564 = vadd.f32 %v2533, %v2563
    %2565 = vdwg.mxu0
    %2566 = vmatpush.msra.mxu0 0.0
    %2567 = vmatpush.msra.mxu0 0.0
    %2568 = vmatpush.msra.mxu0 0.0
    %2569 = vmatpush.msra.mxu0 0.0
    %2570 = vmatpush.msra.mxu0 0.0
    %2571 = vmatpush.msra.mxu0 0.0
    %2572 = vmatpush.msra.mxu0 0.0
    %2573 = vmatpush.msra.mxu0 0.0
    %2574 = vmatpush.msra.mxu0 0.0
    %2575 = vmatpush.msra.mxu0 0.0
    %2576 = vmatpush.msra.mxu0 0.0
    %2577 = vmatpush.msra.mxu0 0.0
    %2578 = vmatpush.msra.mxu0 0.0
    %2579 = vmatpush.msra.mxu0 0.0
    %v2580 = vand.u32 %v1433, 4294901760
    %2581 = vmatpush.msra.mxu0 %v2580
    %v2582 = vand.u32 %v1429, 4294901760
    %2583 = vmatpush.msra.mxu0 %v2582
    %v2584 = vand.u32 %v646, 4294901760
    %2585 = vmatmul.f32.gmra.mxu0 %v2584
    %v2586 = vpop.f32.mrf.mxu0
    %v2587 = vadd.f32 %v2560, %v2586
    %v2588 = vand.u32 %v649, 4294901760
    %2589 = vmatmul.f32.gmra.mxu0 %v2588
    %v2590 = vpop.f32.mrf.mxu0
    %v2591 = vadd.f32 %v2564, %v2590
    %2592 = vdwg.mxu0
    %v2594 = vperm.slane %v1046, 0
    %v2596 = vadd.f32 %v2587, %v2594
    %v2597 = vadd.f32 %v2591, %v2594
    %2598 = vmatpush.msra.mxu0 0.0
    %2599 = vmatpush.msra.mxu0 0.0
    %2600 = vmatpush.msra.mxu0 0.0
    %2601 = vmatpush.msra.mxu0 0.0
    %2602 = vmatpush.msra.mxu0 0.0
    %2603 = vmatpush.msra.mxu0 0.0
    %2604 = vmatpush.msra.mxu0 0.0
    %2605 = vmatpush.msra.mxu0 0.0
    %2606 = vmatpush.msra.mxu0 0.0
    %2607 = vmatpush.msra.mxu0 0.0
    %2608 = vmatpush.msra.mxu0 0.0
    %2609 = vmatpush.msra.mxu0 0.0
    %2610 = vmatpush.msra.mxu0 0.0
    %2611 = vmatpush.msra.mxu0 0.0
    %v2612 = vand.u32 %v1822, 4294901760
    %2613 = vmatpush.msra.mxu0 %v2612
    %v2614 = vand.u32 %v1818, 4294901760
    %2615 = vmatpush.msra.mxu0 %v2614
    %v2616 = vand.u32 %v847, 4294901760
    %v2617 = vsub.f32 %v847, %v2616
    %v2618 = vand.u32 %v2617, 4294901760
    %v2619 = vsub.f32 %v2617, %v2618
    %v2620 = vand.u32 %v2619, 4294901760
    %2621 = vmatmul.f32.gmra.mxu0 %v2620
    %v2622 = vpop.f32.mrf.mxu0
    %v2623 = vadd.f32 %v2594, %v2622
    %v2624 = vand.u32 %v850, 4294901760
    %v2625 = vsub.f32 %v850, %v2624
    %v2626 = vand.u32 %v2625, 4294901760
    %v2627 = vsub.f32 %v2625, %v2626
    %v2628 = vand.u32 %v2627, 4294901760
    %2629 = vmatmul.f32.gmra.mxu0 %v2628
    %v2630 = vpop.f32.mrf.mxu0
    %v2631 = vadd.f32 %v2594, %v2630
    %2632 = vdwg.mxu0
    %2633 = vmatpush.msra.mxu0 0.0
    %2634 = vmatpush.msra.mxu0 0.0
    %2635 = vmatpush.msra.mxu0 0.0
    %2636 = vmatpush.msra.mxu0 0.0
    %2637 = vmatpush.msra.mxu0 0.0
    %2638 = vmatpush.msra.mxu0 0.0
    %2639 = vmatpush.msra.mxu0 0.0
    %2640 = vmatpush.msra.mxu0 0.0
    %2641 = vmatpush.msra.mxu0 0.0
    %2642 = vmatpush.msra.mxu0 0.0
    %2643 = vmatpush.msra.mxu0 0.0
    %2644 = vmatpush.msra.mxu0 0.0
    %2645 = vmatpush.msra.mxu0 0.0
    %2646 = vmatpush.msra.mxu0 0.0
    %v2647 = vand.u32 %v1822, 4294901760
    %v2648 = vsub.f32 %v1822, %v2647
    %v2649 = vand.u32 %v2648, 4294901760
    %v2650 = vsub.f32 %v2648, %v2649
    %v2651 = vand.u32 %v2650, 4294901760
    %2652 = vmatpush.msra.mxu0 %v2651
    %v2653 = vand.u32 %v1818, 4294901760
    %v2654 = vsub.f32 %v1818, %v2653
    %v2655 = vand.u32 %v2654, 4294901760
    %v2656 = vsub.f32 %v2654, %v2655
    %v2657 = vand.u32 %v2656, 4294901760
    %2658 = vmatpush.msra.mxu0 %v2657
    %v2659 = vand.u32 %v847, 4294901760
    %2660 = vmatmul.f32.gmra.mxu0 %v2659
    %v2661 = vpop.f32.mrf.mxu0
    %v2662 = vadd.f32 %v2623, %v2661
    %v2663 = vand.u32 %v850, 4294901760
    %2664 = vmatmul.f32.gmra.mxu0 %v2663
    %v2665 = vpop.f32.mrf.mxu0
    %v2666 = vadd.f32 %v2631, %v2665
    %2667 = vdwg.mxu0
    %2668 = vmatpush.msra.mxu0 0.0
    %2669 = vmatpush.msra.mxu0 0.0
    %2670 = vmatpush.msra.mxu0 0.0
    %2671 = vmatpush.msra.mxu0 0.0
    %2672 = vmatpush.msra.mxu0 0.0
    %2673 = vmatpush.msra.mxu0 0.0
    %2674 = vmatpush.msra.mxu0 0.0
    %2675 = vmatpush.msra.mxu0 0.0
    %2676 = vmatpush.msra.mxu0 0.0
    %2677 = vmatpush.msra.mxu0 0.0
    %2678 = vmatpush.msra.mxu0 0.0
    %2679 = vmatpush.msra.mxu0 0.0
    %2680 = vmatpush.msra.mxu0 0.0
    %2681 = vmatpush.msra.mxu0 0.0
    %v2682 = vand.u32 %v1822, 4294901760
    %v2683 = vsub.f32 %v1822, %v2682
    %2684 = vmatpush.msra.mxu0 %v2683
    %v2685 = vand.u32 %v1818, 4294901760
    %v2686 = vsub.f32 %v1818, %v2685
    %2687 = vmatpush.msra.mxu0 %v2686
    %v2688 = vand.u32 %v847, 4294901760
    %v2689 = vsub.f32 %v847, %v2688
    %2690 = vmatmul.f32.gmra.mxu0 %v2689
    %v2691 = vpop.f32.mrf.mxu0
    %v2692 = vadd.f32 %v2662, %v2691
    %v2693 = vand.u32 %v850, 4294901760
    %v2694 = vsub.f32 %v850, %v2693
    %2695 = vmatmul.f32.gmra.mxu0 %v2694
    %v2696 = vpop.f32.mrf.mxu0
    %v2697 = vadd.f32 %v2666, %v2696
    %2698 = vdwg.mxu0
    %2699 = vmatpush.msra.mxu0 0.0
    %2700 = vmatpush.msra.mxu0 0.0
    %2701 = vmatpush.msra.mxu0 0.0
    %2702 = vmatpush.msra.mxu0 0.0
    %2703 = vmatpush.msra.mxu0 0.0
    %2704 = vmatpush.msra.mxu0 0.0
    %2705 = vmatpush.msra.mxu0 0.0
    %2706 = vmatpush.msra.mxu0 0.0
    %2707 = vmatpush.msra.mxu0 0.0
    %2708 = vmatpush.msra.mxu0 0.0
    %2709 = vmatpush.msra.mxu0 0.0
    %2710 = vmatpush.msra.mxu0 0.0
    %2711 = vmatpush.msra.mxu0 0.0
    %2712 = vmatpush.msra.mxu0 0.0
    %v2713 = vand.u32 %v1822, 4294901760
    %2714 = vmatpush.msra.mxu0 %v2713
    %v2715 = vand.u32 %v1818, 4294901760
    %2716 = vmatpush.msra.mxu0 %v2715
    %v2717 = vand.u32 %v847, 4294901760
    %v2718 = vsub.f32 %v847, %v2717
    %v2719 = vand.u32 %v2718, 4294901760
    %2720 = vmatmul.f32.gmra.mxu0 %v2719
    %v2721 = vpop.f32.mrf.mxu0
    %v2722 = vadd.f32 %v2692, %v2721
    %v2723 = vand.u32 %v850, 4294901760
    %v2724 = vsub.f32 %v850, %v2723
    %v2725 = vand.u32 %v2724, 4294901760
    %2726 = vmatmul.f32.gmra.mxu0 %v2725
    %v2727 = vpop.f32.mrf.mxu0
    %v2728 = vadd.f32 %v2697, %v2727
    %2729 = vdwg.mxu0
    %2730 = vmatpush.msra.mxu0 0.0
    %2731 = vmatpush.msra.mxu0 0.0
    %2732 = vmatpush.msra.mxu0 0.0
    %2733 = vmatpush.msra.mxu0 0.0
    %2734 = vmatpush.msra.mxu0 0.0
    %2735 = vmatpush.msra.mxu0 0.0
    %2736 = vmatpush.msra.mxu0 0.0
    %2737 = vmatpush.msra.mxu0 0.0
    %2738 = vmatpush.msra.mxu0 0.0
    %2739 = vmatpush.msra.mxu0 0.0
    %2740 = vmatpush.msra.mxu0 0.0
    %2741 = vmatpush.msra.mxu0 0.0
    %2742 = vmatpush.msra.mxu0 0.0
    %2743 = vmatpush.msra.mxu0 0.0
    %v2744 = vand.u32 %v1822, 4294901760
    %v2745 = vsub.f32 %v1822, %v2744
    %v2746 = vand.u32 %v2745, 4294901760
    %2747 = vmatpush.msra.mxu0 %v2746
    %v2748 = vand.u32 %v1818, 4294901760
    %v2749 = vsub.f32 %v1818, %v2748
    %v2750 = vand.u32 %v2749, 4294901760
    %2751 = vmatpush.msra.mxu0 %v2750
    %v2752 = vand.u32 %v847, 4294901760
    %2753 = vmatmul.f32.gmra.mxu0 %v2752
    %v2754 = vpop.f32.mrf.mxu0
    %v2755 = vadd.f32 %v2722, %v2754
    %v2756 = vand.u32 %v850, 4294901760
    %2757 = vmatmul.f32.gmra.mxu0 %v2756
    %v2758 = vpop.f32.mrf.mxu0
    %v2759 = vadd.f32 %v2728, %v2758
    %2760 = vdwg.mxu0
    %2761 = vmatpush.msra.mxu0 0.0
    %2762 = vmatpush.msra.mxu0 0.0
    %2763 = vmatpush.msra.mxu0 0.0
    %2764 = vmatpush.msra.mxu0 0.0
    %2765 = vmatpush.msra.mxu0 0.0
    %2766 = vmatpush.msra.mxu0 0.0
    %2767 = vmatpush.msra.mxu0 0.0
    %2768 = vmatpush.msra.mxu0 0.0
    %2769 = vmatpush.msra.mxu0 0.0
    %2770 = vmatpush.msra.mxu0 0.0
    %2771 = vmatpush.msra.mxu0 0.0
    %2772 = vmatpush.msra.mxu0 0.0
    %2773 = vmatpush.msra.mxu0 0.0
    %2774 = vmatpush.msra.mxu0 0.0
    %v2775 = vand.u32 %v1822, 4294901760
    %2776 = vmatpush.msra.mxu0 %v2775
    %v2777 = vand.u32 %v1818, 4294901760
    %2778 = vmatpush.msra.mxu0 %v2777
    %v2779 = vand.u32 %v847, 4294901760
    %2780 = vmatmul.f32.gmra.mxu0 %v2779
    %v2781 = vpop.f32.mrf.mxu0
    %v2782 = vadd.f32 %v2755, %v2781
    %v2783 = vand.u32 %v850, 4294901760
    %2784 = vmatmul.f32.gmra.mxu0 %v2783
    %v2785 = vpop.f32.mrf.mxu0
    %v2786 = vadd.f32 %v2759, %v2785
    %2787 = vdwg.mxu0
    %v2788 = vmax.f32 %v2596, 0.0
    %v2789 = vmax.f32 %v2597, 0.0
    %v2790 = vmax.f32 %v2782, 0.0
    %v2791 = vmax.f32 %v2786, 0.0
    %v2792 = vld [vmem:[%s11] sm:$0x1]
    %v2793 = vld [vmem:[%s10] sm:$0xff]
    %v2794 = vld [vmem:[%s10 + $0x8] sm:$0xff]
    %v2795 = vld [vmem:[%s10 + $0x10] sm:$0xff]
    %v2796 = vld [vmem:[%s10 + $0x18] sm:$0xff]
    %v2797 = vld [vmem:[%s10 + $0x20] sm:$0xff]
    %v2798 = vld [vmem:[%s10 + $0x28] sm:$0xff]
    %v2799 = vld [vmem:[%s10 + $0x30] sm:$0xff]
    %v2800 = vld [vmem:[%s10 + $0x38] sm:$0xff]
    %v2801 = vld [vmem:[%s10 + $0x40] sm:$0xff]
    %v2802 = vld [vmem:[%s10 + $0x48] sm:$0xff]
    %v2803 = vld [vmem:[%s10 + $0x50] sm:$0xff]
    %v2804 = vld [vmem:[%s10 + $0x58] sm:$0xff]
    %v2805 = vld [vmem:[%s10 + $0x60] sm:$0xff]
    %v2806 = vld [vmem:[%s10 + $0x68] sm:$0xff]
    %v2807 = vld [vmem:[%s10 + $0x70] sm:$0xff]
    %v2808 = vld [vmem:[%s10 + $0x78] sm:$0xff]
    %v2809 = vand.u32 %v2808, 4294901760
    %2810 = vmatpush.msra.mxu0 %v2809
    %v2811 = vand.u32 %v2807, 4294901760
    %2812 = vmatpush.msra.mxu0 %v2811
    %v2813 = vand.u32 %v2806, 4294901760
    %2814 = vmatpush.msra.mxu0 %v2813
    %v2815 = vand.u32 %v2805, 4294901760
    %2816 = vmatpush.msra.mxu0 %v2815
    %v2817 = vand.u32 %v2804, 4294901760
    %2818 = vmatpush.msra.mxu0 %v2817
    %v2819 = vand.u32 %v2803, 4294901760
    %2820 = vmatpush.msra.mxu0 %v2819
    %v2821 = vand.u32 %v2802, 4294901760
    %2822 = vmatpush.msra.mxu0 %v2821
    %v2823 = vand.u32 %v2801, 4294901760
    %2824 = vmatpush.msra.mxu0 %v2823
    %v2825 = vand.u32 %v2800, 4294901760
    %2826 = vmatpush.msra.mxu0 %v2825
    %v2827 = vand.u32 %v2799, 4294901760
    %2828 = vmatpush.msra.mxu0 %v2827
    %v2829 = vand.u32 %v2798, 4294901760
    %2830 = vmatpush.msra.mxu0 %v2829
    %v2831 = vand.u32 %v2797, 4294901760
    %2832 = vmatpush.msra.mxu0 %v2831
    %v2833 = vand.u32 %v2796, 4294901760
    %2834 = vmatpush.msra.mxu0 %v2833
    %v2835 = vand.u32 %v2795, 4294901760
    %2836 = vmatpush.msra.mxu0 %v2835
    %v2837 = vand.u32 %v2794, 4294901760
    %2838 = vmatpush.msra.mxu0 %v2837
    %v2839 = vand.u32 %v2793, 4294901760
    %2840 = vmatpush.msra.mxu0 %v2839
    %v2841 = vand.u32 %v2790, 4294901760
    %v2842 = vsub.f32 %v2790, %v2841
    %v2843 = vand.u32 %v2842, 4294901760
    %v2844 = vsub.f32 %v2842, %v2843
    %v2845 = vand.u32 %v2844, 4294901760
    %2846 = vmatmul.f32.gmra.mxu0 %v2845
    %v2847 = vpop.f32.mrf.mxu0
    %v2848 = vadd.f32 0.0, %v2847
    %v2849 = vand.u32 %v2791, 4294901760
    %v2850 = vsub.f32 %v2791, %v2849
    %v2851 = vand.u32 %v2850, 4294901760
    %v2852 = vsub.f32 %v2850, %v2851
    %v2853 = vand.u32 %v2852, 4294901760
    %2854 = vmatmul.f32.gmra.mxu0 %v2853
    %v2855 = vpop.f32.mrf.mxu0
    %v2856 = vadd.f32 0.0, %v2855
    %2857 = vdwg.mxu0
    %v2858 = vand.u32 %v2808, 4294901760
    %v2859 = vsub.f32 %v2808, %v2858
    %v2860 = vand.u32 %v2859, 4294901760
    %v2861 = vsub.f32 %v2859, %v2860
    %v2862 = vand.u32 %v2861, 4294901760
    %2863 = vmatpush.msra.mxu0 %v2862
    %v2864 = vand.u32 %v2807, 4294901760
    %v2865 = vsub.f32 %v2807, %v2864
    %v2866 = vand.u32 %v2865, 4294901760
    %v2867 = vsub.f32 %v2865, %v2866
    %v2868 = vand.u32 %v2867, 4294901760
    %2869 = vmatpush.msra.mxu0 %v2868
    %v2870 = vand.u32 %v2806, 4294901760
    %v2871 = vsub.f32 %v2806, %v2870
    %v2872 = vand.u32 %v2871, 4294901760
    %v2873 = vsub.f32 %v2871, %v2872
    %v2874 = vand.u32 %v2873, 4294901760
    %2875 = vmatpush.msra.mxu0 %v2874
    %v2876 = vand.u32 %v2805, 4294901760
    %v2877 = vsub.f32 %v2805, %v2876
    %v2878 = vand.u32 %v2877, 4294901760
    %v2879 = vsub.f32 %v2877, %v2878
    %v2880 = vand.u32 %v2879, 4294901760
    %2881 = vmatpush.msra.mxu0 %v2880
    %v2882 = vand.u32 %v2804, 4294901760
    %v2883 = vsub.f32 %v2804, %v2882
    %v2884 = vand.u32 %v2883, 4294901760
    %v2885 = vsub.f32 %v2883, %v2884
    %v2886 = vand.u32 %v2885, 4294901760
    %2887 = vmatpush.msra.mxu0 %v2886
    %v2888 = vand.u32 %v2803, 4294901760
    %v2889 = vsub.f32 %v2803, %v2888
    %v2890 = vand.u32 %v2889, 4294901760
    %v2891 = vsub.f32 %v2889, %v2890
    %v2892 = vand.u32 %v2891, 4294901760
    %2893 = vmatpush.msra.mxu0 %v2892
    %v2894 = vand.u32 %v2802, 4294901760
    %v2895 = vsub.f32 %v2802, %v2894
    %v2896 = vand.u32 %v2895, 4294901760
    %v2897 = vsub.f32 %v2895, %v2896
    %v2898 = vand.u32 %v2897, 4294901760
    %2899 = vmatpush.msra.mxu0 %v2898
    %v2900 = vand.u32 %v2801, 4294901760
    %v2901 = vsub.f32 %v2801, %v2900
    %v2902 = vand.u32 %v2901, 4294901760
    %v2903 = vsub.f32 %v2901, %v2902
    %v2904 = vand.u32 %v2903, 4294901760
    %2905 = vmatpush.msra.mxu0 %v2904
    %v2906 = vand.u32 %v2800, 4294901760
    %v2907 = vsub.f32 %v2800, %v2906
    %v2908 = vand.u32 %v2907, 4294901760
    %v2909 = vsub.f32 %v2907, %v2908
    %v2910 = vand.u32 %v2909, 4294901760
    %2911 = vmatpush.msra.mxu0 %v2910
    %v2912 = vand.u32 %v2799, 4294901760
    %v2913 = vsub.f32 %v2799, %v2912
    %v2914 = vand.u32 %v2913, 4294901760
    %v2915 = vsub.f32 %v2913, %v2914
    %v2916 = vand.u32 %v2915, 4294901760
    %2917 = vmatpush.msra.mxu0 %v2916
    %v2918 = vand.u32 %v2798, 4294901760
    %v2919 = vsub.f32 %v2798, %v2918
    %v2920 = vand.u32 %v2919, 4294901760
    %v2921 = vsub.f32 %v2919, %v2920
    %v2922 = vand.u32 %v2921, 4294901760
    %2923 = vmatpush.msra.mxu0 %v2922
    %v2924 = vand.u32 %v2797, 4294901760
    %v2925 = vsub.f32 %v2797, %v2924
    %v2926 = vand.u32 %v2925, 4294901760
    %v2927 = vsub.f32 %v2925, %v2926
    %v2928 = vand.u32 %v2927, 4294901760
    %2929 = vmatpush.msra.mxu0 %v2928
    %v2930 = vand.u32 %v2796, 4294901760
    %v2931 = vsub.f32 %v2796, %v2930
    %v2932 = vand.u32 %v2931, 4294901760
    %v2933 = vsub.f32 %v2931, %v2932
    %v2934 = vand.u32 %v2933, 4294901760
    %2935 = vmatpush.msra.mxu0 %v2934
    %v2936 = vand.u32 %v2795, 4294901760
    %v2937 = vsub.f32 %v2795, %v2936
    %v2938 = vand.u32 %v2937, 4294901760
    %v2939 = vsub.f32 %v2937, %v2938
    %v2940 = vand.u32 %v2939, 4294901760
    %2941 = vmatpush.msra.mxu0 %v2940
    %v2942 = vand.u32 %v2794, 4294901760
    %v2943 = vsub.f32 %v2794, %v2942
    %v2944 = vand.u32 %v2943, 4294901760
    %v2945 = vsub.f32 %v2943, %v2944
    %v2946 = vand.u32 %v2945, 4294901760
    %2947 = vmatpush.msra.mxu0 %v2946
    %v2948 = vand.u32 %v2793, 4294901760
    %v2949 = vsub.f32 %v2793, %v2948
    %v2950 = vand.u32 %v2949, 4294901760
    %v2951 = vsub.f32 %v2949, %v2950
    %v2952 = vand.u32 %v2951, 4294901760
    %2953 = vmatpush.msra.mxu0 %v2952
    %v2954 = vand.u32 %v2790, 4294901760
    %2955 = vmatmul.f32.gmra.mxu0 %v2954
    %v2956 = vpop.f32.mrf.mxu0
    %v2957 = vadd.f32 %v2848, %v2956
    %v2958 = vand.u32 %v2791, 4294901760
    %2959 = vmatmul.f32.gmra.mxu0 %v2958
    %v2960 = vpop.f32.mrf.mxu0
    %v2961 = vadd.f32 %v2856, %v2960
    %2962 = vdwg.mxu0
    %v2963 = vand.u32 %v2808, 4294901760
    %v2964 = vsub.f32 %v2808, %v2963
    %2965 = vmatpush.msra.mxu0 %v2964
    %v2966 = vand.u32 %v2807, 4294901760
    %v2967 = vsub.f32 %v2807, %v2966
    %2968 = vmatpush.msra.mxu0 %v2967
    %v2969 = vand.u32 %v2806, 4294901760
    %v2970 = vsub.f32 %v2806, %v2969
    %2971 = vmatpush.msra.mxu0 %v2970
    %v2972 = vand.u32 %v2805, 4294901760
    %v2973 = vsub.f32 %v2805, %v2972
    %2974 = vmatpush.msra.mxu0 %v2973
    %v2975 = vand.u32 %v2804, 4294901760
    %v2976 = vsub.f32 %v2804, %v2975
    %2977 = vmatpush.msra.mxu0 %v2976
    %v2978 = vand.u32 %v2803, 4294901760
    %v2979 = vsub.f32 %v2803, %v2978
    %2980 = vmatpush.msra.mxu0 %v2979
    %v2981 = vand.u32 %v2802, 4294901760
    %v2982 = vsub.f32 %v2802, %v2981
    %2983 = vmatpush.msra.mxu0 %v2982
    %v2984 = vand.u32 %v2801, 4294901760
    %v2985 = vsub.f32 %v2801, %v2984
    %2986 = vmatpush.msra.mxu0 %v2985
    %v2987 = vand.u32 %v2800, 4294901760
    %v2988 = vsub.f32 %v2800, %v2987
    %2989 = vmatpush.msra.mxu0 %v2988
    %v2990 = vand.u32 %v2799, 4294901760
    %v2991 = vsub.f32 %v2799, %v2990
    %2992 = vmatpush.msra.mxu0 %v2991
    %v2993 = vand.u32 %v2798, 4294901760
    %v2994 = vsub.f32 %v2798, %v2993
    %2995 = vmatpush.msra.mxu0 %v2994
    %v2996 = vand.u32 %v2797, 4294901760
    %v2997 = vsub.f32 %v2797, %v2996
    %2998 = vmatpush.msra.mxu0 %v2997
    %v2999 = vand.u32 %v2796, 4294901760
    %v3000 = vsub.f32 %v2796, %v2999
    %3001 = vmatpush.msra.mxu0 %v3000
    %v3002 = vand.u32 %v2795, 4294901760
    %v3003 = vsub.f32 %v2795, %v3002
    %3004 = vmatpush.msra.mxu0 %v3003
    %v3005 = vand.u32 %v2794, 4294901760
    %v3006 = vsub.f32 %v2794, %v3005
    %3007 = vmatpush.msra.mxu0 %v3006
    %v3008 = vand.u32 %v2793, 4294901760
    %v3009 = vsub.f32 %v2793, %v3008
    %3010 = vmatpush.msra.mxu0 %v3009
    %v3011 = vand.u32 %v2790, 4294901760
    %v3012 = vsub.f32 %v2790, %v3011
    %3013 = vmatmul.f32.gmra.mxu0 %v3012
    %v3014 = vpop.f32.mrf.mxu0
    %v3015 = vadd.f32 %v2957, %v3014
    %v3016 = vand.u32 %v2791, 4294901760
    %v3017 = vsub.f32 %v2791, %v3016
    %3018 = vmatmul.f32.gmra.mxu0 %v3017
    %v3019 = vpop.f32.mrf.mxu0
    %v3020 = vadd.f32 %v2961, %v3019
    %3021 = vdwg.mxu0
    %v3022 = vand.u32 %v2808, 4294901760
    %3023 = vmatpush.msra.mxu0 %v3022
    %v3024 = vand.u32 %v2807, 4294901760
    %3025 = vmatpush.msra.mxu0 %v3024
    %v3026 = vand.u32 %v2806, 4294901760
    %3027 = vmatpush.msra.mxu0 %v3026
    %v3028 = vand.u32 %v2805, 4294901760
    %3029 = vmatpush.msra.mxu0 %v3028
    %v3030 = vand.u32 %v2804, 4294901760
    %3031 = vmatpush.msra.mxu0 %v3030
    %v3032 = vand.u32 %v2803, 4294901760
    %3033 = vmatpush.msra.mxu0 %v3032
    %v3034 = vand.u32 %v2802, 4294901760
    %3035 = vmatpush.msra.mxu0 %v3034
    %v3036 = vand.u32 %v2801, 4294901760
    %3037 = vmatpush.msra.mxu0 %v3036
    %v3038 = vand.u32 %v2800, 4294901760
    %3039 = vmatpush.msra.mxu0 %v3038
    %v3040 = vand.u32 %v2799, 4294901760
    %3041 = vmatpush.msra.mxu0 %v3040
    %v3042 = vand.u32 %v2798, 4294901760
    %3043 = vmatpush.msra.mxu0 %v3042
    %v3044 = vand.u32 %v2797, 4294901760
    %3045 = vmatpush.msra.mxu0 %v3044
    %v3046 = vand.u32 %v2796, 4294901760
    %3047 = vmatpush.msra.mxu0 %v3046
    %v3048 = vand.u32 %v2795, 4294901760
    %3049 = vmatpush.msra.mxu0 %v3048
    %v3050 = vand.u32 %v2794, 4294901760
    %3051 = vmatpush.msra.mxu0 %v3050
    %v3052 = vand.u32 %v2793, 4294901760
    %3053 = vmatpush.msra.mxu0 %v3052
    %v3054 = vand.u32 %v2790, 4294901760
    %v3055 = vsub.f32 %v2790, %v3054
    %v3056 = vand.u32 %v3055, 4294901760
    %3057 = vmatmul.f32.gmra.mxu0 %v3056
    %v3058 = vpop.f32.mrf.mxu0
    %v3059 = vadd.f32 %v3015, %v3058
    %v3060 = vand.u32 %v2791, 4294901760
    %v3061 = vsub.f32 %v2791, %v3060
    %v3062 = vand.u32 %v3061, 4294901760
    %3063 = vmatmul.f32.gmra.mxu0 %v3062
    %v3064 = vpop.f32.mrf.mxu0
    %v3065 = vadd.f32 %v3020, %v3064
    %3066 = vdwg.mxu0
    %v3067 = vand.u32 %v2808, 4294901760
    %v3068 = vsub.f32 %v2808, %v3067
    %v3069 = vand.u32 %v3068, 4294901760
    %3070 = vmatpush.msra.mxu0 %v3069
    %v3071 = vand.u32 %v2807, 4294901760
    %v3072 = vsub.f32 %v2807, %v3071
    %v3073 = vand.u32 %v3072, 4294901760
    %3074 = vmatpush.msra.mxu0 %v3073
    %v3075 = vand.u32 %v2806, 4294901760
    %v3076 = vsub.f32 %v2806, %v3075
    %v3077 = vand.u32 %v3076, 4294901760
    %3078 = vmatpush.msra.mxu0 %v3077
    %v3079 = vand.u32 %v2805, 4294901760
    %v3080 = vsub.f32 %v2805, %v3079
    %v3081 = vand.u32 %v3080, 4294901760
    %3082 = vmatpush.msra.mxu0 %v3081
    %v3083 = vand.u32 %v2804, 4294901760
    %v3084 = vsub.f32 %v2804, %v3083
    %v3085 = vand.u32 %v3084, 4294901760
    %3086 = vmatpush.msra.mxu0 %v3085
    %v3087 = vand.u32 %v2803, 4294901760
    %v3088 = vsub.f32 %v2803, %v3087
    %v3089 = vand.u32 %v3088, 4294901760
    %3090 = vmatpush.msra.mxu0 %v3089
    %v3091 = vand.u32 %v2802, 4294901760
    %v3092 = vsub.f32 %v2802, %v3091
    %v3093 = vand.u32 %v3092, 4294901760
    %3094 = vmatpush.msra.mxu0 %v3093
    %v3095 = vand.u32 %v2801, 4294901760
    %v3096 = vsub.f32 %v2801, %v3095
    %v3097 = vand.u32 %v3096, 4294901760
    %3098 = vmatpush.msra.mxu0 %v3097
    %v3099 = vand.u32 %v2800, 4294901760
    %v3100 = vsub.f32 %v2800, %v3099
    %v3101 = vand.u32 %v3100, 4294901760
    %3102 = vmatpush.msra.mxu0 %v3101
    %v3103 = vand.u32 %v2799, 4294901760
    %v3104 = vsub.f32 %v2799, %v3103
    %v3105 = vand.u32 %v3104, 4294901760
    %3106 = vmatpush.msra.mxu0 %v3105
    %v3107 = vand.u32 %v2798, 4294901760
    %v3108 = vsub.f32 %v2798, %v3107
    %v3109 = vand.u32 %v3108, 4294901760
    %3110 = vmatpush.msra.mxu0 %v3109
    %v3111 = vand.u32 %v2797, 4294901760
    %v3112 = vsub.f32 %v2797, %v3111
    %v3113 = vand.u32 %v3112, 4294901760
    %3114 = vmatpush.msra.mxu0 %v3113
    %v3115 = vand.u32 %v2796, 4294901760
    %v3116 = vsub.f32 %v2796, %v3115
    %v3117 = vand.u32 %v3116, 4294901760
    %3118 = vmatpush.msra.mxu0 %v3117
    %v3119 = vand.u32 %v2795, 4294901760
    %v3120 = vsub.f32 %v2795, %v3119
    %v3121 = vand.u32 %v3120, 4294901760
    %3122 = vmatpush.msra.mxu0 %v3121
    %v3123 = vand.u32 %v2794, 4294901760
    %v3124 = vsub.f32 %v2794, %v3123
    %v3125 = vand.u32 %v3124, 4294901760
    %3126 = vmatpush.msra.mxu0 %v3125
    %v3127 = vand.u32 %v2793, 4294901760
    %v3128 = vsub.f32 %v2793, %v3127
    %v3129 = vand.u32 %v3128, 4294901760
    %3130 = vmatpush.msra.mxu0 %v3129
    %v3131 = vand.u32 %v2790, 4294901760
    %3132 = vmatmul.f32.gmra.mxu0 %v3131
    %v3133 = vpop.f32.mrf.mxu0
    %v3134 = vadd.f32 %v3059, %v3133
    %v3135 = vand.u32 %v2791, 4294901760
    %3136 = vmatmul.f32.gmra.mxu0 %v3135
    %v3137 = vpop.f32.mrf.mxu0
    %v3138 = vadd.f32 %v3065, %v3137
    %3139 = vdwg.mxu0
    %v3140 = vand.u32 %v2808, 4294901760
    %3141 = vmatpush.msra.mxu0 %v3140
    %v3142 = vand.u32 %v2807, 4294901760
    %3143 = vmatpush.msra.mxu0 %v3142
    %v3144 = vand.u32 %v2806, 4294901760
    %3145 = vmatpush.msra.mxu0 %v3144
    %v3146 = vand.u32 %v2805, 4294901760
    %3147 = vmatpush.msra.mxu0 %v3146
    %v3148 = vand.u32 %v2804, 4294901760
    %3149 = vmatpush.msra.mxu0 %v3148
    %v3150 = vand.u32 %v2803, 4294901760
    %3151 = vmatpush.msra.mxu0 %v3150
    %v3152 = vand.u32 %v2802, 4294901760
    %3153 = vmatpush.msra.mxu0 %v3152
    %v3154 = vand.u32 %v2801, 4294901760
    %3155 = vmatpush.msra.mxu0 %v3154
    %v3156 = vand.u32 %v2800, 4294901760
    %3157 = vmatpush.msra.mxu0 %v3156
    %v3158 = vand.u32 %v2799, 4294901760
    %3159 = vmatpush.msra.mxu0 %v3158
    %v3160 = vand.u32 %v2798, 4294901760
    %3161 = vmatpush.msra.mxu0 %v3160
    %v3162 = vand.u32 %v2797, 4294901760
    %3163 = vmatpush.msra.mxu0 %v3162
    %v3164 = vand.u32 %v2796, 4294901760
    %3165 = vmatpush.msra.mxu0 %v3164
    %v3166 = vand.u32 %v2795, 4294901760
    %3167 = vmatpush.msra.mxu0 %v3166
    %v3168 = vand.u32 %v2794, 4294901760
    %3169 = vmatpush.msra.mxu0 %v3168
    %v3170 = vand.u32 %v2793, 4294901760
    %3171 = vmatpush.msra.mxu0 %v3170
    %v3172 = vand.u32 %v2790, 4294901760
    %3173 = vmatmul.f32.gmra.mxu0 %v3172
    %v3174 = vpop.f32.mrf.mxu0
    %v3175 = vadd.f32 %v3134, %v3174
    %v3176 = vand.u32 %v2791, 4294901760
    %3177 = vmatmul.f32.gmra.mxu0 %v3176
    %v3178 = vpop.f32.mrf.mxu0
    %v3179 = vadd.f32 %v3138, %v3178
    %3180 = vdwg.mxu0
    %s3181 = scalar_lea.vmem %s10, 128
    %v3182 = vld [vmem:[%s3181] sm:$0xff]
    %v3183 = vld [vmem:[%s3181 + $0x8] sm:$0xff]
    %v3184 = vld [vmem:[%s3181 + $0x10] sm:$0xff]
    %v3185 = vld [vmem:[%s3181 + $0x18] sm:$0xff]
    %v3186 = vld [vmem:[%s3181 + $0x20] sm:$0xff]
    %v3187 = vld [vmem:[%s3181 + $0x28] sm:$0xff]
    %v3188 = vld [vmem:[%s3181 + $0x30] sm:$0xff]
    %v3189 = vld [vmem:[%s3181 + $0x38] sm:$0xff]
    %v3190 = vld [vmem:[%s3181 + $0x40] sm:$0xff]
    %v3191 = vld [vmem:[%s3181 + $0x48] sm:$0xff]
    %v3192 = vld [vmem:[%s3181 + $0x50] sm:$0xff]
    %v3193 = vld [vmem:[%s3181 + $0x58] sm:$0xff]
    %v3194 = vld [vmem:[%s3181 + $0x60] sm:$0xff]
    %v3195 = vld [vmem:[%s3181 + $0x68] sm:$0xff]
    %v3196 = vld [vmem:[%s3181 + $0x70] sm:$0xff]
    %v3197 = vld [vmem:[%s3181 + $0x78] sm:$0xff]
    %v3198 = vand.u32 %v3197, 4294901760
    %3199 = vmatpush.msra.mxu0 %v3198
    %v3200 = vand.u32 %v3196, 4294901760
    %3201 = vmatpush.msra.mxu0 %v3200
    %v3202 = vand.u32 %v3195, 4294901760
    %3203 = vmatpush.msra.mxu0 %v3202
    %v3204 = vand.u32 %v3194, 4294901760
    %3205 = vmatpush.msra.mxu0 %v3204
    %v3206 = vand.u32 %v3193, 4294901760
    %3207 = vmatpush.msra.mxu0 %v3206
    %v3208 = vand.u32 %v3192, 4294901760
    %3209 = vmatpush.msra.mxu0 %v3208
    %v3210 = vand.u32 %v3191, 4294901760
    %3211 = vmatpush.msra.mxu0 %v3210
    %v3212 = vand.u32 %v3190, 4294901760
    %3213 = vmatpush.msra.mxu0 %v3212
    %v3214 = vand.u32 %v3189, 4294901760
    %3215 = vmatpush.msra.mxu0 %v3214
    %v3216 = vand.u32 %v3188, 4294901760
    %3217 = vmatpush.msra.mxu0 %v3216
    %v3218 = vand.u32 %v3187, 4294901760
    %3219 = vmatpush.msra.mxu0 %v3218
    %v3220 = vand.u32 %v3186, 4294901760
    %3221 = vmatpush.msra.mxu0 %v3220
    %v3222 = vand.u32 %v3185, 4294901760
    %3223 = vmatpush.msra.mxu0 %v3222
    %v3224 = vand.u32 %v3184, 4294901760
    %3225 = vmatpush.msra.mxu0 %v3224
    %v3226 = vand.u32 %v3183, 4294901760
    %3227 = vmatpush.msra.mxu0 %v3226
    %v3228 = vand.u32 %v3182, 4294901760
    %3229 = vmatpush.msra.mxu0 %v3228
    %v3230 = vand.u32 %v2788, 4294901760
    %v3231 = vsub.f32 %v2788, %v3230
    %v3232 = vand.u32 %v3231, 4294901760
    %v3233 = vsub.f32 %v3231, %v3232
    %v3234 = vand.u32 %v3233, 4294901760
    %3235 = vmatmul.f32.gmra.mxu0 %v3234
    %v3236 = vpop.f32.mrf.mxu0
    %v3237 = vadd.f32 0.0, %v3236
    %v3238 = vand.u32 %v2789, 4294901760
    %v3239 = vsub.f32 %v2789, %v3238
    %v3240 = vand.u32 %v3239, 4294901760
    %v3241 = vsub.f32 %v3239, %v3240
    %v3242 = vand.u32 %v3241, 4294901760
    %3243 = vmatmul.f32.gmra.mxu0 %v3242
    %v3244 = vpop.f32.mrf.mxu0
    %v3245 = vadd.f32 0.0, %v3244
    %3246 = vdwg.mxu0
    %v3247 = vand.u32 %v3197, 4294901760
    %v3248 = vsub.f32 %v3197, %v3247
    %v3249 = vand.u32 %v3248, 4294901760
    %v3250 = vsub.f32 %v3248, %v3249
    %v3251 = vand.u32 %v3250, 4294901760
    %3252 = vmatpush.msra.mxu0 %v3251
    %v3253 = vand.u32 %v3196, 4294901760
    %v3254 = vsub.f32 %v3196, %v3253
    %v3255 = vand.u32 %v3254, 4294901760
    %v3256 = vsub.f32 %v3254, %v3255
    %v3257 = vand.u32 %v3256, 4294901760
    %3258 = vmatpush.msra.mxu0 %v3257
    %v3259 = vand.u32 %v3195, 4294901760
    %v3260 = vsub.f32 %v3195, %v3259
    %v3261 = vand.u32 %v3260, 4294901760
    %v3262 = vsub.f32 %v3260, %v3261
    %v3263 = vand.u32 %v3262, 4294901760
    %3264 = vmatpush.msra.mxu0 %v3263
    %v3265 = vand.u32 %v3194, 4294901760
    %v3266 = vsub.f32 %v3194, %v3265
    %v3267 = vand.u32 %v3266, 4294901760
    %v3268 = vsub.f32 %v3266, %v3267
    %v3269 = vand.u32 %v3268, 4294901760
    %3270 = vmatpush.msra.mxu0 %v3269
    %v3271 = vand.u32 %v3193, 4294901760
    %v3272 = vsub.f32 %v3193, %v3271
    %v3273 = vand.u32 %v3272, 4294901760
    %v3274 = vsub.f32 %v3272, %v3273
    %v3275 = vand.u32 %v3274, 4294901760
    %3276 = vmatpush.msra.mxu0 %v3275
    %v3277 = vand.u32 %v3192, 4294901760
    %v3278 = vsub.f32 %v3192, %v3277
    %v3279 = vand.u32 %v3278, 4294901760
    %v3280 = vsub.f32 %v3278, %v3279
    %v3281 = vand.u32 %v3280, 4294901760
    %3282 = vmatpush.msra.mxu0 %v3281
    %v3283 = vand.u32 %v3191, 4294901760
    %v3284 = vsub.f32 %v3191, %v3283
    %v3285 = vand.u32 %v3284, 4294901760
    %v3286 = vsub.f32 %v3284, %v3285
    %v3287 = vand.u32 %v3286, 4294901760
    %3288 = vmatpush.msra.mxu0 %v3287
    %v3289 = vand.u32 %v3190, 4294901760
    %v3290 = vsub.f32 %v3190, %v3289
    %v3291 = vand.u32 %v3290, 4294901760
    %v3292 = vsub.f32 %v3290, %v3291
    %v3293 = vand.u32 %v3292, 4294901760
    %3294 = vmatpush.msra.mxu0 %v3293
    %v3295 = vand.u32 %v3189, 4294901760
    %v3296 = vsub.f32 %v3189, %v3295
    %v3297 = vand.u32 %v3296, 4294901760
    %v3298 = vsub.f32 %v3296, %v3297
    %v3299 = vand.u32 %v3298, 4294901760
    %3300 = vmatpush.msra.mxu0 %v3299
    %v3301 = vand.u32 %v3188, 4294901760
    %v3302 = vsub.f32 %v3188, %v3301
    %v3303 = vand.u32 %v3302, 4294901760
    %v3304 = vsub.f32 %v3302, %v3303
    %v3305 = vand.u32 %v3304, 4294901760
    %3306 = vmatpush.msra.mxu0 %v3305
    %v3307 = vand.u32 %v3187, 4294901760
    %v3308 = vsub.f32 %v3187, %v3307
    %v3309 = vand.u32 %v3308, 4294901760
    %v3310 = vsub.f32 %v3308, %v3309
    %v3311 = vand.u32 %v3310, 4294901760
    %3312 = vmatpush.msra.mxu0 %v3311
    %v3313 = vand.u32 %v3186, 4294901760
    %v3314 = vsub.f32 %v3186, %v3313
    %v3315 = vand.u32 %v3314, 4294901760
    %v3316 = vsub.f32 %v3314, %v3315
    %v3317 = vand.u32 %v3316, 4294901760
    %3318 = vmatpush.msra.mxu0 %v3317
    %v3319 = vand.u32 %v3185, 4294901760
    %v3320 = vsub.f32 %v3185, %v3319
    %v3321 = vand.u32 %v3320, 4294901760
    %v3322 = vsub.f32 %v3320, %v3321
    %v3323 = vand.u32 %v3322, 4294901760
    %3324 = vmatpush.msra.mxu0 %v3323
    %v3325 = vand.u32 %v3184, 4294901760
    %v3326 = vsub.f32 %v3184, %v3325
    %v3327 = vand.u32 %v3326, 4294901760
    %v3328 = vsub.f32 %v3326, %v3327
    %v3329 = vand.u32 %v3328, 4294901760
    %3330 = vmatpush.msra.mxu0 %v3329
    %v3331 = vand.u32 %v3183, 4294901760
    %v3332 = vsub.f32 %v3183, %v3331
    %v3333 = vand.u32 %v3332, 4294901760
    %v3334 = vsub.f32 %v3332, %v3333
    %v3335 = vand.u32 %v3334, 4294901760
    %3336 = vmatpush.msra.mxu0 %v3335
    %v3337 = vand.u32 %v3182, 4294901760
    %v3338 = vsub.f32 %v3182, %v3337
    %v3339 = vand.u32 %v3338, 4294901760
    %v3340 = vsub.f32 %v3338, %v3339
    %v3341 = vand.u32 %v3340, 4294901760
    %3342 = vmatpush.msra.mxu0 %v3341
    %v3343 = vand.u32 %v2788, 4294901760
    %3344 = vmatmul.f32.gmra.mxu0 %v3343
    %v3345 = vpop.f32.mrf.mxu0
    %v3346 = vadd.f32 %v3237, %v3345
    %v3347 = vand.u32 %v2789, 4294901760
    %3348 = vmatmul.f32.gmra.mxu0 %v3347
    %v3349 = vpop.f32.mrf.mxu0
    %v3350 = vadd.f32 %v3245, %v3349
    %3351 = vdwg.mxu0
    %v3352 = vand.u32 %v3197, 4294901760
    %v3353 = vsub.f32 %v3197, %v3352
    %3354 = vmatpush.msra.mxu0 %v3353
    %v3355 = vand.u32 %v3196, 4294901760
    %v3356 = vsub.f32 %v3196, %v3355
    %3357 = vmatpush.msra.mxu0 %v3356
    %v3358 = vand.u32 %v3195, 4294901760
    %v3359 = vsub.f32 %v3195, %v3358
    %3360 = vmatpush.msra.mxu0 %v3359
    %v3361 = vand.u32 %v3194, 4294901760
    %v3362 = vsub.f32 %v3194, %v3361
    %3363 = vmatpush.msra.mxu0 %v3362
    %v3364 = vand.u32 %v3193, 4294901760
    %v3365 = vsub.f32 %v3193, %v3364
    %3366 = vmatpush.msra.mxu0 %v3365
    %v3367 = vand.u32 %v3192, 4294901760
    %v3368 = vsub.f32 %v3192, %v3367
    %3369 = vmatpush.msra.mxu0 %v3368
    %v3370 = vand.u32 %v3191, 4294901760
    %v3371 = vsub.f32 %v3191, %v3370
    %3372 = vmatpush.msra.mxu0 %v3371
    %v3373 = vand.u32 %v3190, 4294901760
    %v3374 = vsub.f32 %v3190, %v3373
    %3375 = vmatpush.msra.mxu0 %v3374
    %v3376 = vand.u32 %v3189, 4294901760
    %v3377 = vsub.f32 %v3189, %v3376
    %3378 = vmatpush.msra.mxu0 %v3377
    %v3379 = vand.u32 %v3188, 4294901760
    %v3380 = vsub.f32 %v3188, %v3379
    %3381 = vmatpush.msra.mxu0 %v3380
    %v3382 = vand.u32 %v3187, 4294901760
    %v3383 = vsub.f32 %v3187, %v3382
    %3384 = vmatpush.msra.mxu0 %v3383
    %v3385 = vand.u32 %v3186, 4294901760
    %v3386 = vsub.f32 %v3186, %v3385
    %3387 = vmatpush.msra.mxu0 %v3386
    %v3388 = vand.u32 %v3185, 4294901760
    %v3389 = vsub.f32 %v3185, %v3388
    %3390 = vmatpush.msra.mxu0 %v3389
    %v3391 = vand.u32 %v3184, 4294901760
    %v3392 = vsub.f32 %v3184, %v3391
    %3393 = vmatpush.msra.mxu0 %v3392
    %v3394 = vand.u32 %v3183, 4294901760
    %v3395 = vsub.f32 %v3183, %v3394
    %3396 = vmatpush.msra.mxu0 %v3395
    %v3397 = vand.u32 %v3182, 4294901760
    %v3398 = vsub.f32 %v3182, %v3397
    %3399 = vmatpush.msra.mxu0 %v3398
    %v3400 = vand.u32 %v2788, 4294901760
    %v3401 = vsub.f32 %v2788, %v3400
    %3402 = vmatmul.f32.gmra.mxu0 %v3401
    %v3403 = vpop.f32.mrf.mxu0
    %v3404 = vadd.f32 %v3346, %v3403
    %v3405 = vand.u32 %v2789, 4294901760
    %v3406 = vsub.f32 %v2789, %v3405
    %3407 = vmatmul.f32.gmra.mxu0 %v3406
    %v3408 = vpop.f32.mrf.mxu0
    %v3409 = vadd.f32 %v3350, %v3408
    %3410 = vdwg.mxu0
    %v3411 = vand.u32 %v3197, 4294901760
    %3412 = vmatpush.msra.mxu0 %v3411
    %v3413 = vand.u32 %v3196, 4294901760
    %3414 = vmatpush.msra.mxu0 %v3413
    %v3415 = vand.u32 %v3195, 4294901760
    %3416 = vmatpush.msra.mxu0 %v3415
    %v3417 = vand.u32 %v3194, 4294901760
    %3418 = vmatpush.msra.mxu0 %v3417
    %v3419 = vand.u32 %v3193, 4294901760
    %3420 = vmatpush.msra.mxu0 %v3419
    %v3421 = vand.u32 %v3192, 4294901760
    %3422 = vmatpush.msra.mxu0 %v3421
    %v3423 = vand.u32 %v3191, 4294901760
    %3424 = vmatpush.msra.mxu0 %v3423
    %v3425 = vand.u32 %v3190, 4294901760
    %3426 = vmatpush.msra.mxu0 %v3425
    %v3427 = vand.u32 %v3189, 4294901760
    %3428 = vmatpush.msra.mxu0 %v3427
    %v3429 = vand.u32 %v3188, 4294901760
    %3430 = vmatpush.msra.mxu0 %v3429
    %v3431 = vand.u32 %v3187, 4294901760
    %3432 = vmatpush.msra.mxu0 %v3431
    %v3433 = vand.u32 %v3186, 4294901760
    %3434 = vmatpush.msra.mxu0 %v3433
    %v3435 = vand.u32 %v3185, 4294901760
    %3436 = vmatpush.msra.mxu0 %v3435
    %v3437 = vand.u32 %v3184, 4294901760
    %3438 = vmatpush.msra.mxu0 %v3437
    %v3439 = vand.u32 %v3183, 4294901760
    %3440 = vmatpush.msra.mxu0 %v3439
    %v3441 = vand.u32 %v3182, 4294901760
    %3442 = vmatpush.msra.mxu0 %v3441
    %v3443 = vand.u32 %v2788, 4294901760
    %v3444 = vsub.f32 %v2788, %v3443
    %v3445 = vand.u32 %v3444, 4294901760
    %3446 = vmatmul.f32.gmra.mxu0 %v3445
    %v3447 = vpop.f32.mrf.mxu0
    %v3448 = vadd.f32 %v3404, %v3447
    %v3449 = vand.u32 %v2789, 4294901760
    %v3450 = vsub.f32 %v2789, %v3449
    %v3451 = vand.u32 %v3450, 4294901760
    %3452 = vmatmul.f32.gmra.mxu0 %v3451
    %v3453 = vpop.f32.mrf.mxu0
    %v3454 = vadd.f32 %v3409, %v3453
    %3455 = vdwg.mxu0
    %v3456 = vand.u32 %v3197, 4294901760
    %v3457 = vsub.f32 %v3197, %v3456
    %v3458 = vand.u32 %v3457, 4294901760
    %3459 = vmatpush.msra.mxu0 %v3458
    %v3460 = vand.u32 %v3196, 4294901760
    %v3461 = vsub.f32 %v3196, %v3460
    %v3462 = vand.u32 %v3461, 4294901760
    %3463 = vmatpush.msra.mxu0 %v3462
    %v3464 = vand.u32 %v3195, 4294901760
    %v3465 = vsub.f32 %v3195, %v3464
    %v3466 = vand.u32 %v3465, 4294901760
    %3467 = vmatpush.msra.mxu0 %v3466
    %v3468 = vand.u32 %v3194, 4294901760
    %v3469 = vsub.f32 %v3194, %v3468
    %v3470 = vand.u32 %v3469, 4294901760
    %3471 = vmatpush.msra.mxu0 %v3470
    %v3472 = vand.u32 %v3193, 4294901760
    %v3473 = vsub.f32 %v3193, %v3472
    %v3474 = vand.u32 %v3473, 4294901760
    %3475 = vmatpush.msra.mxu0 %v3474
    %v3476 = vand.u32 %v3192, 4294901760
    %v3477 = vsub.f32 %v3192, %v3476
    %v3478 = vand.u32 %v3477, 4294901760
    %3479 = vmatpush.msra.mxu0 %v3478
    %v3480 = vand.u32 %v3191, 4294901760
    %v3481 = vsub.f32 %v3191, %v3480
    %v3482 = vand.u32 %v3481, 4294901760
    %3483 = vmatpush.msra.mxu0 %v3482
    %v3484 = vand.u32 %v3190, 4294901760
    %v3485 = vsub.f32 %v3190, %v3484
    %v3486 = vand.u32 %v3485, 4294901760
    %3487 = vmatpush.msra.mxu0 %v3486
    %v3488 = vand.u32 %v3189, 4294901760
    %v3489 = vsub.f32 %v3189, %v3488
    %v3490 = vand.u32 %v3489, 4294901760
    %3491 = vmatpush.msra.mxu0 %v3490
    %v3492 = vand.u32 %v3188, 4294901760
    %v3493 = vsub.f32 %v3188, %v3492
    %v3494 = vand.u32 %v3493, 4294901760
    %3495 = vmatpush.msra.mxu0 %v3494
    %v3496 = vand.u32 %v3187, 4294901760
    %v3497 = vsub.f32 %v3187, %v3496
    %v3498 = vand.u32 %v3497, 4294901760
    %3499 = vmatpush.msra.mxu0 %v3498
    %v3500 = vand.u32 %v3186, 4294901760
    %v3501 = vsub.f32 %v3186, %v3500
    %v3502 = vand.u32 %v3501, 4294901760
    %3503 = vmatpush.msra.mxu0 %v3502
    %v3504 = vand.u32 %v3185, 4294901760
    %v3505 = vsub.f32 %v3185, %v3504
    %v3506 = vand.u32 %v3505, 4294901760
    %3507 = vmatpush.msra.mxu0 %v3506
    %v3508 = vand.u32 %v3184, 4294901760
    %v3509 = vsub.f32 %v3184, %v3508
    %v3510 = vand.u32 %v3509, 4294901760
    %3511 = vmatpush.msra.mxu0 %v3510
    %v3512 = vand.u32 %v3183, 4294901760
    %v3513 = vsub.f32 %v3183, %v3512
    %v3514 = vand.u32 %v3513, 4294901760
    %3515 = vmatpush.msra.mxu0 %v3514
    %v3516 = vand.u32 %v3182, 4294901760
    %v3517 = vsub.f32 %v3182, %v3516
    %v3518 = vand.u32 %v3517, 4294901760
    %3519 = vmatpush.msra.mxu0 %v3518
    %v3520 = vand.u32 %v2788, 4294901760
    %3521 = vmatmul.f32.gmra.mxu0 %v3520
    %v3522 = vpop.f32.mrf.mxu0
    %v3523 = vadd.f32 %v3448, %v3522
    %v3524 = vand.u32 %v2789, 4294901760
    %3525 = vmatmul.f32.gmra.mxu0 %v3524
    %v3526 = vpop.f32.mrf.mxu0
    %v3527 = vadd.f32 %v3454, %v3526
    %3528 = vdwg.mxu0
    %v3529 = vand.u32 %v3197, 4294901760
    %3530 = vmatpush.msra.mxu0 %v3529
    %v3531 = vand.u32 %v3196, 4294901760
    %3532 = vmatpush.msra.mxu0 %v3531
    %v3533 = vand.u32 %v3195, 4294901760
    %3534 = vmatpush.msra.mxu0 %v3533
    %v3535 = vand.u32 %v3194, 4294901760
    %3536 = vmatpush.msra.mxu0 %v3535
    %v3537 = vand.u32 %v3193, 4294901760
    %3538 = vmatpush.msra.mxu0 %v3537
    %v3539 = vand.u32 %v3192, 4294901760
    %3540 = vmatpush.msra.mxu0 %v3539
    %v3541 = vand.u32 %v3191, 4294901760
    %3542 = vmatpush.msra.mxu0 %v3541
    %v3543 = vand.u32 %v3190, 4294901760
    %3544 = vmatpush.msra.mxu0 %v3543
    %v3545 = vand.u32 %v3189, 4294901760
    %3546 = vmatpush.msra.mxu0 %v3545
    %v3547 = vand.u32 %v3188, 4294901760
    %3548 = vmatpush.msra.mxu0 %v3547
    %v3549 = vand.u32 %v3187, 4294901760
    %3550 = vmatpush.msra.mxu0 %v3549
    %v3551 = vand.u32 %v3186, 4294901760
    %3552 = vmatpush.msra.mxu0 %v3551
    %v3553 = vand.u32 %v3185, 4294901760
    %3554 = vmatpush.msra.mxu0 %v3553
    %v3555 = vand.u32 %v3184, 4294901760
    %3556 = vmatpush.msra.mxu0 %v3555
    %v3557 = vand.u32 %v3183, 4294901760
    %3558 = vmatpush.msra.mxu0 %v3557
    %v3559 = vand.u32 %v3182, 4294901760
    %3560 = vmatpush.msra.mxu0 %v3559
    %v3561 = vand.u32 %v2788, 4294901760
    %3562 = vmatmul.f32.gmra.mxu0 %v3561
    %v3563 = vpop.f32.mrf.mxu0
    %v3564 = vadd.f32 %v3523, %v3563
    %v3565 = vand.u32 %v2789, 4294901760
    %3566 = vmatmul.f32.gmra.mxu0 %v3565
    %v3567 = vpop.f32.mrf.mxu0
    %v3568 = vadd.f32 %v3527, %v3567
    %3569 = vdwg.mxu0
    %s3570 = scalar_lea.vmem %s10, 256
    %v3571 = vld [vmem:[%s3570] sm:$0xff]
    %v3572 = vld [vmem:[%s3570 + $0x8] sm:$0xff]
    %v3573 = vld [vmem:[%s3570 + $0x10] sm:$0xff]
    %v3574 = vld [vmem:[%s3570 + $0x18] sm:$0xff]
    %v3575 = vld [vmem:[%s3570 + $0x20] sm:$0xff]
    %v3576 = vld [vmem:[%s3570 + $0x28] sm:$0xff]
    %v3577 = vld [vmem:[%s3570 + $0x30] sm:$0xff]
    %v3578 = vld [vmem:[%s3570 + $0x38] sm:$0xff]
    %v3579 = vld [vmem:[%s3570 + $0x40] sm:$0xff]
    %v3580 = vld [vmem:[%s3570 + $0x48] sm:$0xff]
    %v3581 = vld [vmem:[%s3570 + $0x50] sm:$0xff]
    %v3582 = vld [vmem:[%s3570 + $0x58] sm:$0xff]
    %v3583 = vld [vmem:[%s3570 + $0x60] sm:$0xff]
    %v3584 = vld [vmem:[%s3570 + $0x68] sm:$0xff]
    %v3585 = vld [vmem:[%s3570 + $0x70] sm:$0xff]
    %v3586 = vld [vmem:[%s3570 + $0x78] sm:$0xff]
    %v3587 = vand.u32 %v3586, 4294901760
    %3588 = vmatpush.msra.mxu0 %v3587
    %v3589 = vand.u32 %v3585, 4294901760
    %3590 = vmatpush.msra.mxu0 %v3589
    %v3591 = vand.u32 %v3584, 4294901760
    %3592 = vmatpush.msra.mxu0 %v3591
    %v3593 = vand.u32 %v3583, 4294901760
    %3594 = vmatpush.msra.mxu0 %v3593
    %v3595 = vand.u32 %v3582, 4294901760
    %3596 = vmatpush.msra.mxu0 %v3595
    %v3597 = vand.u32 %v3581, 4294901760
    %3598 = vmatpush.msra.mxu0 %v3597
    %v3599 = vand.u32 %v3580, 4294901760
    %3600 = vmatpush.msra.mxu0 %v3599
    %v3601 = vand.u32 %v3579, 4294901760
    %3602 = vmatpush.msra.mxu0 %v3601
    %v3603 = vand.u32 %v3578, 4294901760
    %3604 = vmatpush.msra.mxu0 %v3603
    %v3605 = vand.u32 %v3577, 4294901760
    %3606 = vmatpush.msra.mxu0 %v3605
    %v3607 = vand.u32 %v3576, 4294901760
    %3608 = vmatpush.msra.mxu0 %v3607
    %v3609 = vand.u32 %v3575, 4294901760
    %3610 = vmatpush.msra.mxu0 %v3609
    %v3611 = vand.u32 %v3574, 4294901760
    %3612 = vmatpush.msra.mxu0 %v3611
    %v3613 = vand.u32 %v3573, 4294901760
    %3614 = vmatpush.msra.mxu0 %v3613
    %v3615 = vand.u32 %v3572, 4294901760
    %3616 = vmatpush.msra.mxu0 %v3615
    %v3617 = vand.u32 %v3571, 4294901760
    %3618 = vmatpush.msra.mxu0 %v3617
    %v3619 = vand.u32 %v2788, 4294901760
    %v3620 = vsub.f32 %v2788, %v3619
    %v3621 = vand.u32 %v3620, 4294901760
    %v3622 = vsub.f32 %v3620, %v3621
    %v3623 = vand.u32 %v3622, 4294901760
    %3624 = vmatmul.f32.gmra.mxu0 %v3623
    %v3625 = vpop.f32.mrf.mxu0
    %v3626 = vadd.f32 0.0, %v3625
    %v3627 = vand.u32 %v2789, 4294901760
    %v3628 = vsub.f32 %v2789, %v3627
    %v3629 = vand.u32 %v3628, 4294901760
    %v3630 = vsub.f32 %v3628, %v3629
    %v3631 = vand.u32 %v3630, 4294901760
    %3632 = vmatmul.f32.gmra.mxu0 %v3631
    %v3633 = vpop.f32.mrf.mxu0
    %v3634 = vadd.f32 0.0, %v3633
    %3635 = vdwg.mxu0
    %v3636 = vand.u32 %v3586, 4294901760
    %v3637 = vsub.f32 %v3586, %v3636
    %v3638 = vand.u32 %v3637, 4294901760
    %v3639 = vsub.f32 %v3637, %v3638
    %v3640 = vand.u32 %v3639, 4294901760
    %3641 = vmatpush.msra.mxu0 %v3640
    %v3642 = vand.u32 %v3585, 4294901760
    %v3643 = vsub.f32 %v3585, %v3642
    %v3644 = vand.u32 %v3643, 4294901760
    %v3645 = vsub.f32 %v3643, %v3644
    %v3646 = vand.u32 %v3645, 4294901760
    %3647 = vmatpush.msra.mxu0 %v3646
    %v3648 = vand.u32 %v3584, 4294901760
    %v3649 = vsub.f32 %v3584, %v3648
    %v3650 = vand.u32 %v3649, 4294901760
    %v3651 = vsub.f32 %v3649, %v3650
    %v3652 = vand.u32 %v3651, 4294901760
    %3653 = vmatpush.msra.mxu0 %v3652
    %v3654 = vand.u32 %v3583, 4294901760
    %v3655 = vsub.f32 %v3583, %v3654
    %v3656 = vand.u32 %v3655, 4294901760
    %v3657 = vsub.f32 %v3655, %v3656
    %v3658 = vand.u32 %v3657, 4294901760
    %3659 = vmatpush.msra.mxu0 %v3658
    %v3660 = vand.u32 %v3582, 4294901760
    %v3661 = vsub.f32 %v3582, %v3660
    %v3662 = vand.u32 %v3661, 4294901760
    %v3663 = vsub.f32 %v3661, %v3662
    %v3664 = vand.u32 %v3663, 4294901760
    %3665 = vmatpush.msra.mxu0 %v3664
    %v3666 = vand.u32 %v3581, 4294901760
    %v3667 = vsub.f32 %v3581, %v3666
    %v3668 = vand.u32 %v3667, 4294901760
    %v3669 = vsub.f32 %v3667, %v3668
    %v3670 = vand.u32 %v3669, 4294901760
    %3671 = vmatpush.msra.mxu0 %v3670
    %v3672 = vand.u32 %v3580, 4294901760
    %v3673 = vsub.f32 %v3580, %v3672
    %v3674 = vand.u32 %v3673, 4294901760
    %v3675 = vsub.f32 %v3673, %v3674
    %v3676 = vand.u32 %v3675, 4294901760
    %3677 = vmatpush.msra.mxu0 %v3676
    %v3678 = vand.u32 %v3579, 4294901760
    %v3679 = vsub.f32 %v3579, %v3678
    %v3680 = vand.u32 %v3679, 4294901760
    %v3681 = vsub.f32 %v3679, %v3680
    %v3682 = vand.u32 %v3681, 4294901760
    %3683 = vmatpush.msra.mxu0 %v3682
    %v3684 = vand.u32 %v3578, 4294901760
    %v3685 = vsub.f32 %v3578, %v3684
    %v3686 = vand.u32 %v3685, 4294901760
    %v3687 = vsub.f32 %v3685, %v3686
    %v3688 = vand.u32 %v3687, 4294901760
    %3689 = vmatpush.msra.mxu0 %v3688
    %v3690 = vand.u32 %v3577, 4294901760
    %v3691 = vsub.f32 %v3577, %v3690
    %v3692 = vand.u32 %v3691, 4294901760
    %v3693 = vsub.f32 %v3691, %v3692
    %v3694 = vand.u32 %v3693, 4294901760
    %3695 = vmatpush.msra.mxu0 %v3694
    %v3696 = vand.u32 %v3576, 4294901760
    %v3697 = vsub.f32 %v3576, %v3696
    %v3698 = vand.u32 %v3697, 4294901760
    %v3699 = vsub.f32 %v3697, %v3698
    %v3700 = vand.u32 %v3699, 4294901760
    %3701 = vmatpush.msra.mxu0 %v3700
    %v3702 = vand.u32 %v3575, 4294901760
    %v3703 = vsub.f32 %v3575, %v3702
    %v3704 = vand.u32 %v3703, 4294901760
    %v3705 = vsub.f32 %v3703, %v3704
    %v3706 = vand.u32 %v3705, 4294901760
    %3707 = vmatpush.msra.mxu0 %v3706
    %v3708 = vand.u32 %v3574, 4294901760
    %v3709 = vsub.f32 %v3574, %v3708
    %v3710 = vand.u32 %v3709, 4294901760
    %v3711 = vsub.f32 %v3709, %v3710
    %v3712 = vand.u32 %v3711, 4294901760
    %3713 = vmatpush.msra.mxu0 %v3712
    %v3714 = vand.u32 %v3573, 4294901760
    %v3715 = vsub.f32 %v3573, %v3714
    %v3716 = vand.u32 %v3715, 4294901760
    %v3717 = vsub.f32 %v3715, %v3716
    %v3718 = vand.u32 %v3717, 4294901760
    %3719 = vmatpush.msra.mxu0 %v3718
    %v3720 = vand.u32 %v3572, 4294901760
    %v3721 = vsub.f32 %v3572, %v3720
    %v3722 = vand.u32 %v3721, 4294901760
    %v3723 = vsub.f32 %v3721, %v3722
    %v3724 = vand.u32 %v3723, 4294901760
    %3725 = vmatpush.msra.mxu0 %v3724
    %v3726 = vand.u32 %v3571, 4294901760
    %v3727 = vsub.f32 %v3571, %v3726
    %v3728 = vand.u32 %v3727, 4294901760
    %v3729 = vsub.f32 %v3727, %v3728
    %v3730 = vand.u32 %v3729, 4294901760
    %3731 = vmatpush.msra.mxu0 %v3730
    %v3732 = vand.u32 %v2788, 4294901760
    %3733 = vmatmul.f32.gmra.mxu0 %v3732
    %v3734 = vpop.f32.mrf.mxu0
    %v3735 = vadd.f32 %v3626, %v3734
    %v3736 = vand.u32 %v2789, 4294901760
    %3737 = vmatmul.f32.gmra.mxu0 %v3736
    %v3738 = vpop.f32.mrf.mxu0
    %v3739 = vadd.f32 %v3634, %v3738
    %3740 = vdwg.mxu0
    %v3741 = vand.u32 %v3586, 4294901760
    %v3742 = vsub.f32 %v3586, %v3741
    %3743 = vmatpush.msra.mxu0 %v3742
    %v3744 = vand.u32 %v3585, 4294901760
    %v3745 = vsub.f32 %v3585, %v3744
    %3746 = vmatpush.msra.mxu0 %v3745
    %v3747 = vand.u32 %v3584, 4294901760
    %v3748 = vsub.f32 %v3584, %v3747
    %3749 = vmatpush.msra.mxu0 %v3748
    %v3750 = vand.u32 %v3583, 4294901760
    %v3751 = vsub.f32 %v3583, %v3750
    %3752 = vmatpush.msra.mxu0 %v3751
    %v3753 = vand.u32 %v3582, 4294901760
    %v3754 = vsub.f32 %v3582, %v3753
    %3755 = vmatpush.msra.mxu0 %v3754
    %v3756 = vand.u32 %v3581, 4294901760
    %v3757 = vsub.f32 %v3581, %v3756
    %3758 = vmatpush.msra.mxu0 %v3757
    %v3759 = vand.u32 %v3580, 4294901760
    %v3760 = vsub.f32 %v3580, %v3759
    %3761 = vmatpush.msra.mxu0 %v3760
    %v3762 = vand.u32 %v3579, 4294901760
    %v3763 = vsub.f32 %v3579, %v3762
    %3764 = vmatpush.msra.mxu0 %v3763
    %v3765 = vand.u32 %v3578, 4294901760
    %v3766 = vsub.f32 %v3578, %v3765
    %3767 = vmatpush.msra.mxu0 %v3766
    %v3768 = vand.u32 %v3577, 4294901760
    %v3769 = vsub.f32 %v3577, %v3768
    %3770 = vmatpush.msra.mxu0 %v3769
    %v3771 = vand.u32 %v3576, 4294901760
    %v3772 = vsub.f32 %v3576, %v3771
    %3773 = vmatpush.msra.mxu0 %v3772
    %v3774 = vand.u32 %v3575, 4294901760
    %v3775 = vsub.f32 %v3575, %v3774
    %3776 = vmatpush.msra.mxu0 %v3775
    %v3777 = vand.u32 %v3574, 4294901760
    %v3778 = vsub.f32 %v3574, %v3777
    %3779 = vmatpush.msra.mxu0 %v3778
    %v3780 = vand.u32 %v3573, 4294901760
    %v3781 = vsub.f32 %v3573, %v3780
    %3782 = vmatpush.msra.mxu0 %v3781
    %v3783 = vand.u32 %v3572, 4294901760
    %v3784 = vsub.f32 %v3572, %v3783
    %3785 = vmatpush.msra.mxu0 %v3784
    %v3786 = vand.u32 %v3571, 4294901760
    %v3787 = vsub.f32 %v3571, %v3786
    %3788 = vmatpush.msra.mxu0 %v3787
    %v3789 = vand.u32 %v2788, 4294901760
    %v3790 = vsub.f32 %v2788, %v3789
    %3791 = vmatmul.f32.gmra.mxu0 %v3790
    %v3792 = vpop.f32.mrf.mxu0
    %v3793 = vadd.f32 %v3735, %v3792
    %v3794 = vand.u32 %v2789, 4294901760
    %v3795 = vsub.f32 %v2789, %v3794
    %3796 = vmatmul.f32.gmra.mxu0 %v3795
    %v3797 = vpop.f32.mrf.mxu0
    %v3798 = vadd.f32 %v3739, %v3797
    %3799 = vdwg.mxu0
    %v3800 = vand.u32 %v3586, 4294901760
    %3801 = vmatpush.msra.mxu0 %v3800
    %v3802 = vand.u32 %v3585, 4294901760
    %3803 = vmatpush.msra.mxu0 %v3802
    %v3804 = vand.u32 %v3584, 4294901760
    %3805 = vmatpush.msra.mxu0 %v3804
    %v3806 = vand.u32 %v3583, 4294901760
    %3807 = vmatpush.msra.mxu0 %v3806
    %v3808 = vand.u32 %v3582, 4294901760
    %3809 = vmatpush.msra.mxu0 %v3808
    %v3810 = vand.u32 %v3581, 4294901760
    %3811 = vmatpush.msra.mxu0 %v3810
    %v3812 = vand.u32 %v3580, 4294901760
    %3813 = vmatpush.msra.mxu0 %v3812
    %v3814 = vand.u32 %v3579, 4294901760
    %3815 = vmatpush.msra.mxu0 %v3814
    %v3816 = vand.u32 %v3578, 4294901760
    %3817 = vmatpush.msra.mxu0 %v3816
    %v3818 = vand.u32 %v3577, 4294901760
    %3819 = vmatpush.msra.mxu0 %v3818
    %v3820 = vand.u32 %v3576, 4294901760
    %3821 = vmatpush.msra.mxu0 %v3820
    %v3822 = vand.u32 %v3575, 4294901760
    %3823 = vmatpush.msra.mxu0 %v3822
    %v3824 = vand.u32 %v3574, 4294901760
    %3825 = vmatpush.msra.mxu0 %v3824
    %v3826 = vand.u32 %v3573, 4294901760
    %3827 = vmatpush.msra.mxu0 %v3826
    %v3828 = vand.u32 %v3572, 4294901760
    %3829 = vmatpush.msra.mxu0 %v3828
    %v3830 = vand.u32 %v3571, 4294901760
    %3831 = vmatpush.msra.mxu0 %v3830
    %v3832 = vand.u32 %v2788, 4294901760
    %v3833 = vsub.f32 %v2788, %v3832
    %v3834 = vand.u32 %v3833, 4294901760
    %3835 = vmatmul.f32.gmra.mxu0 %v3834
    %v3836 = vpop.f32.mrf.mxu0
    %v3837 = vadd.f32 %v3793, %v3836
    %v3838 = vand.u32 %v2789, 4294901760
    %v3839 = vsub.f32 %v2789, %v3838
    %v3840 = vand.u32 %v3839, 4294901760
    %3841 = vmatmul.f32.gmra.mxu0 %v3840
    %v3842 = vpop.f32.mrf.mxu0
    %v3843 = vadd.f32 %v3798, %v3842
    %3844 = vdwg.mxu0
    %v3845 = vand.u32 %v3586, 4294901760
    %v3846 = vsub.f32 %v3586, %v3845
    %v3847 = vand.u32 %v3846, 4294901760
    %3848 = vmatpush.msra.mxu0 %v3847
    %v3849 = vand.u32 %v3585, 4294901760
    %v3850 = vsub.f32 %v3585, %v3849
    %v3851 = vand.u32 %v3850, 4294901760
    %3852 = vmatpush.msra.mxu0 %v3851
    %v3853 = vand.u32 %v3584, 4294901760
    %v3854 = vsub.f32 %v3584, %v3853
    %v3855 = vand.u32 %v3854, 4294901760
    %3856 = vmatpush.msra.mxu0 %v3855
    %v3857 = vand.u32 %v3583, 4294901760
    %v3858 = vsub.f32 %v3583, %v3857
    %v3859 = vand.u32 %v3858, 4294901760
    %3860 = vmatpush.msra.mxu0 %v3859
    %v3861 = vand.u32 %v3582, 4294901760
    %v3862 = vsub.f32 %v3582, %v3861
    %v3863 = vand.u32 %v3862, 4294901760
    %3864 = vmatpush.msra.mxu0 %v3863
    %v3865 = vand.u32 %v3581, 4294901760
    %v3866 = vsub.f32 %v3581, %v3865
    %v3867 = vand.u32 %v3866, 4294901760
    %3868 = vmatpush.msra.mxu0 %v3867
    %v3869 = vand.u32 %v3580, 4294901760
    %v3870 = vsub.f32 %v3580, %v3869
    %v3871 = vand.u32 %v3870, 4294901760
    %3872 = vmatpush.msra.mxu0 %v3871
    %v3873 = vand.u32 %v3579, 4294901760
    %v3874 = vsub.f32 %v3579, %v3873
    %v3875 = vand.u32 %v3874, 4294901760
    %3876 = vmatpush.msra.mxu0 %v3875
    %v3877 = vand.u32 %v3578, 4294901760
    %v3878 = vsub.f32 %v3578, %v3877
    %v3879 = vand.u32 %v3878, 4294901760
    %3880 = vmatpush.msra.mxu0 %v3879
    %v3881 = vand.u32 %v3577, 4294901760
    %v3882 = vsub.f32 %v3577, %v3881
    %v3883 = vand.u32 %v3882, 4294901760
    %3884 = vmatpush.msra.mxu0 %v3883
    %v3885 = vand.u32 %v3576, 4294901760
    %v3886 = vsub.f32 %v3576, %v3885
    %v3887 = vand.u32 %v3886, 4294901760
    %3888 = vmatpush.msra.mxu0 %v3887
    %v3889 = vand.u32 %v3575, 4294901760
    %v3890 = vsub.f32 %v3575, %v3889
    %v3891 = vand.u32 %v3890, 4294901760
    %3892 = vmatpush.msra.mxu0 %v3891
    %v3893 = vand.u32 %v3574, 4294901760
    %v3894 = vsub.f32 %v3574, %v3893
    %v3895 = vand.u32 %v3894, 4294901760
    %3896 = vmatpush.msra.mxu0 %v3895
    %v3897 = vand.u32 %v3573, 4294901760
    %v3898 = vsub.f32 %v3573, %v3897
    %v3899 = vand.u32 %v3898, 4294901760
    %3900 = vmatpush.msra.mxu0 %v3899
    %v3901 = vand.u32 %v3572, 4294901760
    %v3902 = vsub.f32 %v3572, %v3901
    %v3903 = vand.u32 %v3902, 4294901760
    %3904 = vmatpush.msra.mxu0 %v3903
    %v3905 = vand.u32 %v3571, 4294901760
    %v3906 = vsub.f32 %v3571, %v3905
    %v3907 = vand.u32 %v3906, 4294901760
    %3908 = vmatpush.msra.mxu0 %v3907
    %v3909 = vand.u32 %v2788, 4294901760
    %3910 = vmatmul.f32.gmra.mxu0 %v3909
    %v3911 = vpop.f32.mrf.mxu0
    %v3912 = vadd.f32 %v3837, %v3911
    %v3913 = vand.u32 %v2789, 4294901760
    %3914 = vmatmul.f32.gmra.mxu0 %v3913
    %v3915 = vpop.f32.mrf.mxu0
    %v3916 = vadd.f32 %v3843, %v3915
    %3917 = vdwg.mxu0
    %v3918 = vand.u32 %v3586, 4294901760
    %3919 = vmatpush.msra.mxu0 %v3918
    %v3920 = vand.u32 %v3585, 4294901760
    %3921 = vmatpush.msra.mxu0 %v3920
    %v3922 = vand.u32 %v3584, 4294901760
    %3923 = vmatpush.msra.mxu0 %v3922
    %v3924 = vand.u32 %v3583, 4294901760
    %3925 = vmatpush.msra.mxu0 %v3924
    %v3926 = vand.u32 %v3582, 4294901760
    %3927 = vmatpush.msra.mxu0 %v3926
    %v3928 = vand.u32 %v3581, 4294901760
    %3929 = vmatpush.msra.mxu0 %v3928
    %v3930 = vand.u32 %v3580, 4294901760
    %3931 = vmatpush.msra.mxu0 %v3930
    %v3932 = vand.u32 %v3579, 4294901760
    %3933 = vmatpush.msra.mxu0 %v3932
    %v3934 = vand.u32 %v3578, 4294901760
    %3935 = vmatpush.msra.mxu0 %v3934
    %v3936 = vand.u32 %v3577, 4294901760
    %3937 = vmatpush.msra.mxu0 %v3936
    %v3938 = vand.u32 %v3576, 4294901760
    %3939 = vmatpush.msra.mxu0 %v3938
    %v3940 = vand.u32 %v3575, 4294901760
    %3941 = vmatpush.msra.mxu0 %v3940
    %v3942 = vand.u32 %v3574, 4294901760
    %3943 = vmatpush.msra.mxu0 %v3942
    %v3944 = vand.u32 %v3573, 4294901760
    %3945 = vmatpush.msra.mxu0 %v3944
    %v3946 = vand.u32 %v3572, 4294901760
    %3947 = vmatpush.msra.mxu0 %v3946
    %v3948 = vand.u32 %v3571, 4294901760
    %3949 = vmatpush.msra.mxu0 %v3948
    %v3950 = vand.u32 %v2788, 4294901760
    %3951 = vmatmul.f32.gmra.mxu0 %v3950
    %v3952 = vpop.f32.mrf.mxu0
    %v3953 = vadd.f32 %v3912, %v3952
    %v3954 = vand.u32 %v2789, 4294901760
    %3955 = vmatmul.f32.gmra.mxu0 %v3954
    %v3956 = vpop.f32.mrf.mxu0
    %v3957 = vadd.f32 %v3916, %v3956
    %3958 = vdwg.mxu0
    %3959 = vmatpush.msra.mxu0 0.0
    %3960 = vmatpush.msra.mxu0 0.0
    %3961 = vmatpush.msra.mxu0 0.0
    %3962 = vmatpush.msra.mxu0 0.0
    %3963 = vmatpush.msra.mxu0 0.0
    %3964 = vmatpush.msra.mxu0 0.0
    %3965 = vmatpush.msra.mxu0 0.0
    %3966 = vmatpush.msra.mxu0 0.0
    %3967 = vmatpush.msra.mxu0 0.0
    %3968 = vmatpush.msra.mxu0 0.0
    %3969 = vmatpush.msra.mxu0 0.0
    %3970 = vmatpush.msra.mxu0 0.0
    %3971 = vmatpush.msra.mxu0 0.0
    %3972 = vmatpush.msra.mxu0 0.0
    %v3973 = vand.u32 %v3957, 4294901760
    %3974 = vmatpush.msra.mxu0 %v3973
    %v3975 = vand.u32 %v3953, 4294901760
    %3976 = vmatpush.msra.mxu0 %v3975
    %v3977 = vand.u32 %v450, 4294901760
    %v3978 = vsub.f32 %v450, %v3977
    %v3979 = vand.u32 %v3978, 4294901760
    %v3980 = vsub.f32 %v3978, %v3979
    %v3981 = vand.u32 %v3980, 4294901760
    %3982 = vmatmul.f32.gmra.mxu0 %v3981
    %v3983 = vpop.f32.mrf.mxu0
    %v3984 = vadd.f32 0.0, %v3983
    %v3985 = vand.u32 %v453, 4294901760
    %v3986 = vsub.f32 %v453, %v3985
    %v3987 = vand.u32 %v3986, 4294901760
    %v3988 = vsub.f32 %v3986, %v3987
    %v3989 = vand.u32 %v3988, 4294901760
    %3990 = vmatmul.f32.gmra.mxu0 %v3989
    %v3991 = vpop.f32.mrf.mxu0
    %v3992 = vadd.f32 0.0, %v3991
    %3993 = vdwg.mxu0
    %3994 = vmatpush.msra.mxu0 0.0
    %3995 = vmatpush.msra.mxu0 0.0
    %3996 = vmatpush.msra.mxu0 0.0
    %3997 = vmatpush.msra.mxu0 0.0
    %3998 = vmatpush.msra.mxu0 0.0
    %3999 = vmatpush.msra.mxu0 0.0
    %4000 = vmatpush.msra.mxu0 0.0
    %4001 = vmatpush.msra.mxu0 0.0
    %4002 = vmatpush.msra.mxu0 0.0
    %4003 = vmatpush.msra.mxu0 0.0
    %4004 = vmatpush.msra.mxu0 0.0
    %4005 = vmatpush.msra.mxu0 0.0
    %4006 = vmatpush.msra.mxu0 0.0
    %4007 = vmatpush.msra.mxu0 0.0
    %v4008 = vand.u32 %v3957, 4294901760
    %v4009 = vsub.f32 %v3957, %v4008
    %v4010 = vand.u32 %v4009, 4294901760
    %v4011 = vsub.f32 %v4009, %v4010
    %v4012 = vand.u32 %v4011, 4294901760
    %4013 = vmatpush.msra.mxu0 %v4012
    %v4014 = vand.u32 %v3953, 4294901760
    %v4015 = vsub.f32 %v3953, %v4014
    %v4016 = vand.u32 %v4015, 4294901760
    %v4017 = vsub.f32 %v4015, %v4016
    %v4018 = vand.u32 %v4017, 4294901760
    %4019 = vmatpush.msra.mxu0 %v4018
    %v4020 = vand.u32 %v450, 4294901760
    %4021 = vmatmul.f32.gmra.mxu0 %v4020
    %v4022 = vpop.f32.mrf.mxu0
    %v4023 = vadd.f32 %v3984, %v4022
    %v4024 = vand.u32 %v453, 4294901760
    %4025 = vmatmul.f32.gmra.mxu0 %v4024
    %v4026 = vpop.f32.mrf.mxu0
    %v4027 = vadd.f32 %v3992, %v4026
    %4028 = vdwg.mxu0
    %4029 = vmatpush.msra.mxu0 0.0
    %4030 = vmatpush.msra.mxu0 0.0
    %4031 = vmatpush.msra.mxu0 0.0
    %4032 = vmatpush.msra.mxu0 0.0
    %4033 = vmatpush.msra.mxu0 0.0
    %4034 = vmatpush.msra.mxu0 0.0
    %4035 = vmatpush.msra.mxu0 0.0
    %4036 = vmatpush.msra.mxu0 0.0
    %4037 = vmatpush.msra.mxu0 0.0
    %4038 = vmatpush.msra.mxu0 0.0
    %4039 = vmatpush.msra.mxu0 0.0
    %4040 = vmatpush.msra.mxu0 0.0
    %4041 = vmatpush.msra.mxu0 0.0
    %4042 = vmatpush.msra.mxu0 0.0
    %v4043 = vand.u32 %v3957, 4294901760
    %v4044 = vsub.f32 %v3957, %v4043
    %4045 = vmatpush.msra.mxu0 %v4044
    %v4046 = vand.u32 %v3953, 4294901760
    %v4047 = vsub.f32 %v3953, %v4046
    %4048 = vmatpush.msra.mxu0 %v4047
    %v4049 = vand.u32 %v450, 4294901760
    %v4050 = vsub.f32 %v450, %v4049
    %4051 = vmatmul.f32.gmra.mxu0 %v4050
    %v4052 = vpop.f32.mrf.mxu0
    %v4053 = vadd.f32 %v4023, %v4052
    %v4054 = vand.u32 %v453, 4294901760
    %v4055 = vsub.f32 %v453, %v4054
    %4056 = vmatmul.f32.gmra.mxu0 %v4055
    %v4057 = vpop.f32.mrf.mxu0
    %v4058 = vadd.f32 %v4027, %v4057
    %4059 = vdwg.mxu0
    %4060 = vmatpush.msra.mxu0 0.0
    %4061 = vmatpush.msra.mxu0 0.0
    %4062 = vmatpush.msra.mxu0 0.0
    %4063 = vmatpush.msra.mxu0 0.0
    %4064 = vmatpush.msra.mxu0 0.0
    %4065 = vmatpush.msra.mxu0 0.0
    %4066 = vmatpush.msra.mxu0 0.0
    %4067 = vmatpush.msra.mxu0 0.0
    %4068 = vmatpush.msra.mxu0 0.0
    %4069 = vmatpush.msra.mxu0 0.0
    %4070 = vmatpush.msra.mxu0 0.0
    %4071 = vmatpush.msra.mxu0 0.0
    %4072 = vmatpush.msra.mxu0 0.0
    %4073 = vmatpush.msra.mxu0 0.0
    %v4074 = vand.u32 %v3957, 4294901760
    %4075 = vmatpush.msra.mxu0 %v4074
    %v4076 = vand.u32 %v3953, 4294901760
    %4077 = vmatpush.msra.mxu0 %v4076
    %v4078 = vand.u32 %v450, 4294901760
    %v4079 = vsub.f32 %v450, %v4078
    %v4080 = vand.u32 %v4079, 4294901760
    %4081 = vmatmul.f32.gmra.mxu0 %v4080
    %v4082 = vpop.f32.mrf.mxu0
    %v4083 = vadd.f32 %v4053, %v4082
    %v4084 = vand.u32 %v453, 4294901760
    %v4085 = vsub.f32 %v453, %v4084
    %v4086 = vand.u32 %v4085, 4294901760
    %4087 = vmatmul.f32.gmra.mxu0 %v4086
    %v4088 = vpop.f32.mrf.mxu0
    %v4089 = vadd.f32 %v4058, %v4088
    %4090 = vdwg.mxu0
    %4091 = vmatpush.msra.mxu0 0.0
    %4092 = vmatpush.msra.mxu0 0.0
    %4093 = vmatpush.msra.mxu0 0.0
    %4094 = vmatpush.msra.mxu0 0.0
    %4095 = vmatpush.msra.mxu0 0.0
    %4096 = vmatpush.msra.mxu0 0.0
    %4097 = vmatpush.msra.mxu0 0.0
    %4098 = vmatpush.msra.mxu0 0.0
    %4099 = vmatpush.msra.mxu0 0.0
    %4100 = vmatpush.msra.mxu0 0.0
    %4101 = vmatpush.msra.mxu0 0.0
    %4102 = vmatpush.msra.mxu0 0.0
    %4103 = vmatpush.msra.mxu0 0.0
    %4104 = vmatpush.msra.mxu0 0.0
    %v4105 = vand.u32 %v3957, 4294901760
    %v4106 = vsub.f32 %v3957, %v4105
    %v4107 = vand.u32 %v4106, 4294901760
    %4108 = vmatpush.msra.mxu0 %v4107
    %v4109 = vand.u32 %v3953, 4294901760
    %v4110 = vsub.f32 %v3953, %v4109
    %v4111 = vand.u32 %v4110, 4294901760
    %4112 = vmatpush.msra.mxu0 %v4111
    %v4113 = vand.u32 %v450, 4294901760
    %4114 = vmatmul.f32.gmra.mxu0 %v4113
    %v4115 = vpop.f32.mrf.mxu0
    %v4116 = vadd.f32 %v4083, %v4115
    %v4117 = vand.u32 %v453, 4294901760
    %4118 = vmatmul.f32.gmra.mxu0 %v4117
    %v4119 = vpop.f32.mrf.mxu0
    %v4120 = vadd.f32 %v4089, %v4119
    %4121 = vdwg.mxu0
    %4122 = vmatpush.msra.mxu0 0.0
    %4123 = vmatpush.msra.mxu0 0.0
    %4124 = vmatpush.msra.mxu0 0.0
    %4125 = vmatpush.msra.mxu0 0.0
    %4126 = vmatpush.msra.mxu0 0.0
    %4127 = vmatpush.msra.mxu0 0.0
    %4128 = vmatpush.msra.mxu0 0.0
    %4129 = vmatpush.msra.mxu0 0.0
    %4130 = vmatpush.msra.mxu0 0.0
    %4131 = vmatpush.msra.mxu0 0.0
    %4132 = vmatpush.msra.mxu0 0.0
    %4133 = vmatpush.msra.mxu0 0.0
    %4134 = vmatpush.msra.mxu0 0.0
    %4135 = vmatpush.msra.mxu0 0.0
    %v4136 = vand.u32 %v3957, 4294901760
    %4137 = vmatpush.msra.mxu0 %v4136
    %v4138 = vand.u32 %v3953, 4294901760
    %4139 = vmatpush.msra.mxu0 %v4138
    %v4140 = vand.u32 %v450, 4294901760
    %4141 = vmatmul.f32.gmra.mxu0 %v4140
    %v4142 = vpop.f32.mrf.mxu0
    %v4143 = vadd.f32 %v4116, %v4142
    %v4144 = vand.u32 %v453, 4294901760
    %4145 = vmatmul.f32.gmra.mxu0 %v4144
    %v4146 = vpop.f32.mrf.mxu0
    %v4147 = vadd.f32 %v4120, %v4146
    %4148 = vdwg.mxu0
    %4149 = vmatpush.msra.mxu0 0.0
    %4150 = vmatpush.msra.mxu0 0.0
    %4151 = vmatpush.msra.mxu0 0.0
    %4152 = vmatpush.msra.mxu0 0.0
    %4153 = vmatpush.msra.mxu0 0.0
    %4154 = vmatpush.msra.mxu0 0.0
    %4155 = vmatpush.msra.mxu0 0.0
    %4156 = vmatpush.msra.mxu0 0.0
    %4157 = vmatpush.msra.mxu0 0.0
    %4158 = vmatpush.msra.mxu0 0.0
    %4159 = vmatpush.msra.mxu0 0.0
    %4160 = vmatpush.msra.mxu0 0.0
    %4161 = vmatpush.msra.mxu0 0.0
    %4162 = vmatpush.msra.mxu0 0.0
    %v4163 = vand.u32 %v3179, 4294901760
    %4164 = vmatpush.msra.mxu0 %v4163
    %v4165 = vand.u32 %v3175, 4294901760
    %4166 = vmatpush.msra.mxu0 %v4165
    %v4167 = vand.u32 %v646, 4294901760
    %v4168 = vsub.f32 %v646, %v4167
    %v4169 = vand.u32 %v4168, 4294901760
    %v4170 = vsub.f32 %v4168, %v4169
    %v4171 = vand.u32 %v4170, 4294901760
    %4172 = vmatmul.f32.gmra.mxu0 %v4171
    %v4173 = vpop.f32.mrf.mxu0
    %v4174 = vadd.f32 %v4143, %v4173
    %v4175 = vand.u32 %v649, 4294901760
    %v4176 = vsub.f32 %v649, %v4175
    %v4177 = vand.u32 %v4176, 4294901760
    %v4178 = vsub.f32 %v4176, %v4177
    %v4179 = vand.u32 %v4178, 4294901760
    %4180 = vmatmul.f32.gmra.mxu0 %v4179
    %v4181 = vpop.f32.mrf.mxu0
    %v4182 = vadd.f32 %v4147, %v4181
    %4183 = vdwg.mxu0
    %4184 = vmatpush.msra.mxu0 0.0
    %4185 = vmatpush.msra.mxu0 0.0
    %4186 = vmatpush.msra.mxu0 0.0
    %4187 = vmatpush.msra.mxu0 0.0
    %4188 = vmatpush.msra.mxu0 0.0
    %4189 = vmatpush.msra.mxu0 0.0
    %4190 = vmatpush.msra.mxu0 0.0
    %4191 = vmatpush.msra.mxu0 0.0
    %4192 = vmatpush.msra.mxu0 0.0
    %4193 = vmatpush.msra.mxu0 0.0
    %4194 = vmatpush.msra.mxu0 0.0
    %4195 = vmatpush.msra.mxu0 0.0
    %4196 = vmatpush.msra.mxu0 0.0
    %4197 = vmatpush.msra.mxu0 0.0
    %v4198 = vand.u32 %v3179, 4294901760
    %v4199 = vsub.f32 %v3179, %v4198
    %v4200 = vand.u32 %v4199, 4294901760
    %v4201 = vsub.f32 %v4199, %v4200
    %v4202 = vand.u32 %v4201, 4294901760
    %4203 = vmatpush.msra.mxu0 %v4202
    %v4204 = vand.u32 %v3175, 4294901760
    %v4205 = vsub.f32 %v3175, %v4204
    %v4206 = vand.u32 %v4205, 4294901760
    %v4207 = vsub.f32 %v4205, %v4206
    %v4208 = vand.u32 %v4207, 4294901760
    %4209 = vmatpush.msra.mxu0 %v4208
    %v4210 = vand.u32 %v646, 4294901760
    %4211 = vmatmul.f32.gmra.mxu0 %v4210
    %v4212 = vpop.f32.mrf.mxu0
    %v4213 = vadd.f32 %v4174, %v4212
    %v4214 = vand.u32 %v649, 4294901760
    %4215 = vmatmul.f32.gmra.mxu0 %v4214
    %v4216 = vpop.f32.mrf.mxu0
    %v4217 = vadd.f32 %v4182, %v4216
    %4218 = vdwg.mxu0
    %4219 = vmatpush.msra.mxu0 0.0
    %4220 = vmatpush.msra.mxu0 0.0
    %4221 = vmatpush.msra.mxu0 0.0
    %4222 = vmatpush.msra.mxu0 0.0
    %4223 = vmatpush.msra.mxu0 0.0
    %4224 = vmatpush.msra.mxu0 0.0
    %4225 = vmatpush.msra.mxu0 0.0
    %4226 = vmatpush.msra.mxu0 0.0
    %4227 = vmatpush.msra.mxu0 0.0
    %4228 = vmatpush.msra.mxu0 0.0
    %4229 = vmatpush.msra.mxu0 0.0
    %4230 = vmatpush.msra.mxu0 0.0
    %4231 = vmatpush.msra.mxu0 0.0
    %4232 = vmatpush.msra.mxu0 0.0
    %v4233 = vand.u32 %v3179, 4294901760
    %v4234 = vsub.f32 %v3179, %v4233
    %4235 = vmatpush.msra.mxu0 %v4234
    %v4236 = vand.u32 %v3175, 4294901760
    %v4237 = vsub.f32 %v3175, %v4236
    %4238 = vmatpush.msra.mxu0 %v4237
    %v4239 = vand.u32 %v646, 4294901760
    %v4240 = vsub.f32 %v646, %v4239
    %4241 = vmatmul.f32.gmra.mxu0 %v4240
    %v4242 = vpop.f32.mrf.mxu0
    %v4243 = vadd.f32 %v4213, %v4242
    %v4244 = vand.u32 %v649, 4294901760
    %v4245 = vsub.f32 %v649, %v4244
    %4246 = vmatmul.f32.gmra.mxu0 %v4245
    %v4247 = vpop.f32.mrf.mxu0
    %v4248 = vadd.f32 %v4217, %v4247
    %4249 = vdwg.mxu0
    %4250 = vmatpush.msra.mxu0 0.0
    %4251 = vmatpush.msra.mxu0 0.0
    %4252 = vmatpush.msra.mxu0 0.0
    %4253 = vmatpush.msra.mxu0 0.0
    %4254 = vmatpush.msra.mxu0 0.0
    %4255 = vmatpush.msra.mxu0 0.0
    %4256 = vmatpush.msra.mxu0 0.0
    %4257 = vmatpush.msra.mxu0 0.0
    %4258 = vmatpush.msra.mxu0 0.0
    %4259 = vmatpush.msra.mxu0 0.0
    %4260 = vmatpush.msra.mxu0 0.0
    %4261 = vmatpush.msra.mxu0 0.0
    %4262 = vmatpush.msra.mxu0 0.0
    %4263 = vmatpush.msra.mxu0 0.0
    %v4264 = vand.u32 %v3179, 4294901760
    %4265 = vmatpush.msra.mxu0 %v4264
    %v4266 = vand.u32 %v3175, 4294901760
    %4267 = vmatpush.msra.mxu0 %v4266
    %v4268 = vand.u32 %v646, 4294901760
    %v4269 = vsub.f32 %v646, %v4268
    %v4270 = vand.u32 %v4269, 4294901760
    %4271 = vmatmul.f32.gmra.mxu0 %v4270
    %v4272 = vpop.f32.mrf.mxu0
    %v4273 = vadd.f32 %v4243, %v4272
    %v4274 = vand.u32 %v649, 4294901760
    %v4275 = vsub.f32 %v649, %v4274
    %v4276 = vand.u32 %v4275, 4294901760
    %4277 = vmatmul.f32.gmra.mxu0 %v4276
    %v4278 = vpop.f32.mrf.mxu0
    %v4279 = vadd.f32 %v4248, %v4278
    %4280 = vdwg.mxu0
    %4281 = vmatpush.msra.mxu0 0.0
    %4282 = vmatpush.msra.mxu0 0.0
    %4283 = vmatpush.msra.mxu0 0.0
    %4284 = vmatpush.msra.mxu0 0.0
    %4285 = vmatpush.msra.mxu0 0.0
    %4286 = vmatpush.msra.mxu0 0.0
    %4287 = vmatpush.msra.mxu0 0.0
    %4288 = vmatpush.msra.mxu0 0.0
    %4289 = vmatpush.msra.mxu0 0.0
    %4290 = vmatpush.msra.mxu0 0.0
    %4291 = vmatpush.msra.mxu0 0.0
    %4292 = vmatpush.msra.mxu0 0.0
    %4293 = vmatpush.msra.mxu0 0.0
    %4294 = vmatpush.msra.mxu0 0.0
    %v4295 = vand.u32 %v3179, 4294901760
    %v4296 = vsub.f32 %v3179, %v4295
    %v4297 = vand.u32 %v4296, 4294901760
    %4298 = vmatpush.msra.mxu0 %v4297
    %v4299 = vand.u32 %v3175, 4294901760
    %v4300 = vsub.f32 %v3175, %v4299
    %v4301 = vand.u32 %v4300, 4294901760
    %4302 = vmatpush.msra.mxu0 %v4301
    %v4303 = vand.u32 %v646, 4294901760
    %4304 = vmatmul.f32.gmra.mxu0 %v4303
    %v4305 = vpop.f32.mrf.mxu0
    %v4306 = vadd.f32 %v4273, %v4305
    %v4307 = vand.u32 %v649, 4294901760
    %4308 = vmatmul.f32.gmra.mxu0 %v4307
    %v4309 = vpop.f32.mrf.mxu0
    %v4310 = vadd.f32 %v4279, %v4309
    %4311 = vdwg.mxu0
    %4312 = vmatpush.msra.mxu0 0.0
    %4313 = vmatpush.msra.mxu0 0.0
    %4314 = vmatpush.msra.mxu0 0.0
    %4315 = vmatpush.msra.mxu0 0.0
    %4316 = vmatpush.msra.mxu0 0.0
    %4317 = vmatpush.msra.mxu0 0.0
    %4318 = vmatpush.msra.mxu0 0.0
    %4319 = vmatpush.msra.mxu0 0.0
    %4320 = vmatpush.msra.mxu0 0.0
    %4321 = vmatpush.msra.mxu0 0.0
    %4322 = vmatpush.msra.mxu0 0.0
    %4323 = vmatpush.msra.mxu0 0.0
    %4324 = vmatpush.msra.mxu0 0.0
    %4325 = vmatpush.msra.mxu0 0.0
    %v4326 = vand.u32 %v3179, 4294901760
    %4327 = vmatpush.msra.mxu0 %v4326
    %v4328 = vand.u32 %v3175, 4294901760
    %4329 = vmatpush.msra.mxu0 %v4328
    %v4330 = vand.u32 %v646, 4294901760
    %4331 = vmatmul.f32.gmra.mxu0 %v4330
    %v4332 = vpop.f32.mrf.mxu0
    %v4333 = vadd.f32 %v4306, %v4332
    %v4334 = vand.u32 %v649, 4294901760
    %4335 = vmatmul.f32.gmra.mxu0 %v4334
    %v4336 = vpop.f32.mrf.mxu0
    %v4337 = vadd.f32 %v4310, %v4336
    %4338 = vdwg.mxu0
    %v4340 = vperm.slane %v2792, 0
    %v4342 = vadd.f32 %v4333, %v4340
    %v4343 = vadd.f32 %v4337, %v4340
    %4344 = vmatpush.msra.mxu0 0.0
    %4345 = vmatpush.msra.mxu0 0.0
    %4346 = vmatpush.msra.mxu0 0.0
    %4347 = vmatpush.msra.mxu0 0.0
    %4348 = vmatpush.msra.mxu0 0.0
    %4349 = vmatpush.msra.mxu0 0.0
    %4350 = vmatpush.msra.mxu0 0.0
    %4351 = vmatpush.msra.mxu0 0.0
    %4352 = vmatpush.msra.mxu0 0.0
    %4353 = vmatpush.msra.mxu0 0.0
    %4354 = vmatpush.msra.mxu0 0.0
    %4355 = vmatpush.msra.mxu0 0.0
    %4356 = vmatpush.msra.mxu0 0.0
    %4357 = vmatpush.msra.mxu0 0.0
    %v4358 = vand.u32 %v3568, 4294901760
    %4359 = vmatpush.msra.mxu0 %v4358
    %v4360 = vand.u32 %v3564, 4294901760
    %4361 = vmatpush.msra.mxu0 %v4360
    %v4362 = vand.u32 %v847, 4294901760
    %v4363 = vsub.f32 %v847, %v4362
    %v4364 = vand.u32 %v4363, 4294901760
    %v4365 = vsub.f32 %v4363, %v4364
    %v4366 = vand.u32 %v4365, 4294901760
    %4367 = vmatmul.f32.gmra.mxu0 %v4366
    %v4368 = vpop.f32.mrf.mxu0
    %v4369 = vadd.f32 %v4340, %v4368
    %v4370 = vand.u32 %v850, 4294901760
    %v4371 = vsub.f32 %v850, %v4370
    %v4372 = vand.u32 %v4371, 4294901760
    %v4373 = vsub.f32 %v4371, %v4372
    %v4374 = vand.u32 %v4373, 4294901760
    %4375 = vmatmul.f32.gmra.mxu0 %v4374
    %v4376 = vpop.f32.mrf.mxu0
    %v4377 = vadd.f32 %v4340, %v4376
    %4378 = vdwg.mxu0
    %4379 = vmatpush.msra.mxu0 0.0
    %4380 = vmatpush.msra.mxu0 0.0
    %4381 = vmatpush.msra.mxu0 0.0
    %4382 = vmatpush.msra.mxu0 0.0
    %4383 = vmatpush.msra.mxu0 0.0
    %4384 = vmatpush.msra.mxu0 0.0
    %4385 = vmatpush.msra.mxu0 0.0
    %4386 = vmatpush.msra.mxu0 0.0
    %4387 = vmatpush.msra.mxu0 0.0
    %4388 = vmatpush.msra.mxu0 0.0
    %4389 = vmatpush.msra.mxu0 0.0
    %4390 = vmatpush.msra.mxu0 0.0
    %4391 = vmatpush.msra.mxu0 0.0
    %4392 = vmatpush.msra.mxu0 0.0
    %v4393 = vand.u32 %v3568, 4294901760
    %v4394 = vsub.f32 %v3568, %v4393
    %v4395 = vand.u32 %v4394, 4294901760
    %v4396 = vsub.f32 %v4394, %v4395
    %v4397 = vand.u32 %v4396, 4294901760
    %4398 = vmatpush.msra.mxu0 %v4397
    %v4399 = vand.u32 %v3564, 4294901760
    %v4400 = vsub.f32 %v3564, %v4399
    %v4401 = vand.u32 %v4400, 4294901760
    %v4402 = vsub.f32 %v4400, %v4401
    %v4403 = vand.u32 %v4402, 4294901760
    %4404 = vmatpush.msra.mxu0 %v4403
    %v4405 = vand.u32 %v847, 4294901760
    %4406 = vmatmul.f32.gmra.mxu0 %v4405
    %v4407 = vpop.f32.mrf.mxu0
    %v4408 = vadd.f32 %v4369, %v4407
    %v4409 = vand.u32 %v850, 4294901760
    %4410 = vmatmul.f32.gmra.mxu0 %v4409
    %v4411 = vpop.f32.mrf.mxu0
    %v4412 = vadd.f32 %v4377, %v4411
    %4413 = vdwg.mxu0
    %4414 = vmatpush.msra.mxu0 0.0
    %4415 = vmatpush.msra.mxu0 0.0
    %4416 = vmatpush.msra.mxu0 0.0
    %4417 = vmatpush.msra.mxu0 0.0
    %4418 = vmatpush.msra.mxu0 0.0
    %4419 = vmatpush.msra.mxu0 0.0
    %4420 = vmatpush.msra.mxu0 0.0
    %4421 = vmatpush.msra.mxu0 0.0
    %4422 = vmatpush.msra.mxu0 0.0
    %4423 = vmatpush.msra.mxu0 0.0
    %4424 = vmatpush.msra.mxu0 0.0
    %4425 = vmatpush.msra.mxu0 0.0
    %4426 = vmatpush.msra.mxu0 0.0
    %4427 = vmatpush.msra.mxu0 0.0
    %v4428 = vand.u32 %v3568, 4294901760
    %v4429 = vsub.f32 %v3568, %v4428
    %4430 = vmatpush.msra.mxu0 %v4429
    %v4431 = vand.u32 %v3564, 4294901760
    %v4432 = vsub.f32 %v3564, %v4431
    %4433 = vmatpush.msra.mxu0 %v4432
    %v4434 = vand.u32 %v847, 4294901760
    %v4435 = vsub.f32 %v847, %v4434
    %4436 = vmatmul.f32.gmra.mxu0 %v4435
    %v4437 = vpop.f32.mrf.mxu0
    %v4438 = vadd.f32 %v4408, %v4437
    %v4439 = vand.u32 %v850, 4294901760
    %v4440 = vsub.f32 %v850, %v4439
    %4441 = vmatmul.f32.gmra.mxu0 %v4440
    %v4442 = vpop.f32.mrf.mxu0
    %v4443 = vadd.f32 %v4412, %v4442
    %4444 = vdwg.mxu0
    %4445 = vmatpush.msra.mxu0 0.0
    %4446 = vmatpush.msra.mxu0 0.0
    %4447 = vmatpush.msra.mxu0 0.0
    %4448 = vmatpush.msra.mxu0 0.0
    %4449 = vmatpush.msra.mxu0 0.0
    %4450 = vmatpush.msra.mxu0 0.0
    %4451 = vmatpush.msra.mxu0 0.0
    %4452 = vmatpush.msra.mxu0 0.0
    %4453 = vmatpush.msra.mxu0 0.0
    %4454 = vmatpush.msra.mxu0 0.0
    %4455 = vmatpush.msra.mxu0 0.0
    %4456 = vmatpush.msra.mxu0 0.0
    %4457 = vmatpush.msra.mxu0 0.0
    %4458 = vmatpush.msra.mxu0 0.0
    %v4459 = vand.u32 %v3568, 4294901760
    %4460 = vmatpush.msra.mxu0 %v4459
    %v4461 = vand.u32 %v3564, 4294901760
    %4462 = vmatpush.msra.mxu0 %v4461
    %v4463 = vand.u32 %v847, 4294901760
    %v4464 = vsub.f32 %v847, %v4463
    %v4465 = vand.u32 %v4464, 4294901760
    %4466 = vmatmul.f32.gmra.mxu0 %v4465
    %v4467 = vpop.f32.mrf.mxu0
    %v4468 = vadd.f32 %v4438, %v4467
    %v4469 = vand.u32 %v850, 4294901760
    %v4470 = vsub.f32 %v850, %v4469
    %v4471 = vand.u32 %v4470, 4294901760
    %4472 = vmatmul.f32.gmra.mxu0 %v4471
    %v4473 = vpop.f32.mrf.mxu0
    %v4474 = vadd.f32 %v4443, %v4473
    %4475 = vdwg.mxu0
    %4476 = vmatpush.msra.mxu0 0.0
    %4477 = vmatpush.msra.mxu0 0.0
    %4478 = vmatpush.msra.mxu0 0.0
    %4479 = vmatpush.msra.mxu0 0.0
    %4480 = vmatpush.msra.mxu0 0.0
    %4481 = vmatpush.msra.mxu0 0.0
    %4482 = vmatpush.msra.mxu0 0.0
    %4483 = vmatpush.msra.mxu0 0.0
    %4484 = vmatpush.msra.mxu0 0.0
    %4485 = vmatpush.msra.mxu0 0.0
    %4486 = vmatpush.msra.mxu0 0.0
    %4487 = vmatpush.msra.mxu0 0.0
    %4488 = vmatpush.msra.mxu0 0.0
    %4489 = vmatpush.msra.mxu0 0.0
    %v4490 = vand.u32 %v3568, 4294901760
    %v4491 = vsub.f32 %v3568, %v4490
    %v4492 = vand.u32 %v4491, 4294901760
    %4493 = vmatpush.msra.mxu0 %v4492
    %v4494 = vand.u32 %v3564, 4294901760
    %v4495 = vsub.f32 %v3564, %v4494
    %v4496 = vand.u32 %v4495, 4294901760
    %4497 = vmatpush.msra.mxu0 %v4496
    %v4498 = vand.u32 %v847, 4294901760
    %4499 = vmatmul.f32.gmra.mxu0 %v4498
    %v4500 = vpop.f32.mrf.mxu0
    %v4501 = vadd.f32 %v4468, %v4500
    %v4502 = vand.u32 %v850, 4294901760
    %4503 = vmatmul.f32.gmra.mxu0 %v4502
    %v4504 = vpop.f32.mrf.mxu0
    %v4505 = vadd.f32 %v4474, %v4504
    %4506 = vdwg.mxu0
    %4507 = vmatpush.msra.mxu0 0.0
    %4508 = vmatpush.msra.mxu0 0.0
    %4509 = vmatpush.msra.mxu0 0.0
    %4510 = vmatpush.msra.mxu0 0.0
    %4511 = vmatpush.msra.mxu0 0.0
    %4512 = vmatpush.msra.mxu0 0.0
    %4513 = vmatpush.msra.mxu0 0.0
    %4514 = vmatpush.msra.mxu0 0.0
    %4515 = vmatpush.msra.mxu0 0.0
    %4516 = vmatpush.msra.mxu0 0.0
    %4517 = vmatpush.msra.mxu0 0.0
    %4518 = vmatpush.msra.mxu0 0.0
    %4519 = vmatpush.msra.mxu0 0.0
    %4520 = vmatpush.msra.mxu0 0.0
    %v4521 = vand.u32 %v3568, 4294901760
    %4522 = vmatpush.msra.mxu0 %v4521
    %v4523 = vand.u32 %v3564, 4294901760
    %4524 = vmatpush.msra.mxu0 %v4523
    %v4525 = vand.u32 %v847, 4294901760
    %4526 = vmatmul.f32.gmra.mxu0 %v4525
    %v4527 = vpop.f32.mrf.mxu0
    %v4528 = vadd.f32 %v4501, %v4527
    %v4529 = vand.u32 %v850, 4294901760
    %4530 = vmatmul.f32.gmra.mxu0 %v4529
    %v4531 = vpop.f32.mrf.mxu0
    %v4532 = vadd.f32 %v4505, %v4531
    %4533 = vdwg.mxu0
    %4534 = vst [vmem:[#allocation2] sm:$0xff] %v4342
    %4535 = vst [vmem:[#allocation2 + $0x8] sm:$0xff] %v4343
    %4536 = vst [vmem:[#allocation4] sm:$0xff] %v4528
    %4537 = vst [vmem:[#allocation4 + $0x8] sm:$0xff] %v4532
    // Predicated region
    $region50: #{_rgcn_fused.1} parent=1 // pred_check
      _
    $region51: #{_rgcn_fused.1} parent=1 // pred_check_branch
      %4539 = sbr.rel (0) target = $region53
    $region52: #{_rgcn_fused.1} parent=1 // pred_region
      %4541 = vsyncadd [#allocation3], 0
      %s4542 = sshll.u32 [#allocation2], 4
      %s4543 = int_to_ptr.vmem [resolvable:$true] %s4542
      %s4544 = sshll.u32 %s12, 4
      %s4545 = int_to_ptr.hbm [resolvable:$true] %s4544
      %4550 = dma.vmem_to_hbm [thread:$0]  %s4543, 256, %s4545, [#allocation3], 128, 128, 8
    $region53: #{_rgcn_fused.1} parent=1 // pred_fallthru
      _
    // Predicated region
    $region54: #{_rgcn_fused.1} parent=1 // pred_check
      _
    $region55: #{_rgcn_fused.1} parent=1 // pred_check_branch
      %4552 = sbr.rel (0) target = $region57
    $region56: #{_rgcn_fused.1} parent=1 // pred_region
      %4554 = vsyncadd [#allocation5], 0
      %s4555 = sshll.u32 [#allocation4], 4
      %s4556 = int_to_ptr.vmem [resolvable:$true] %s4555
      %s4557 = sshll.u32 %s13, 4
      %s4558 = int_to_ptr.hbm [resolvable:$true] %s4557
      %4563 = dma.vmem_to_hbm [thread:$0]  %s4556, 256, %s4558, [#allocation5], 128, 128, 8
    $region57: #{_rgcn_fused.1} parent=1 // pred_fallthru
      _
    // Predicated region
    $region58: #{_rgcn_fused.1} parent=1 // pred_check
      _
    $region59: #{_rgcn_fused.1} parent=1 // pred_check_branch
      %4565 = sbr.rel (0) target = $region61
    $region60: #{_rgcn_fused.1} parent=1 // pred_region
      %4567 = dma.done [#allocation3], 256
    $region61: #{_rgcn_fused.1} parent=1 // pred_fallthru
      _
    // Predicated region
    $region62: #{_rgcn_fused.1} parent=1 // pred_check
      _
    $region63: #{_rgcn_fused.1} parent=1 // pred_check_branch
      %4569 = sbr.rel (0) target = $region65
    $region64: #{_rgcn_fused.1} parent=1 // pred_region
      %4571 = dma.done [#allocation5], 256
    $region65: #{_rgcn_fused.1} parent=1 // pred_fallthru
      _
    %4572 = vsyncpa [#allocation3], 1
    %4573 = vsyncpa [#allocation5], 1

</llo_original>
